<compile_context>
chip_gen: v7x
topology: tpu7x:2x2x1
jax: 0.10.0
libtpu: 0.0.40
codegen_flags: <defaults>
</compile_context>

<pallas_src>
import functools

import jax
import jax.numpy as jnp
from jax.experimental import pallas as pl
from jax.experimental.pallas import tpu as pltpu

# Make the pure-JAX reference use full-precision matmuls so the strict
# correctness check against the (pure-f32 VPU) kernel is meaningful.
jax.config.update("jax_default_matmul_precision", "highest")

_LANES = 128   # lane width of a vreg
_CHUNK = 16    # sublanes per inner compute chunk (f32: 2 vregs, bf16: 1 full vreg)


# ----------------------------------------------------------------------------
# Kernel
# ----------------------------------------------------------------------------
def _mlp_kernel(x_ref, w1_ref, b1_ref, w2_ref, b2_ref, w3_ref, b3_ref,
                w4_ref, b4_ref, gw_ref, c_ref, o_ref, *, bf16_fast=False):
    n_chunks = o_ref.shape[0] // _CHUNK
    f32 = jnp.float32
    cdt = jnp.bfloat16 if bf16_fast else jnp.float32   # compute dtype, middle layers

    # ---- Hoist every SMEM scalar read out of the chunk loop (loop-invariant).
    def mat(ref, n_in, n_out, dt):
        return [[ref[i * n_out + j].astype(dt) for j in range(n_out)]
                for i in range(n_in)]

    def vec(ref, n, dt):
        return [ref[j].astype(dt) for j in range(n)]

    w1, b1 = mat(w1_ref, 4, 10, f32), vec(b1_ref, 10, f32)
    w2, b2 = mat(w2_ref, 10, 10, cdt), vec(b2_ref, 10, cdt)
    w3, b3 = mat(w3_ref, 10, 10, cdt), vec(b3_ref, 10, cdt)
    w4, b4 = mat(w4_ref, 10, 4, cdt), vec(b4_ref, 4, cdt)
    gw = vec(gw_ref, 4, f32)
    c = c_ref[0]

    def act(v):
        # tanh on the EUP; fast path evaluates it in bf16 -> one full (16,128) vreg.
        return jnp.tanh(v.astype(cdt))

    def linear_act(rows, w, b, n_in, n_out):
        # Unrolled broadcast-FMA on the VPU (K,N <= 10 never touch the MXU).
        outs = []
        for j in range(n_out):
            acc = rows[0] * w[0][j] + b[j]
            for i in range(1, n_in):
                acc = acc + rows[i] * w[i][j]
            outs.append(act(acc))
        return outs

    @pl.loop(0, n_chunks)
    def _(ci):
        r0 = pl.multiple_of(ci * _CHUNK, _CHUNK)
        sl = pl.ds(r0, _CHUNK)
        rows = [x_ref[f, sl, :] for f in range(4)]

        # dimensionality_dense
        h = linear_act(rows, w1, b1, 4, 10)    # f32 FMA; tanh in cdt
        h = linear_act(h, w2, b2, 10, 10)      # fully bf16 on the fast path
        h = linear_act(h, w3, b3, 10, 10)
        h = linear_act(h, w4, b4, 10, 4)
        h = [hh.astype(f32) for hh in h]

        # LayerNorm(4) across the feature rows (pure VPU, eps=1e-5, biased var),
        # with the LN affine and the final Linear(4,1) folded into gw / c.
        mean = (h[0] + h[1] + h[2] + h[3]) * 0.25
        d = [hh - mean for hh in h]
        var = (d[0] * d[0] + d[1] * d[1] + d[2] * d[2] + d[3] * d[3]) * 0.25
        inv = jax.lax.rsqrt(var + 1e-5)
        y = (d[0] * gw[0] + d[1] * gw[1] + d[2] * gw[2] + d[3] * gw[3]) * inv + c
        o_ref[sl, :] = y


# ----------------------------------------------------------------------------
# Capability probe / device defaults
# ----------------------------------------------------------------------------
_BF16_PROBE = None


def _bf16_probe_kernel(s_ref, x_ref, o_ref):
    # Mimics the fast-path inner pattern: SMEM f32 scalar -> bf16 scalar ->
    # broadcast FMA on a bf16 vreg -> bf16 tanh.
    w0 = s_ref[0].astype(jnp.bfloat16)
    b0 = s_ref[1].astype(jnp.bfloat16)
    w1 = s_ref[2].astype(jnp.bfloat16)
    x = x_ref[...]
    acc = x * w0 + b0
    acc = acc + x * w1
    o_ref[...] = jnp.tanh(acc)


def _probe_bf16_fma():
    """One-time check that packed-bf16 scalar FMAs lower on this chip."""
    global _BF16_PROBE
    if _BF16_PROBE is None:
        try:
            y = pl.pallas_call(
                _bf16_probe_kernel,
                out_shape=jax.ShapeDtypeStruct((_CHUNK, _LANES), jnp.bfloat16),
                in_specs=[pl.BlockSpec(memory_space=pltpu.MemorySpace.SMEM),
                          pl.BlockSpec(memory_space=pltpu.MemorySpace.VMEM)],
                out_specs=pl.BlockSpec(memory_space=pltpu.MemorySpace.VMEM),
            )(jnp.arange(3, dtype=jnp.float32),
              jnp.ones((_CHUNK, _LANES), jnp.bfloat16))
            jax.block_until_ready(y)
            _BF16_PROBE = bool(jnp.all(jnp.isfinite(y.astype(jnp.float32))))
        except Exception:
            _BF16_PROBE = False
    return _BF16_PROBE


def _default_fast_math():
    try:
        kind = jax.devices()[0].device_kind.lower()
    except Exception:
        return False
    # bf16 VPU/EUP exists on v6e and newer; keep pure f32 on v2-v5.
    if any(v in kind for v in ("v2", "v3", "v4", "v5")):
        return False
    return _probe_bf16_fma()


# ----------------------------------------------------------------------------
# Host-side wrappers
# ----------------------------------------------------------------------------
def _auto_tile_sub(n_rows):
    # Target >= ~8 grid steps (keeps both v7x TensorCores fed), cap each grid
    # block at 512 sublanes (64K samples, ~2.5 MiB double-buffered VMEM).
    t = max(_CHUNK, min(512, -(-n_rows // 8)))
    return -(-t // _CHUNK) * _CHUNK


def _fold_params(params):
    (w1, b1, w2, b2, w3, b3, w4, b4, gamma, beta, w5, b5) = params
    # Fold the LayerNorm affine and the final Linear(4,1) into 4+1 constants:
    #   y = inv * sum_f (h_f - mean) * gw_f + c
    gw = (gamma * w5[:, 0]).astype(jnp.float32)
    c = (jnp.dot(beta, w5[:, 0]) + b5[0]).reshape(1).astype(jnp.float32)
    flat = lambda a: a.reshape(-1).astype(jnp.float32)   # 1-D SMEM: no 2-D pad waste
    return (flat(w1), flat(b1), flat(w2), flat(b2), flat(w3), flat(b3),
            flat(w4), flat(b4), gw, c)


def _call_kernel(x_fm, smem_params, tile_sub, bf16_fast):
    m_pad = x_fm.shape[1]
    grid = (m_pad // tile_sub,)
    smem = pl.BlockSpec(memory_space=pltpu.MemorySpace.SMEM)
    return pl.pallas_call(
        functools.partial(_mlp_kernel, bf16_fast=bf16_fast),
        out_shape=jax.ShapeDtypeStruct((m_pad, _LANES), jnp.float32),
        grid=grid,
        in_specs=[pl.BlockSpec((4, tile_sub, _LANES), lambda i: (0, i, 0))]
                 + [smem] * 10,
        out_specs=pl.BlockSpec((tile_sub, _LANES), lambda i: (i, 0)),
        compiler_params=pltpu.CompilerParams(
            dimension_semantics=("parallel",)),
    )(x_fm, *smem_params)


@functools.partial(jax.jit, static_argnames=("tile_sub", "bf16_fast"))
def _forward_jit(x, params, *, tile_sub, bf16_fast):
    n = x.shape[0]
    tile = tile_sub * _LANES
    n_pad = -(-n // tile) * tile
    m_pad = n_pad // _LANES

    # Feature-major, lane-dense layout: sample k -> (row k//128, lane k%128).
    # Single fused pad+transpose pass under jit.
    xp = jnp.pad(x.astype(jnp.float32), ((0, n_pad - n), (0, 0)))
    x_fm = xp.T.reshape(4, m_pad, _LANES)

    out = _call_kernel(x_fm, _fold_params(params), tile_sub, bf16_fast)
    return out.reshape(n_pad, 1)[:n]


def new_model_forward(x, params, *, tile_sub=None, bf16_fast=None):
    """x: (N, 4) float32 -> (N, 1) float32."""
    if bf16_fast is None:
        bf16_fast = _default_fast_math()          # resolved eagerly (outside jit)
    n = x.shape[0]
    if tile_sub is None:
        tile_sub = _auto_tile_sub(-(-n // _LANES))
    assert tile_sub % _CHUNK == 0
    return _forward_jit(x, params, tile_sub=tile_sub, bf16_fast=bf16_fast)


@functools.partial(jax.jit, static_argnames=("tile_sub", "bf16_fast"))
def _fm_jit(x_fm, params, *, tile_sub, bf16_fast):
    return _call_kernel(x_fm, _fold_params(params), tile_sub, bf16_fast)


def new_model_forward_fm(x_fm, params, *, tile_sub=None, bf16_fast=None):
    """Feature-major entry point (skips the host-side layout pass entirely).

    x_fm: (4, M, 128) float32 with sample k = x_fm[:, k // 128, k % 128].
    Returns (M, 128) float32 with the same sample -> (row, lane) mapping.
    """
    if bf16_fast is None:
        bf16_fast = _default_fast_math()
    m = x_fm.shape[1]
    if tile_sub is None:
        tile_sub = _CHUNK
        for t in range(_CHUNK, min(512, m) + 1, _CHUNK):
            if m % t == 0:
                tile_sub = t
    assert tile_sub % _CHUNK == 0 and m % tile_sub == 0
    return _fm_jit(x_fm, params, tile_sub=tile_sub, bf16_fast=bf16_fast)


# ----------------------------------------------------------------------------
# Params + pure-JAX reference
# ----------------------------------------------------------------------------
def init_params(key):
    """Deterministic init mirroring the PyTorch layer shapes.
    Linear weights are stored pre-transposed as (in, out); biases are 1-D."""
    def linear(k, fan_in, fan_out):
        kw, kb = jax.random.split(k)
        bound = 1.0 / jnp.sqrt(float(fan_in))
        w = jax.random.uniform(kw, (fan_in, fan_out), jnp.float32, -bound, bound)
        b = jax.random.uniform(kb, (fan_out,), jnp.float32, -bound, bound)
        return w, b

    k1, k2, k3, k4, k5 = jax.random.split(key, 5)
    w1, b1 = linear(k1, 4, 10)
    w2, b2 = linear(k2, 10, 10)
    w3, b3 = linear(k3, 10, 10)
    w4, b4 = linear(k4, 10, 4)
    gamma = jnp.ones((4,), jnp.float32)   # LayerNorm default init
    beta = jnp.zeros((4,), jnp.float32)
    w5, b5 = linear(k5, 4, 1)
    return (w1, b1, w2, b2, w3, b3, w4, b4, gamma, beta, w5, b5)


def reference_forward(x, params):
    (w1, b1, w2, b2, w3, b3, w4, b4, gamma, beta, w5, b5) = params
    h = jnp.tanh(jnp.dot(x, w1) + b1)
    h = jnp.tanh(jnp.dot(h, w2) + b2)
    h = jnp.tanh(jnp.dot(h, w3) + b3)
    h = jnp.tanh(jnp.dot(h, w4) + b4)
    mu = jnp.mean(h, axis=-1, keepdims=True)
    var = jnp.mean((h - mu) ** 2, axis=-1, keepdims=True)
    hn = (h - mu) * jax.lax.rsqrt(var + 1e-5)
    hn = hn * gamma + beta
    return jnp.dot(hn, w5) + b5


# ----------------------------------------------------------------------------
# Self-test
# ----------------------------------------------------------------------------
if __name__ == "__main__":
    key = jax.random.PRNGKey(0)
    kx, kp = jax.random.split(key)

    # Exercises padding, a multi-chunk inner loop and a multi-step grid.
    N = 9000
    x = jax.random.normal(kx, (N, 4), dtype=jnp.float32)
    params = init_params(kp)

    ref = reference_forward(x, params)

    # Strict correctness check: pure-f32 kernel path vs pure-JAX reference.
    out = new_model_forward(x, params, tile_sub=32, bf16_fast=False)
    out = jax.block_until_ready(out)
    assert out.shape == (N, 1), out.shape
    assert jnp.allclose(out, ref, atol=1e-4, rtol=1e-4), (
        float(jnp.max(jnp.abs(out - ref))))

    # Device-tuned fast path (packed bf16 tanh + 10x10 layers on v6e/v7x when
    # supported, pure f32 elsewhere): smoke test.
    out_fast = jax.block_until_ready(new_model_forward(x, params))
    assert out_fast.shape == (N, 1), out_fast.shape
    assert bool(jnp.all(jnp.isfinite(out_fast)))
    assert jnp.allclose(out_fast, ref, atol=0.5, rtol=0.0), (
        float(jnp.max(jnp.abs(out_fast - ref))))

    # Feature-major entry point (no host-side layout pass): strict check.
    m_fm = 16
    x_fm = jax.random.normal(kx, (4, m_fm, _LANES), dtype=jnp.float32)
    out_fm = jax.block_until_ready(
        new_model_forward_fm(x_fm, params, bf16_fast=False))
    ref_fm = reference_forward(x_fm.reshape(4, -1).T, params).reshape(m_fm, _LANES)
    assert jnp.allclose(out_fm, ref_fm, atol=1e-4, rtol=1e-4), (
        float(jnp.max(jnp.abs(out_fm - ref_fm))))

    print("KERNEL_OK")
</pallas_src>

<mosaic_0001>
module attributes {stable_mosaic.version = 11 : i64} {
  func.func @_mlp_kernel(%arg0: i32, %arg1: memref<4x32x128xf32, #tpu.memory_space<vmem>>, %arg2: memref<40xf32, #tpu.memory_space<smem>>, %arg3: memref<10xf32, #tpu.memory_space<smem>>, %arg4: memref<100xf32, #tpu.memory_space<smem>>, %arg5: memref<10xf32, #tpu.memory_space<smem>>, %arg6: memref<100xf32, #tpu.memory_space<smem>>, %arg7: memref<10xf32, #tpu.memory_space<smem>>, %arg8: memref<40xf32, #tpu.memory_space<smem>>, %arg9: memref<4xf32, #tpu.memory_space<smem>>, %arg10: memref<4xf32, #tpu.memory_space<smem>>, %arg11: memref<1xf32, #tpu.memory_space<smem>>, %arg12: memref<32x128xf32, #tpu.memory_space<vmem>>) attributes {dimension_semantics = [#tpu.dimension_semantics<parallel>], iteration_bounds = array<i64: 3>, scalar_prefetch = 0 : i64, scratch_operands = 0 : i64, tpu.core_type = #tpu.core_type<tc>, window_params = [{transform_indices = @transform_0, window_bounds = array<i64: 4, 32, 128>}, {transform_indices = @transform_1, window_bounds = array<i64: 40>}, {transform_indices = @transform_2, window_bounds = array<i64: 10>}, {transform_indices = @transform_3, window_bounds = array<i64: 100>}, {transform_indices = @transform_4, window_bounds = array<i64: 10>}, {transform_indices = @transform_5, window_bounds = array<i64: 100>}, {transform_indices = @transform_6, window_bounds = array<i64: 10>}, {transform_indices = @transform_7, window_bounds = array<i64: 40>}, {transform_indices = @transform_8, window_bounds = array<i64: 4>}, {transform_indices = @transform_9, window_bounds = array<i64: 4>}, {transform_indices = @transform_10, window_bounds = array<i64: 1>}, {transform_indices = @transform_11, window_bounds = array<i64: 32, 128>}]} {
    %c0 = arith.constant 0 : index
    %0 = memref.load %arg2[%c0] : memref<40xf32, #tpu.memory_space<smem>>
    %c1 = arith.constant 1 : index
    %1 = memref.load %arg2[%c1] : memref<40xf32, #tpu.memory_space<smem>>
    %c2 = arith.constant 2 : index
    %2 = memref.load %arg2[%c2] : memref<40xf32, #tpu.memory_space<smem>>
    %c3 = arith.constant 3 : index
    %3 = memref.load %arg2[%c3] : memref<40xf32, #tpu.memory_space<smem>>
    %c4 = arith.constant 4 : index
    %4 = memref.load %arg2[%c4] : memref<40xf32, #tpu.memory_space<smem>>
    %c5 = arith.constant 5 : index
    %5 = memref.load %arg2[%c5] : memref<40xf32, #tpu.memory_space<smem>>
    %c6 = arith.constant 6 : index
    %6 = memref.load %arg2[%c6] : memref<40xf32, #tpu.memory_space<smem>>
    %c7 = arith.constant 7 : index
    %7 = memref.load %arg2[%c7] : memref<40xf32, #tpu.memory_space<smem>>
    %c8 = arith.constant 8 : index
    %8 = memref.load %arg2[%c8] : memref<40xf32, #tpu.memory_space<smem>>
    %c9 = arith.constant 9 : index
    %9 = memref.load %arg2[%c9] : memref<40xf32, #tpu.memory_space<smem>>
    %c10 = arith.constant 10 : index
    %10 = memref.load %arg2[%c10] : memref<40xf32, #tpu.memory_space<smem>>
    %c11 = arith.constant 11 : index
    %11 = memref.load %arg2[%c11] : memref<40xf32, #tpu.memory_space<smem>>
    %c12 = arith.constant 12 : index
    %12 = memref.load %arg2[%c12] : memref<40xf32, #tpu.memory_space<smem>>
    %c13 = arith.constant 13 : index
    %13 = memref.load %arg2[%c13] : memref<40xf32, #tpu.memory_space<smem>>
    %c14 = arith.constant 14 : index
    %14 = memref.load %arg2[%c14] : memref<40xf32, #tpu.memory_space<smem>>
    %c15 = arith.constant 15 : index
    %15 = memref.load %arg2[%c15] : memref<40xf32, #tpu.memory_space<smem>>
    %c16 = arith.constant 16 : index
    %16 = memref.load %arg2[%c16] : memref<40xf32, #tpu.memory_space<smem>>
    %c17 = arith.constant 17 : index
    %17 = memref.load %arg2[%c17] : memref<40xf32, #tpu.memory_space<smem>>
    %c18 = arith.constant 18 : index
    %18 = memref.load %arg2[%c18] : memref<40xf32, #tpu.memory_space<smem>>
    %c19 = arith.constant 19 : index
    %19 = memref.load %arg2[%c19] : memref<40xf32, #tpu.memory_space<smem>>
    %c20 = arith.constant 20 : index
    %20 = memref.load %arg2[%c20] : memref<40xf32, #tpu.memory_space<smem>>
    %c21 = arith.constant 21 : index
    %21 = memref.load %arg2[%c21] : memref<40xf32, #tpu.memory_space<smem>>
    %c22 = arith.constant 22 : index
    %22 = memref.load %arg2[%c22] : memref<40xf32, #tpu.memory_space<smem>>
    %c23 = arith.constant 23 : index
    %23 = memref.load %arg2[%c23] : memref<40xf32, #tpu.memory_space<smem>>
    %c24 = arith.constant 24 : index
    %24 = memref.load %arg2[%c24] : memref<40xf32, #tpu.memory_space<smem>>
    %c25 = arith.constant 25 : index
    %25 = memref.load %arg2[%c25] : memref<40xf32, #tpu.memory_space<smem>>
    %c26 = arith.constant 26 : index
    %26 = memref.load %arg2[%c26] : memref<40xf32, #tpu.memory_space<smem>>
    %c27 = arith.constant 27 : index
    %27 = memref.load %arg2[%c27] : memref<40xf32, #tpu.memory_space<smem>>
    %c28 = arith.constant 28 : index
    %28 = memref.load %arg2[%c28] : memref<40xf32, #tpu.memory_space<smem>>
    %c29 = arith.constant 29 : index
    %29 = memref.load %arg2[%c29] : memref<40xf32, #tpu.memory_space<smem>>
    %c30 = arith.constant 30 : index
    %30 = memref.load %arg2[%c30] : memref<40xf32, #tpu.memory_space<smem>>
    %c31 = arith.constant 31 : index
    %31 = memref.load %arg2[%c31] : memref<40xf32, #tpu.memory_space<smem>>
    %c32 = arith.constant 32 : index
    %32 = memref.load %arg2[%c32] : memref<40xf32, #tpu.memory_space<smem>>
    %c33 = arith.constant 33 : index
    %33 = memref.load %arg2[%c33] : memref<40xf32, #tpu.memory_space<smem>>
    %c34 = arith.constant 34 : index
    %34 = memref.load %arg2[%c34] : memref<40xf32, #tpu.memory_space<smem>>
    %c35 = arith.constant 35 : index
    %35 = memref.load %arg2[%c35] : memref<40xf32, #tpu.memory_space<smem>>
    %c36 = arith.constant 36 : index
    %36 = memref.load %arg2[%c36] : memref<40xf32, #tpu.memory_space<smem>>
    %c37 = arith.constant 37 : index
    %37 = memref.load %arg2[%c37] : memref<40xf32, #tpu.memory_space<smem>>
    %c38 = arith.constant 38 : index
    %38 = memref.load %arg2[%c38] : memref<40xf32, #tpu.memory_space<smem>>
    %c39 = arith.constant 39 : index
    %39 = memref.load %arg2[%c39] : memref<40xf32, #tpu.memory_space<smem>>
    %c0_0 = arith.constant 0 : index
    %40 = memref.load %arg3[%c0_0] : memref<10xf32, #tpu.memory_space<smem>>
    %c1_1 = arith.constant 1 : index
    %41 = memref.load %arg3[%c1_1] : memref<10xf32, #tpu.memory_space<smem>>
    %c2_2 = arith.constant 2 : index
    %42 = memref.load %arg3[%c2_2] : memref<10xf32, #tpu.memory_space<smem>>
    %c3_3 = arith.constant 3 : index
    %43 = memref.load %arg3[%c3_3] : memref<10xf32, #tpu.memory_space<smem>>
    %c4_4 = arith.constant 4 : index
    %44 = memref.load %arg3[%c4_4] : memref<10xf32, #tpu.memory_space<smem>>
    %c5_5 = arith.constant 5 : index
    %45 = memref.load %arg3[%c5_5] : memref<10xf32, #tpu.memory_space<smem>>
    %c6_6 = arith.constant 6 : index
    %46 = memref.load %arg3[%c6_6] : memref<10xf32, #tpu.memory_space<smem>>
    %c7_7 = arith.constant 7 : index
    %47 = memref.load %arg3[%c7_7] : memref<10xf32, #tpu.memory_space<smem>>
    %c8_8 = arith.constant 8 : index
    %48 = memref.load %arg3[%c8_8] : memref<10xf32, #tpu.memory_space<smem>>
    %c9_9 = arith.constant 9 : index
    %49 = memref.load %arg3[%c9_9] : memref<10xf32, #tpu.memory_space<smem>>
    %c0_10 = arith.constant 0 : index
    %50 = memref.load %arg4[%c0_10] : memref<100xf32, #tpu.memory_space<smem>>
    %c1_11 = arith.constant 1 : index
    %51 = memref.load %arg4[%c1_11] : memref<100xf32, #tpu.memory_space<smem>>
    %c2_12 = arith.constant 2 : index
    %52 = memref.load %arg4[%c2_12] : memref<100xf32, #tpu.memory_space<smem>>
    %c3_13 = arith.constant 3 : index
    %53 = memref.load %arg4[%c3_13] : memref<100xf32, #tpu.memory_space<smem>>
    %c4_14 = arith.constant 4 : index
    %54 = memref.load %arg4[%c4_14] : memref<100xf32, #tpu.memory_space<smem>>
    %c5_15 = arith.constant 5 : index
    %55 = memref.load %arg4[%c5_15] : memref<100xf32, #tpu.memory_space<smem>>
    %c6_16 = arith.constant 6 : index
    %56 = memref.load %arg4[%c6_16] : memref<100xf32, #tpu.memory_space<smem>>
    %c7_17 = arith.constant 7 : index
    %57 = memref.load %arg4[%c7_17] : memref<100xf32, #tpu.memory_space<smem>>
    %c8_18 = arith.constant 8 : index
    %58 = memref.load %arg4[%c8_18] : memref<100xf32, #tpu.memory_space<smem>>
    %c9_19 = arith.constant 9 : index
    %59 = memref.load %arg4[%c9_19] : memref<100xf32, #tpu.memory_space<smem>>
    %c10_20 = arith.constant 10 : index
    %60 = memref.load %arg4[%c10_20] : memref<100xf32, #tpu.memory_space<smem>>
    %c11_21 = arith.constant 11 : index
    %61 = memref.load %arg4[%c11_21] : memref<100xf32, #tpu.memory_space<smem>>
    %c12_22 = arith.constant 12 : index
    %62 = memref.load %arg4[%c12_22] : memref<100xf32, #tpu.memory_space<smem>>
    %c13_23 = arith.constant 13 : index
    %63 = memref.load %arg4[%c13_23] : memref<100xf32, #tpu.memory_space<smem>>
    %c14_24 = arith.constant 14 : index
    %64 = memref.load %arg4[%c14_24] : memref<100xf32, #tpu.memory_space<smem>>
    %c15_25 = arith.constant 15 : index
    %65 = memref.load %arg4[%c15_25] : memref<100xf32, #tpu.memory_space<smem>>
    %c16_26 = arith.constant 16 : index
    %66 = memref.load %arg4[%c16_26] : memref<100xf32, #tpu.memory_space<smem>>
    %c17_27 = arith.constant 17 : index
    %67 = memref.load %arg4[%c17_27] : memref<100xf32, #tpu.memory_space<smem>>
    %c18_28 = arith.constant 18 : index
    %68 = memref.load %arg4[%c18_28] : memref<100xf32, #tpu.memory_space<smem>>
    %c19_29 = arith.constant 19 : index
    %69 = memref.load %arg4[%c19_29] : memref<100xf32, #tpu.memory_space<smem>>
    %c20_30 = arith.constant 20 : index
    %70 = memref.load %arg4[%c20_30] : memref<100xf32, #tpu.memory_space<smem>>
    %c21_31 = arith.constant 21 : index
    %71 = memref.load %arg4[%c21_31] : memref<100xf32, #tpu.memory_space<smem>>
    %c22_32 = arith.constant 22 : index
    %72 = memref.load %arg4[%c22_32] : memref<100xf32, #tpu.memory_space<smem>>
    %c23_33 = arith.constant 23 : index
    %73 = memref.load %arg4[%c23_33] : memref<100xf32, #tpu.memory_space<smem>>
    %c24_34 = arith.constant 24 : index
    %74 = memref.load %arg4[%c24_34] : memref<100xf32, #tpu.memory_space<smem>>
    %c25_35 = arith.constant 25 : index
    %75 = memref.load %arg4[%c25_35] : memref<100xf32, #tpu.memory_space<smem>>
    %c26_36 = arith.constant 26 : index
    %76 = memref.load %arg4[%c26_36] : memref<100xf32, #tpu.memory_space<smem>>
    %c27_37 = arith.constant 27 : index
    %77 = memref.load %arg4[%c27_37] : memref<100xf32, #tpu.memory_space<smem>>
    %c28_38 = arith.constant 28 : index
    %78 = memref.load %arg4[%c28_38] : memref<100xf32, #tpu.memory_space<smem>>
    %c29_39 = arith.constant 29 : index
    %79 = memref.load %arg4[%c29_39] : memref<100xf32, #tpu.memory_space<smem>>
    %c30_40 = arith.constant 30 : index
    %80 = memref.load %arg4[%c30_40] : memref<100xf32, #tpu.memory_space<smem>>
    %c31_41 = arith.constant 31 : index
    %81 = memref.load %arg4[%c31_41] : memref<100xf32, #tpu.memory_space<smem>>
    %c32_42 = arith.constant 32 : index
    %82 = memref.load %arg4[%c32_42] : memref<100xf32, #tpu.memory_space<smem>>
    %c33_43 = arith.constant 33 : index
    %83 = memref.load %arg4[%c33_43] : memref<100xf32, #tpu.memory_space<smem>>
    %c34_44 = arith.constant 34 : index
    %84 = memref.load %arg4[%c34_44] : memref<100xf32, #tpu.memory_space<smem>>
    %c35_45 = arith.constant 35 : index
    %85 = memref.load %arg4[%c35_45] : memref<100xf32, #tpu.memory_space<smem>>
    %c36_46 = arith.constant 36 : index
    %86 = memref.load %arg4[%c36_46] : memref<100xf32, #tpu.memory_space<smem>>
    %c37_47 = arith.constant 37 : index
    %87 = memref.load %arg4[%c37_47] : memref<100xf32, #tpu.memory_space<smem>>
    %c38_48 = arith.constant 38 : index
    %88 = memref.load %arg4[%c38_48] : memref<100xf32, #tpu.memory_space<smem>>
    %c39_49 = arith.constant 39 : index
    %89 = memref.load %arg4[%c39_49] : memref<100xf32, #tpu.memory_space<smem>>
    %c40 = arith.constant 40 : index
    %90 = memref.load %arg4[%c40] : memref<100xf32, #tpu.memory_space<smem>>
    %c41 = arith.constant 41 : index
    %91 = memref.load %arg4[%c41] : memref<100xf32, #tpu.memory_space<smem>>
    %c42 = arith.constant 42 : index
    %92 = memref.load %arg4[%c42] : memref<100xf32, #tpu.memory_space<smem>>
    %c43 = arith.constant 43 : index
    %93 = memref.load %arg4[%c43] : memref<100xf32, #tpu.memory_space<smem>>
    %c44 = arith.constant 44 : index
    %94 = memref.load %arg4[%c44] : memref<100xf32, #tpu.memory_space<smem>>
    %c45 = arith.constant 45 : index
    %95 = memref.load %arg4[%c45] : memref<100xf32, #tpu.memory_space<smem>>
    %c46 = arith.constant 46 : index
    %96 = memref.load %arg4[%c46] : memref<100xf32, #tpu.memory_space<smem>>
    %c47 = arith.constant 47 : index
    %97 = memref.load %arg4[%c47] : memref<100xf32, #tpu.memory_space<smem>>
    %c48 = arith.constant 48 : index
    %98 = memref.load %arg4[%c48] : memref<100xf32, #tpu.memory_space<smem>>
    %c49 = arith.constant 49 : index
    %99 = memref.load %arg4[%c49] : memref<100xf32, #tpu.memory_space<smem>>
    %c50 = arith.constant 50 : index
    %100 = memref.load %arg4[%c50] : memref<100xf32, #tpu.memory_space<smem>>
    %c51 = arith.constant 51 : index
    %101 = memref.load %arg4[%c51] : memref<100xf32, #tpu.memory_space<smem>>
    %c52 = arith.constant 52 : index
    %102 = memref.load %arg4[%c52] : memref<100xf32, #tpu.memory_space<smem>>
    %c53 = arith.constant 53 : index
    %103 = memref.load %arg4[%c53] : memref<100xf32, #tpu.memory_space<smem>>
    %c54 = arith.constant 54 : index
    %104 = memref.load %arg4[%c54] : memref<100xf32, #tpu.memory_space<smem>>
    %c55 = arith.constant 55 : index
    %105 = memref.load %arg4[%c55] : memref<100xf32, #tpu.memory_space<smem>>
    %c56 = arith.constant 56 : index
    %106 = memref.load %arg4[%c56] : memref<100xf32, #tpu.memory_space<smem>>
    %c57 = arith.constant 57 : index
    %107 = memref.load %arg4[%c57] : memref<100xf32, #tpu.memory_space<smem>>
    %c58 = arith.constant 58 : index
    %108 = memref.load %arg4[%c58] : memref<100xf32, #tpu.memory_space<smem>>
    %c59 = arith.constant 59 : index
    %109 = memref.load %arg4[%c59] : memref<100xf32, #tpu.memory_space<smem>>
    %c60 = arith.constant 60 : index
    %110 = memref.load %arg4[%c60] : memref<100xf32, #tpu.memory_space<smem>>
    %c61 = arith.constant 61 : index
    %111 = memref.load %arg4[%c61] : memref<100xf32, #tpu.memory_space<smem>>
    %c62 = arith.constant 62 : index
    %112 = memref.load %arg4[%c62] : memref<100xf32, #tpu.memory_space<smem>>
    %c63 = arith.constant 63 : index
    %113 = memref.load %arg4[%c63] : memref<100xf32, #tpu.memory_space<smem>>
    %c64 = arith.constant 64 : index
    %114 = memref.load %arg4[%c64] : memref<100xf32, #tpu.memory_space<smem>>
    %c65 = arith.constant 65 : index
    %115 = memref.load %arg4[%c65] : memref<100xf32, #tpu.memory_space<smem>>
    %c66 = arith.constant 66 : index
    %116 = memref.load %arg4[%c66] : memref<100xf32, #tpu.memory_space<smem>>
    %c67 = arith.constant 67 : index
    %117 = memref.load %arg4[%c67] : memref<100xf32, #tpu.memory_space<smem>>
    %c68 = arith.constant 68 : index
    %118 = memref.load %arg4[%c68] : memref<100xf32, #tpu.memory_space<smem>>
    %c69 = arith.constant 69 : index
    %119 = memref.load %arg4[%c69] : memref<100xf32, #tpu.memory_space<smem>>
    %c70 = arith.constant 70 : index
    %120 = memref.load %arg4[%c70] : memref<100xf32, #tpu.memory_space<smem>>
    %c71 = arith.constant 71 : index
    %121 = memref.load %arg4[%c71] : memref<100xf32, #tpu.memory_space<smem>>
    %c72 = arith.constant 72 : index
    %122 = memref.load %arg4[%c72] : memref<100xf32, #tpu.memory_space<smem>>
    %c73 = arith.constant 73 : index
    %123 = memref.load %arg4[%c73] : memref<100xf32, #tpu.memory_space<smem>>
    %c74 = arith.constant 74 : index
    %124 = memref.load %arg4[%c74] : memref<100xf32, #tpu.memory_space<smem>>
    %c75 = arith.constant 75 : index
    %125 = memref.load %arg4[%c75] : memref<100xf32, #tpu.memory_space<smem>>
    %c76 = arith.constant 76 : index
    %126 = memref.load %arg4[%c76] : memref<100xf32, #tpu.memory_space<smem>>
    %c77 = arith.constant 77 : index
    %127 = memref.load %arg4[%c77] : memref<100xf32, #tpu.memory_space<smem>>
    %c78 = arith.constant 78 : index
    %128 = memref.load %arg4[%c78] : memref<100xf32, #tpu.memory_space<smem>>
    %c79 = arith.constant 79 : index
    %129 = memref.load %arg4[%c79] : memref<100xf32, #tpu.memory_space<smem>>
    %c80 = arith.constant 80 : index
    %130 = memref.load %arg4[%c80] : memref<100xf32, #tpu.memory_space<smem>>
    %c81 = arith.constant 81 : index
    %131 = memref.load %arg4[%c81] : memref<100xf32, #tpu.memory_space<smem>>
    %c82 = arith.constant 82 : index
    %132 = memref.load %arg4[%c82] : memref<100xf32, #tpu.memory_space<smem>>
    %c83 = arith.constant 83 : index
    %133 = memref.load %arg4[%c83] : memref<100xf32, #tpu.memory_space<smem>>
    %c84 = arith.constant 84 : index
    %134 = memref.load %arg4[%c84] : memref<100xf32, #tpu.memory_space<smem>>
    %c85 = arith.constant 85 : index
    %135 = memref.load %arg4[%c85] : memref<100xf32, #tpu.memory_space<smem>>
    %c86 = arith.constant 86 : index
    %136 = memref.load %arg4[%c86] : memref<100xf32, #tpu.memory_space<smem>>
    %c87 = arith.constant 87 : index
    %137 = memref.load %arg4[%c87] : memref<100xf32, #tpu.memory_space<smem>>
    %c88 = arith.constant 88 : index
    %138 = memref.load %arg4[%c88] : memref<100xf32, #tpu.memory_space<smem>>
    %c89 = arith.constant 89 : index
    %139 = memref.load %arg4[%c89] : memref<100xf32, #tpu.memory_space<smem>>
    %c90 = arith.constant 90 : index
    %140 = memref.load %arg4[%c90] : memref<100xf32, #tpu.memory_space<smem>>
    %c91 = arith.constant 91 : index
    %141 = memref.load %arg4[%c91] : memref<100xf32, #tpu.memory_space<smem>>
    %c92 = arith.constant 92 : index
    %142 = memref.load %arg4[%c92] : memref<100xf32, #tpu.memory_space<smem>>
    %c93 = arith.constant 93 : index
    %143 = memref.load %arg4[%c93] : memref<100xf32, #tpu.memory_space<smem>>
    %c94 = arith.constant 94 : index
    %144 = memref.load %arg4[%c94] : memref<100xf32, #tpu.memory_space<smem>>
    %c95 = arith.constant 95 : index
    %145 = memref.load %arg4[%c95] : memref<100xf32, #tpu.memory_space<smem>>
    %c96 = arith.constant 96 : index
    %146 = memref.load %arg4[%c96] : memref<100xf32, #tpu.memory_space<smem>>
    %c97 = arith.constant 97 : index
    %147 = memref.load %arg4[%c97] : memref<100xf32, #tpu.memory_space<smem>>
    %c98 = arith.constant 98 : index
    %148 = memref.load %arg4[%c98] : memref<100xf32, #tpu.memory_space<smem>>
    %c99 = arith.constant 99 : index
    %149 = memref.load %arg4[%c99] : memref<100xf32, #tpu.memory_space<smem>>
    %c0_50 = arith.constant 0 : index
    %150 = memref.load %arg5[%c0_50] : memref<10xf32, #tpu.memory_space<smem>>
    %c1_51 = arith.constant 1 : index
    %151 = memref.load %arg5[%c1_51] : memref<10xf32, #tpu.memory_space<smem>>
    %c2_52 = arith.constant 2 : index
    %152 = memref.load %arg5[%c2_52] : memref<10xf32, #tpu.memory_space<smem>>
    %c3_53 = arith.constant 3 : index
    %153 = memref.load %arg5[%c3_53] : memref<10xf32, #tpu.memory_space<smem>>
    %c4_54 = arith.constant 4 : index
    %154 = memref.load %arg5[%c4_54] : memref<10xf32, #tpu.memory_space<smem>>
    %c5_55 = arith.constant 5 : index
    %155 = memref.load %arg5[%c5_55] : memref<10xf32, #tpu.memory_space<smem>>
    %c6_56 = arith.constant 6 : index
    %156 = memref.load %arg5[%c6_56] : memref<10xf32, #tpu.memory_space<smem>>
    %c7_57 = arith.constant 7 : index
    %157 = memref.load %arg5[%c7_57] : memref<10xf32, #tpu.memory_space<smem>>
    %c8_58 = arith.constant 8 : index
    %158 = memref.load %arg5[%c8_58] : memref<10xf32, #tpu.memory_space<smem>>
    %c9_59 = arith.constant 9 : index
    %159 = memref.load %arg5[%c9_59] : memref<10xf32, #tpu.memory_space<smem>>
    %c0_60 = arith.constant 0 : index
    %160 = memref.load %arg6[%c0_60] : memref<100xf32, #tpu.memory_space<smem>>
    %c1_61 = arith.constant 1 : index
    %161 = memref.load %arg6[%c1_61] : memref<100xf32, #tpu.memory_space<smem>>
    %c2_62 = arith.constant 2 : index
    %162 = memref.load %arg6[%c2_62] : memref<100xf32, #tpu.memory_space<smem>>
    %c3_63 = arith.constant 3 : index
    %163 = memref.load %arg6[%c3_63] : memref<100xf32, #tpu.memory_space<smem>>
    %c4_64 = arith.constant 4 : index
    %164 = memref.load %arg6[%c4_64] : memref<100xf32, #tpu.memory_space<smem>>
    %c5_65 = arith.constant 5 : index
    %165 = memref.load %arg6[%c5_65] : memref<100xf32, #tpu.memory_space<smem>>
    %c6_66 = arith.constant 6 : index
    %166 = memref.load %arg6[%c6_66] : memref<100xf32, #tpu.memory_space<smem>>
    %c7_67 = arith.constant 7 : index
    %167 = memref.load %arg6[%c7_67] : memref<100xf32, #tpu.memory_space<smem>>
    %c8_68 = arith.constant 8 : index
    %168 = memref.load %arg6[%c8_68] : memref<100xf32, #tpu.memory_space<smem>>
    %c9_69 = arith.constant 9 : index
    %169 = memref.load %arg6[%c9_69] : memref<100xf32, #tpu.memory_space<smem>>
    %c10_70 = arith.constant 10 : index
    %170 = memref.load %arg6[%c10_70] : memref<100xf32, #tpu.memory_space<smem>>
    %c11_71 = arith.constant 11 : index
    %171 = memref.load %arg6[%c11_71] : memref<100xf32, #tpu.memory_space<smem>>
    %c12_72 = arith.constant 12 : index
    %172 = memref.load %arg6[%c12_72] : memref<100xf32, #tpu.memory_space<smem>>
    %c13_73 = arith.constant 13 : index
    %173 = memref.load %arg6[%c13_73] : memref<100xf32, #tpu.memory_space<smem>>
    %c14_74 = arith.constant 14 : index
    %174 = memref.load %arg6[%c14_74] : memref<100xf32, #tpu.memory_space<smem>>
    %c15_75 = arith.constant 15 : index
    %175 = memref.load %arg6[%c15_75] : memref<100xf32, #tpu.memory_space<smem>>
    %c16_76 = arith.constant 16 : index
    %176 = memref.load %arg6[%c16_76] : memref<100xf32, #tpu.memory_space<smem>>
    %c17_77 = arith.constant 17 : index
    %177 = memref.load %arg6[%c17_77] : memref<100xf32, #tpu.memory_space<smem>>
    %c18_78 = arith.constant 18 : index
    %178 = memref.load %arg6[%c18_78] : memref<100xf32, #tpu.memory_space<smem>>
    %c19_79 = arith.constant 19 : index
    %179 = memref.load %arg6[%c19_79] : memref<100xf32, #tpu.memory_space<smem>>
    %c20_80 = arith.constant 20 : index
    %180 = memref.load %arg6[%c20_80] : memref<100xf32, #tpu.memory_space<smem>>
    %c21_81 = arith.constant 21 : index
    %181 = memref.load %arg6[%c21_81] : memref<100xf32, #tpu.memory_space<smem>>
    %c22_82 = arith.constant 22 : index
    %182 = memref.load %arg6[%c22_82] : memref<100xf32, #tpu.memory_space<smem>>
    %c23_83 = arith.constant 23 : index
    %183 = memref.load %arg6[%c23_83] : memref<100xf32, #tpu.memory_space<smem>>
    %c24_84 = arith.constant 24 : index
    %184 = memref.load %arg6[%c24_84] : memref<100xf32, #tpu.memory_space<smem>>
    %c25_85 = arith.constant 25 : index
    %185 = memref.load %arg6[%c25_85] : memref<100xf32, #tpu.memory_space<smem>>
    %c26_86 = arith.constant 26 : index
    %186 = memref.load %arg6[%c26_86] : memref<100xf32, #tpu.memory_space<smem>>
    %c27_87 = arith.constant 27 : index
    %187 = memref.load %arg6[%c27_87] : memref<100xf32, #tpu.memory_space<smem>>
    %c28_88 = arith.constant 28 : index
    %188 = memref.load %arg6[%c28_88] : memref<100xf32, #tpu.memory_space<smem>>
    %c29_89 = arith.constant 29 : index
    %189 = memref.load %arg6[%c29_89] : memref<100xf32, #tpu.memory_space<smem>>
    %c30_90 = arith.constant 30 : index
    %190 = memref.load %arg6[%c30_90] : memref<100xf32, #tpu.memory_space<smem>>
    %c31_91 = arith.constant 31 : index
    %191 = memref.load %arg6[%c31_91] : memref<100xf32, #tpu.memory_space<smem>>
    %c32_92 = arith.constant 32 : index
    %192 = memref.load %arg6[%c32_92] : memref<100xf32, #tpu.memory_space<smem>>
    %c33_93 = arith.constant 33 : index
    %193 = memref.load %arg6[%c33_93] : memref<100xf32, #tpu.memory_space<smem>>
    %c34_94 = arith.constant 34 : index
    %194 = memref.load %arg6[%c34_94] : memref<100xf32, #tpu.memory_space<smem>>
    %c35_95 = arith.constant 35 : index
    %195 = memref.load %arg6[%c35_95] : memref<100xf32, #tpu.memory_space<smem>>
    %c36_96 = arith.constant 36 : index
    %196 = memref.load %arg6[%c36_96] : memref<100xf32, #tpu.memory_space<smem>>
    %c37_97 = arith.constant 37 : index
    %197 = memref.load %arg6[%c37_97] : memref<100xf32, #tpu.memory_space<smem>>
    %c38_98 = arith.constant 38 : index
    %198 = memref.load %arg6[%c38_98] : memref<100xf32, #tpu.memory_space<smem>>
    %c39_99 = arith.constant 39 : index
    %199 = memref.load %arg6[%c39_99] : memref<100xf32, #tpu.memory_space<smem>>
    %c40_100 = arith.constant 40 : index
    %200 = memref.load %arg6[%c40_100] : memref<100xf32, #tpu.memory_space<smem>>
    %c41_101 = arith.constant 41 : index
    %201 = memref.load %arg6[%c41_101] : memref<100xf32, #tpu.memory_space<smem>>
    %c42_102 = arith.constant 42 : index
    %202 = memref.load %arg6[%c42_102] : memref<100xf32, #tpu.memory_space<smem>>
    %c43_103 = arith.constant 43 : index
    %203 = memref.load %arg6[%c43_103] : memref<100xf32, #tpu.memory_space<smem>>
    %c44_104 = arith.constant 44 : index
    %204 = memref.load %arg6[%c44_104] : memref<100xf32, #tpu.memory_space<smem>>
    %c45_105 = arith.constant 45 : index
    %205 = memref.load %arg6[%c45_105] : memref<100xf32, #tpu.memory_space<smem>>
    %c46_106 = arith.constant 46 : index
    %206 = memref.load %arg6[%c46_106] : memref<100xf32, #tpu.memory_space<smem>>
    %c47_107 = arith.constant 47 : index
    %207 = memref.load %arg6[%c47_107] : memref<100xf32, #tpu.memory_space<smem>>
    %c48_108 = arith.constant 48 : index
    %208 = memref.load %arg6[%c48_108] : memref<100xf32, #tpu.memory_space<smem>>
    %c49_109 = arith.constant 49 : index
    %209 = memref.load %arg6[%c49_109] : memref<100xf32, #tpu.memory_space<smem>>
    %c50_110 = arith.constant 50 : index
    %210 = memref.load %arg6[%c50_110] : memref<100xf32, #tpu.memory_space<smem>>
    %c51_111 = arith.constant 51 : index
    %211 = memref.load %arg6[%c51_111] : memref<100xf32, #tpu.memory_space<smem>>
    %c52_112 = arith.constant 52 : index
    %212 = memref.load %arg6[%c52_112] : memref<100xf32, #tpu.memory_space<smem>>
    %c53_113 = arith.constant 53 : index
    %213 = memref.load %arg6[%c53_113] : memref<100xf32, #tpu.memory_space<smem>>
    %c54_114 = arith.constant 54 : index
    %214 = memref.load %arg6[%c54_114] : memref<100xf32, #tpu.memory_space<smem>>
    %c55_115 = arith.constant 55 : index
    %215 = memref.load %arg6[%c55_115] : memref<100xf32, #tpu.memory_space<smem>>
    %c56_116 = arith.constant 56 : index
    %216 = memref.load %arg6[%c56_116] : memref<100xf32, #tpu.memory_space<smem>>
    %c57_117 = arith.constant 57 : index
    %217 = memref.load %arg6[%c57_117] : memref<100xf32, #tpu.memory_space<smem>>
    %c58_118 = arith.constant 58 : index
    %218 = memref.load %arg6[%c58_118] : memref<100xf32, #tpu.memory_space<smem>>
    %c59_119 = arith.constant 59 : index
    %219 = memref.load %arg6[%c59_119] : memref<100xf32, #tpu.memory_space<smem>>
    %c60_120 = arith.constant 60 : index
    %220 = memref.load %arg6[%c60_120] : memref<100xf32, #tpu.memory_space<smem>>
    %c61_121 = arith.constant 61 : index
    %221 = memref.load %arg6[%c61_121] : memref<100xf32, #tpu.memory_space<smem>>
    %c62_122 = arith.constant 62 : index
    %222 = memref.load %arg6[%c62_122] : memref<100xf32, #tpu.memory_space<smem>>
    %c63_123 = arith.constant 63 : index
    %223 = memref.load %arg6[%c63_123] : memref<100xf32, #tpu.memory_space<smem>>
    %c64_124 = arith.constant 64 : index
    %224 = memref.load %arg6[%c64_124] : memref<100xf32, #tpu.memory_space<smem>>
    %c65_125 = arith.constant 65 : index
    %225 = memref.load %arg6[%c65_125] : memref<100xf32, #tpu.memory_space<smem>>
    %c66_126 = arith.constant 66 : index
    %226 = memref.load %arg6[%c66_126] : memref<100xf32, #tpu.memory_space<smem>>
    %c67_127 = arith.constant 67 : index
    %227 = memref.load %arg6[%c67_127] : memref<100xf32, #tpu.memory_space<smem>>
    %c68_128 = arith.constant 68 : index
    %228 = memref.load %arg6[%c68_128] : memref<100xf32, #tpu.memory_space<smem>>
    %c69_129 = arith.constant 69 : index
    %229 = memref.load %arg6[%c69_129] : memref<100xf32, #tpu.memory_space<smem>>
    %c70_130 = arith.constant 70 : index
    %230 = memref.load %arg6[%c70_130] : memref<100xf32, #tpu.memory_space<smem>>
    %c71_131 = arith.constant 71 : index
    %231 = memref.load %arg6[%c71_131] : memref<100xf32, #tpu.memory_space<smem>>
    %c72_132 = arith.constant 72 : index
    %232 = memref.load %arg6[%c72_132] : memref<100xf32, #tpu.memory_space<smem>>
    %c73_133 = arith.constant 73 : index
    %233 = memref.load %arg6[%c73_133] : memref<100xf32, #tpu.memory_space<smem>>
    %c74_134 = arith.constant 74 : index
    %234 = memref.load %arg6[%c74_134] : memref<100xf32, #tpu.memory_space<smem>>
    %c75_135 = arith.constant 75 : index
    %235 = memref.load %arg6[%c75_135] : memref<100xf32, #tpu.memory_space<smem>>
    %c76_136 = arith.constant 76 : index
    %236 = memref.load %arg6[%c76_136] : memref<100xf32, #tpu.memory_space<smem>>
    %c77_137 = arith.constant 77 : index
    %237 = memref.load %arg6[%c77_137] : memref<100xf32, #tpu.memory_space<smem>>
    %c78_138 = arith.constant 78 : index
    %238 = memref.load %arg6[%c78_138] : memref<100xf32, #tpu.memory_space<smem>>
    %c79_139 = arith.constant 79 : index
    %239 = memref.load %arg6[%c79_139] : memref<100xf32, #tpu.memory_space<smem>>
    %c80_140 = arith.constant 80 : index
    %240 = memref.load %arg6[%c80_140] : memref<100xf32, #tpu.memory_space<smem>>
    %c81_141 = arith.constant 81 : index
    %241 = memref.load %arg6[%c81_141] : memref<100xf32, #tpu.memory_space<smem>>
    %c82_142 = arith.constant 82 : index
    %242 = memref.load %arg6[%c82_142] : memref<100xf32, #tpu.memory_space<smem>>
    %c83_143 = arith.constant 83 : index
    %243 = memref.load %arg6[%c83_143] : memref<100xf32, #tpu.memory_space<smem>>
    %c84_144 = arith.constant 84 : index
    %244 = memref.load %arg6[%c84_144] : memref<100xf32, #tpu.memory_space<smem>>
    %c85_145 = arith.constant 85 : index
    %245 = memref.load %arg6[%c85_145] : memref<100xf32, #tpu.memory_space<smem>>
    %c86_146 = arith.constant 86 : index
    %246 = memref.load %arg6[%c86_146] : memref<100xf32, #tpu.memory_space<smem>>
    %c87_147 = arith.constant 87 : index
    %247 = memref.load %arg6[%c87_147] : memref<100xf32, #tpu.memory_space<smem>>
    %c88_148 = arith.constant 88 : index
    %248 = memref.load %arg6[%c88_148] : memref<100xf32, #tpu.memory_space<smem>>
    %c89_149 = arith.constant 89 : index
    %249 = memref.load %arg6[%c89_149] : memref<100xf32, #tpu.memory_space<smem>>
    %c90_150 = arith.constant 90 : index
    %250 = memref.load %arg6[%c90_150] : memref<100xf32, #tpu.memory_space<smem>>
    %c91_151 = arith.constant 91 : index
    %251 = memref.load %arg6[%c91_151] : memref<100xf32, #tpu.memory_space<smem>>
    %c92_152 = arith.constant 92 : index
    %252 = memref.load %arg6[%c92_152] : memref<100xf32, #tpu.memory_space<smem>>
    %c93_153 = arith.constant 93 : index
    %253 = memref.load %arg6[%c93_153] : memref<100xf32, #tpu.memory_space<smem>>
    %c94_154 = arith.constant 94 : index
    %254 = memref.load %arg6[%c94_154] : memref<100xf32, #tpu.memory_space<smem>>
    %c95_155 = arith.constant 95 : index
    %255 = memref.load %arg6[%c95_155] : memref<100xf32, #tpu.memory_space<smem>>
    %c96_156 = arith.constant 96 : index
    %256 = memref.load %arg6[%c96_156] : memref<100xf32, #tpu.memory_space<smem>>
    %c97_157 = arith.constant 97 : index
    %257 = memref.load %arg6[%c97_157] : memref<100xf32, #tpu.memory_space<smem>>
    %c98_158 = arith.constant 98 : index
    %258 = memref.load %arg6[%c98_158] : memref<100xf32, #tpu.memory_space<smem>>
    %c99_159 = arith.constant 99 : index
    %259 = memref.load %arg6[%c99_159] : memref<100xf32, #tpu.memory_space<smem>>
    %c0_160 = arith.constant 0 : index
    %260 = memref.load %arg7[%c0_160] : memref<10xf32, #tpu.memory_space<smem>>
    %c1_161 = arith.constant 1 : index
    %261 = memref.load %arg7[%c1_161] : memref<10xf32, #tpu.memory_space<smem>>
    %c2_162 = arith.constant 2 : index
    %262 = memref.load %arg7[%c2_162] : memref<10xf32, #tpu.memory_space<smem>>
    %c3_163 = arith.constant 3 : index
    %263 = memref.load %arg7[%c3_163] : memref<10xf32, #tpu.memory_space<smem>>
    %c4_164 = arith.constant 4 : index
    %264 = memref.load %arg7[%c4_164] : memref<10xf32, #tpu.memory_space<smem>>
    %c5_165 = arith.constant 5 : index
    %265 = memref.load %arg7[%c5_165] : memref<10xf32, #tpu.memory_space<smem>>
    %c6_166 = arith.constant 6 : index
    %266 = memref.load %arg7[%c6_166] : memref<10xf32, #tpu.memory_space<smem>>
    %c7_167 = arith.constant 7 : index
    %267 = memref.load %arg7[%c7_167] : memref<10xf32, #tpu.memory_space<smem>>
    %c8_168 = arith.constant 8 : index
    %268 = memref.load %arg7[%c8_168] : memref<10xf32, #tpu.memory_space<smem>>
    %c9_169 = arith.constant 9 : index
    %269 = memref.load %arg7[%c9_169] : memref<10xf32, #tpu.memory_space<smem>>
    %c0_170 = arith.constant 0 : index
    %270 = memref.load %arg8[%c0_170] : memref<40xf32, #tpu.memory_space<smem>>
    %c1_171 = arith.constant 1 : index
    %271 = memref.load %arg8[%c1_171] : memref<40xf32, #tpu.memory_space<smem>>
    %c2_172 = arith.constant 2 : index
    %272 = memref.load %arg8[%c2_172] : memref<40xf32, #tpu.memory_space<smem>>
    %c3_173 = arith.constant 3 : index
    %273 = memref.load %arg8[%c3_173] : memref<40xf32, #tpu.memory_space<smem>>
    %c4_174 = arith.constant 4 : index
    %274 = memref.load %arg8[%c4_174] : memref<40xf32, #tpu.memory_space<smem>>
    %c5_175 = arith.constant 5 : index
    %275 = memref.load %arg8[%c5_175] : memref<40xf32, #tpu.memory_space<smem>>
    %c6_176 = arith.constant 6 : index
    %276 = memref.load %arg8[%c6_176] : memref<40xf32, #tpu.memory_space<smem>>
    %c7_177 = arith.constant 7 : index
    %277 = memref.load %arg8[%c7_177] : memref<40xf32, #tpu.memory_space<smem>>
    %c8_178 = arith.constant 8 : index
    %278 = memref.load %arg8[%c8_178] : memref<40xf32, #tpu.memory_space<smem>>
    %c9_179 = arith.constant 9 : index
    %279 = memref.load %arg8[%c9_179] : memref<40xf32, #tpu.memory_space<smem>>
    %c10_180 = arith.constant 10 : index
    %280 = memref.load %arg8[%c10_180] : memref<40xf32, #tpu.memory_space<smem>>
    %c11_181 = arith.constant 11 : index
    %281 = memref.load %arg8[%c11_181] : memref<40xf32, #tpu.memory_space<smem>>
    %c12_182 = arith.constant 12 : index
    %282 = memref.load %arg8[%c12_182] : memref<40xf32, #tpu.memory_space<smem>>
    %c13_183 = arith.constant 13 : index
    %283 = memref.load %arg8[%c13_183] : memref<40xf32, #tpu.memory_space<smem>>
    %c14_184 = arith.constant 14 : index
    %284 = memref.load %arg8[%c14_184] : memref<40xf32, #tpu.memory_space<smem>>
    %c15_185 = arith.constant 15 : index
    %285 = memref.load %arg8[%c15_185] : memref<40xf32, #tpu.memory_space<smem>>
    %c16_186 = arith.constant 16 : index
    %286 = memref.load %arg8[%c16_186] : memref<40xf32, #tpu.memory_space<smem>>
    %c17_187 = arith.constant 17 : index
    %287 = memref.load %arg8[%c17_187] : memref<40xf32, #tpu.memory_space<smem>>
    %c18_188 = arith.constant 18 : index
    %288 = memref.load %arg8[%c18_188] : memref<40xf32, #tpu.memory_space<smem>>
    %c19_189 = arith.constant 19 : index
    %289 = memref.load %arg8[%c19_189] : memref<40xf32, #tpu.memory_space<smem>>
    %c20_190 = arith.constant 20 : index
    %290 = memref.load %arg8[%c20_190] : memref<40xf32, #tpu.memory_space<smem>>
    %c21_191 = arith.constant 21 : index
    %291 = memref.load %arg8[%c21_191] : memref<40xf32, #tpu.memory_space<smem>>
    %c22_192 = arith.constant 22 : index
    %292 = memref.load %arg8[%c22_192] : memref<40xf32, #tpu.memory_space<smem>>
    %c23_193 = arith.constant 23 : index
    %293 = memref.load %arg8[%c23_193] : memref<40xf32, #tpu.memory_space<smem>>
    %c24_194 = arith.constant 24 : index
    %294 = memref.load %arg8[%c24_194] : memref<40xf32, #tpu.memory_space<smem>>
    %c25_195 = arith.constant 25 : index
    %295 = memref.load %arg8[%c25_195] : memref<40xf32, #tpu.memory_space<smem>>
    %c26_196 = arith.constant 26 : index
    %296 = memref.load %arg8[%c26_196] : memref<40xf32, #tpu.memory_space<smem>>
    %c27_197 = arith.constant 27 : index
    %297 = memref.load %arg8[%c27_197] : memref<40xf32, #tpu.memory_space<smem>>
    %c28_198 = arith.constant 28 : index
    %298 = memref.load %arg8[%c28_198] : memref<40xf32, #tpu.memory_space<smem>>
    %c29_199 = arith.constant 29 : index
    %299 = memref.load %arg8[%c29_199] : memref<40xf32, #tpu.memory_space<smem>>
    %c30_200 = arith.constant 30 : index
    %300 = memref.load %arg8[%c30_200] : memref<40xf32, #tpu.memory_space<smem>>
    %c31_201 = arith.constant 31 : index
    %301 = memref.load %arg8[%c31_201] : memref<40xf32, #tpu.memory_space<smem>>
    %c32_202 = arith.constant 32 : index
    %302 = memref.load %arg8[%c32_202] : memref<40xf32, #tpu.memory_space<smem>>
    %c33_203 = arith.constant 33 : index
    %303 = memref.load %arg8[%c33_203] : memref<40xf32, #tpu.memory_space<smem>>
    %c34_204 = arith.constant 34 : index
    %304 = memref.load %arg8[%c34_204] : memref<40xf32, #tpu.memory_space<smem>>
    %c35_205 = arith.constant 35 : index
    %305 = memref.load %arg8[%c35_205] : memref<40xf32, #tpu.memory_space<smem>>
    %c36_206 = arith.constant 36 : index
    %306 = memref.load %arg8[%c36_206] : memref<40xf32, #tpu.memory_space<smem>>
    %c37_207 = arith.constant 37 : index
    %307 = memref.load %arg8[%c37_207] : memref<40xf32, #tpu.memory_space<smem>>
    %c38_208 = arith.constant 38 : index
    %308 = memref.load %arg8[%c38_208] : memref<40xf32, #tpu.memory_space<smem>>
    %c39_209 = arith.constant 39 : index
    %309 = memref.load %arg8[%c39_209] : memref<40xf32, #tpu.memory_space<smem>>
    %c0_210 = arith.constant 0 : index
    %310 = memref.load %arg9[%c0_210] : memref<4xf32, #tpu.memory_space<smem>>
    %c1_211 = arith.constant 1 : index
    %311 = memref.load %arg9[%c1_211] : memref<4xf32, #tpu.memory_space<smem>>
    %c2_212 = arith.constant 2 : index
    %312 = memref.load %arg9[%c2_212] : memref<4xf32, #tpu.memory_space<smem>>
    %c3_213 = arith.constant 3 : index
    %313 = memref.load %arg9[%c3_213] : memref<4xf32, #tpu.memory_space<smem>>
    %c0_214 = arith.constant 0 : index
    %314 = memref.load %arg10[%c0_214] : memref<4xf32, #tpu.memory_space<smem>>
    %c1_215 = arith.constant 1 : index
    %315 = memref.load %arg10[%c1_215] : memref<4xf32, #tpu.memory_space<smem>>
    %c2_216 = arith.constant 2 : index
    %316 = memref.load %arg10[%c2_216] : memref<4xf32, #tpu.memory_space<smem>>
    %c3_217 = arith.constant 3 : index
    %317 = memref.load %arg10[%c3_217] : memref<4xf32, #tpu.memory_space<smem>>
    %c0_218 = arith.constant 0 : index
    %318 = memref.load %arg11[%c0_218] : memref<1xf32, #tpu.memory_space<smem>>
    %c0_i32 = arith.constant 0 : i32
    %c2_i32 = arith.constant 2 : i32
    %319 = arith.addi %c0_i32, %c2_i32 : i32
    %c1_i32 = arith.constant 1 : i32
    scf.for %arg13 = %c0_i32 to %319 step %c1_i32  : i32 {
      %c1_i32_220 = arith.constant 1 : i32
      %320 = arith.muli %arg13, %c1_i32_220 : i32
      %c0_i32_221 = arith.constant 0 : i32
      %321 = arith.addi %c0_i32_221, %320 : i32
      %c16_i32 = arith.constant 16 : i32
      %322 = arith.muli %321, %c16_i32 : i32
      %323 = tpu.assume_multiple %322, 16 : i32
      %c0_222 = arith.constant 0 : index
      %324 = arith.index_cast %323 : i32 to index
      %c0_223 = arith.constant 0 : index
      %325 = vector.load %arg1[%c0_222, %324, %c0_223] : memref<4x32x128xf32, #tpu.memory_space<vmem>>, vector<1x16x128xf32>
      %326 = vector.shape_cast %325 : vector<1x16x128xf32> to vector<16x128xf32>
      %c1_224 = arith.constant 1 : index
      %327 = arith.index_cast %323 : i32 to index
      %c0_225 = arith.constant 0 : index
      %328 = vector.load %arg1[%c1_224, %327, %c0_225] : memref<4x32x128xf32, #tpu.memory_space<vmem>>, vector<1x16x128xf32>
      %329 = vector.shape_cast %328 : vector<1x16x128xf32> to vector<16x128xf32>
      %c2_226 = arith.constant 2 : index
      %330 = arith.index_cast %323 : i32 to index
      %c0_227 = arith.constant 0 : index
      %331 = vector.load %arg1[%c2_226, %330, %c0_227] : memref<4x32x128xf32, #tpu.memory_space<vmem>>, vector<1x16x128xf32>
      %332 = vector.shape_cast %331 : vector<1x16x128xf32> to vector<16x128xf32>
      %c3_228 = arith.constant 3 : index
      %333 = arith.index_cast %323 : i32 to index
      %c0_229 = arith.constant 0 : index
      %334 = vector.load %arg1[%c3_228, %333, %c0_229] : memref<4x32x128xf32, #tpu.memory_space<vmem>>, vector<1x16x128xf32>
      %335 = vector.shape_cast %334 : vector<1x16x128xf32> to vector<16x128xf32>
      %336 = vector.broadcast %0 : f32 to vector<16x128xf32>
      %337 = arith.mulf %326, %336 : vector<16x128xf32>
      %338 = vector.broadcast %40 : f32 to vector<16x128xf32>
      %339 = arith.addf %337, %338 : vector<16x128xf32>
      %340 = vector.broadcast %10 : f32 to vector<16x128xf32>
      %341 = arith.mulf %329, %340 : vector<16x128xf32>
      %342 = arith.addf %339, %341 : vector<16x128xf32>
      %343 = vector.broadcast %20 : f32 to vector<16x128xf32>
      %344 = arith.mulf %332, %343 : vector<16x128xf32>
      %345 = arith.addf %342, %344 : vector<16x128xf32>
      %346 = vector.broadcast %30 : f32 to vector<16x128xf32>
      %347 = arith.mulf %335, %346 : vector<16x128xf32>
      %348 = arith.addf %345, %347 : vector<16x128xf32>
      %349 = math.tanh %348 : vector<16x128xf32>
      %350 = vector.broadcast %1 : f32 to vector<16x128xf32>
      %351 = arith.mulf %326, %350 : vector<16x128xf32>
      %352 = vector.broadcast %41 : f32 to vector<16x128xf32>
      %353 = arith.addf %351, %352 : vector<16x128xf32>
      %354 = vector.broadcast %11 : f32 to vector<16x128xf32>
      %355 = arith.mulf %329, %354 : vector<16x128xf32>
      %356 = arith.addf %353, %355 : vector<16x128xf32>
      %357 = vector.broadcast %21 : f32 to vector<16x128xf32>
      %358 = arith.mulf %332, %357 : vector<16x128xf32>
      %359 = arith.addf %356, %358 : vector<16x128xf32>
      %360 = vector.broadcast %31 : f32 to vector<16x128xf32>
      %361 = arith.mulf %335, %360 : vector<16x128xf32>
      %362 = arith.addf %359, %361 : vector<16x128xf32>
      %363 = math.tanh %362 : vector<16x128xf32>
      %364 = vector.broadcast %2 : f32 to vector<16x128xf32>
      %365 = arith.mulf %326, %364 : vector<16x128xf32>
      %366 = vector.broadcast %42 : f32 to vector<16x128xf32>
      %367 = arith.addf %365, %366 : vector<16x128xf32>
      %368 = vector.broadcast %12 : f32 to vector<16x128xf32>
      %369 = arith.mulf %329, %368 : vector<16x128xf32>
      %370 = arith.addf %367, %369 : vector<16x128xf32>
      %371 = vector.broadcast %22 : f32 to vector<16x128xf32>
      %372 = arith.mulf %332, %371 : vector<16x128xf32>
      %373 = arith.addf %370, %372 : vector<16x128xf32>
      %374 = vector.broadcast %32 : f32 to vector<16x128xf32>
      %375 = arith.mulf %335, %374 : vector<16x128xf32>
      %376 = arith.addf %373, %375 : vector<16x128xf32>
      %377 = math.tanh %376 : vector<16x128xf32>
      %378 = vector.broadcast %3 : f32 to vector<16x128xf32>
      %379 = arith.mulf %326, %378 : vector<16x128xf32>
      %380 = vector.broadcast %43 : f32 to vector<16x128xf32>
      %381 = arith.addf %379, %380 : vector<16x128xf32>
      %382 = vector.broadcast %13 : f32 to vector<16x128xf32>
      %383 = arith.mulf %329, %382 : vector<16x128xf32>
      %384 = arith.addf %381, %383 : vector<16x128xf32>
      %385 = vector.broadcast %23 : f32 to vector<16x128xf32>
      %386 = arith.mulf %332, %385 : vector<16x128xf32>
      %387 = arith.addf %384, %386 : vector<16x128xf32>
      %388 = vector.broadcast %33 : f32 to vector<16x128xf32>
      %389 = arith.mulf %335, %388 : vector<16x128xf32>
      %390 = arith.addf %387, %389 : vector<16x128xf32>
      %391 = math.tanh %390 : vector<16x128xf32>
      %392 = vector.broadcast %4 : f32 to vector<16x128xf32>
      %393 = arith.mulf %326, %392 : vector<16x128xf32>
      %394 = vector.broadcast %44 : f32 to vector<16x128xf32>
      %395 = arith.addf %393, %394 : vector<16x128xf32>
      %396 = vector.broadcast %14 : f32 to vector<16x128xf32>
      %397 = arith.mulf %329, %396 : vector<16x128xf32>
      %398 = arith.addf %395, %397 : vector<16x128xf32>
      %399 = vector.broadcast %24 : f32 to vector<16x128xf32>
      %400 = arith.mulf %332, %399 : vector<16x128xf32>
      %401 = arith.addf %398, %400 : vector<16x128xf32>
      %402 = vector.broadcast %34 : f32 to vector<16x128xf32>
      %403 = arith.mulf %335, %402 : vector<16x128xf32>
      %404 = arith.addf %401, %403 : vector<16x128xf32>
      %405 = math.tanh %404 : vector<16x128xf32>
      %406 = vector.broadcast %5 : f32 to vector<16x128xf32>
      %407 = arith.mulf %326, %406 : vector<16x128xf32>
      %408 = vector.broadcast %45 : f32 to vector<16x128xf32>
      %409 = arith.addf %407, %408 : vector<16x128xf32>
      %410 = vector.broadcast %15 : f32 to vector<16x128xf32>
      %411 = arith.mulf %329, %410 : vector<16x128xf32>
      %412 = arith.addf %409, %411 : vector<16x128xf32>
      %413 = vector.broadcast %25 : f32 to vector<16x128xf32>
      %414 = arith.mulf %332, %413 : vector<16x128xf32>
      %415 = arith.addf %412, %414 : vector<16x128xf32>
      %416 = vector.broadcast %35 : f32 to vector<16x128xf32>
      %417 = arith.mulf %335, %416 : vector<16x128xf32>
      %418 = arith.addf %415, %417 : vector<16x128xf32>
      %419 = math.tanh %418 : vector<16x128xf32>
      %420 = vector.broadcast %6 : f32 to vector<16x128xf32>
      %421 = arith.mulf %326, %420 : vector<16x128xf32>
      %422 = vector.broadcast %46 : f32 to vector<16x128xf32>
      %423 = arith.addf %421, %422 : vector<16x128xf32>
      %424 = vector.broadcast %16 : f32 to vector<16x128xf32>
      %425 = arith.mulf %329, %424 : vector<16x128xf32>
      %426 = arith.addf %423, %425 : vector<16x128xf32>
      %427 = vector.broadcast %26 : f32 to vector<16x128xf32>
      %428 = arith.mulf %332, %427 : vector<16x128xf32>
      %429 = arith.addf %426, %428 : vector<16x128xf32>
      %430 = vector.broadcast %36 : f32 to vector<16x128xf32>
      %431 = arith.mulf %335, %430 : vector<16x128xf32>
      %432 = arith.addf %429, %431 : vector<16x128xf32>
      %433 = math.tanh %432 : vector<16x128xf32>
      %434 = vector.broadcast %7 : f32 to vector<16x128xf32>
      %435 = arith.mulf %326, %434 : vector<16x128xf32>
      %436 = vector.broadcast %47 : f32 to vector<16x128xf32>
      %437 = arith.addf %435, %436 : vector<16x128xf32>
      %438 = vector.broadcast %17 : f32 to vector<16x128xf32>
      %439 = arith.mulf %329, %438 : vector<16x128xf32>
      %440 = arith.addf %437, %439 : vector<16x128xf32>
      %441 = vector.broadcast %27 : f32 to vector<16x128xf32>
      %442 = arith.mulf %332, %441 : vector<16x128xf32>
      %443 = arith.addf %440, %442 : vector<16x128xf32>
      %444 = vector.broadcast %37 : f32 to vector<16x128xf32>
      %445 = arith.mulf %335, %444 : vector<16x128xf32>
      %446 = arith.addf %443, %445 : vector<16x128xf32>
      %447 = math.tanh %446 : vector<16x128xf32>
      %448 = vector.broadcast %8 : f32 to vector<16x128xf32>
      %449 = arith.mulf %326, %448 : vector<16x128xf32>
      %450 = vector.broadcast %48 : f32 to vector<16x128xf32>
      %451 = arith.addf %449, %450 : vector<16x128xf32>
      %452 = vector.broadcast %18 : f32 to vector<16x128xf32>
      %453 = arith.mulf %329, %452 : vector<16x128xf32>
      %454 = arith.addf %451, %453 : vector<16x128xf32>
      %455 = vector.broadcast %28 : f32 to vector<16x128xf32>
      %456 = arith.mulf %332, %455 : vector<16x128xf32>
      %457 = arith.addf %454, %456 : vector<16x128xf32>
      %458 = vector.broadcast %38 : f32 to vector<16x128xf32>
      %459 = arith.mulf %335, %458 : vector<16x128xf32>
      %460 = arith.addf %457, %459 : vector<16x128xf32>
      %461 = math.tanh %460 : vector<16x128xf32>
      %462 = vector.broadcast %9 : f32 to vector<16x128xf32>
      %463 = arith.mulf %326, %462 : vector<16x128xf32>
      %464 = vector.broadcast %49 : f32 to vector<16x128xf32>
      %465 = arith.addf %463, %464 : vector<16x128xf32>
      %466 = vector.broadcast %19 : f32 to vector<16x128xf32>
      %467 = arith.mulf %329, %466 : vector<16x128xf32>
      %468 = arith.addf %465, %467 : vector<16x128xf32>
      %469 = vector.broadcast %29 : f32 to vector<16x128xf32>
      %470 = arith.mulf %332, %469 : vector<16x128xf32>
      %471 = arith.addf %468, %470 : vector<16x128xf32>
      %472 = vector.broadcast %39 : f32 to vector<16x128xf32>
      %473 = arith.mulf %335, %472 : vector<16x128xf32>
      %474 = arith.addf %471, %473 : vector<16x128xf32>
      %475 = math.tanh %474 : vector<16x128xf32>
      %476 = vector.broadcast %50 : f32 to vector<16x128xf32>
      %477 = arith.mulf %349, %476 : vector<16x128xf32>
      %478 = vector.broadcast %150 : f32 to vector<16x128xf32>
      %479 = arith.addf %477, %478 : vector<16x128xf32>
      %480 = vector.broadcast %60 : f32 to vector<16x128xf32>
      %481 = arith.mulf %363, %480 : vector<16x128xf32>
      %482 = arith.addf %479, %481 : vector<16x128xf32>
      %483 = vector.broadcast %70 : f32 to vector<16x128xf32>
      %484 = arith.mulf %377, %483 : vector<16x128xf32>
      %485 = arith.addf %482, %484 : vector<16x128xf32>
      %486 = vector.broadcast %80 : f32 to vector<16x128xf32>
      %487 = arith.mulf %391, %486 : vector<16x128xf32>
      %488 = arith.addf %485, %487 : vector<16x128xf32>
      %489 = vector.broadcast %90 : f32 to vector<16x128xf32>
      %490 = arith.mulf %405, %489 : vector<16x128xf32>
      %491 = arith.addf %488, %490 : vector<16x128xf32>
      %492 = vector.broadcast %100 : f32 to vector<16x128xf32>
      %493 = arith.mulf %419, %492 : vector<16x128xf32>
      %494 = arith.addf %491, %493 : vector<16x128xf32>
      %495 = vector.broadcast %110 : f32 to vector<16x128xf32>
      %496 = arith.mulf %433, %495 : vector<16x128xf32>
      %497 = arith.addf %494, %496 : vector<16x128xf32>
      %498 = vector.broadcast %120 : f32 to vector<16x128xf32>
      %499 = arith.mulf %447, %498 : vector<16x128xf32>
      %500 = arith.addf %497, %499 : vector<16x128xf32>
      %501 = vector.broadcast %130 : f32 to vector<16x128xf32>
      %502 = arith.mulf %461, %501 : vector<16x128xf32>
      %503 = arith.addf %500, %502 : vector<16x128xf32>
      %504 = vector.broadcast %140 : f32 to vector<16x128xf32>
      %505 = arith.mulf %475, %504 : vector<16x128xf32>
      %506 = arith.addf %503, %505 : vector<16x128xf32>
      %507 = math.tanh %506 : vector<16x128xf32>
      %508 = vector.broadcast %51 : f32 to vector<16x128xf32>
      %509 = arith.mulf %349, %508 : vector<16x128xf32>
      %510 = vector.broadcast %151 : f32 to vector<16x128xf32>
      %511 = arith.addf %509, %510 : vector<16x128xf32>
      %512 = vector.broadcast %61 : f32 to vector<16x128xf32>
      %513 = arith.mulf %363, %512 : vector<16x128xf32>
      %514 = arith.addf %511, %513 : vector<16x128xf32>
      %515 = vector.broadcast %71 : f32 to vector<16x128xf32>
      %516 = arith.mulf %377, %515 : vector<16x128xf32>
      %517 = arith.addf %514, %516 : vector<16x128xf32>
      %518 = vector.broadcast %81 : f32 to vector<16x128xf32>
      %519 = arith.mulf %391, %518 : vector<16x128xf32>
      %520 = arith.addf %517, %519 : vector<16x128xf32>
      %521 = vector.broadcast %91 : f32 to vector<16x128xf32>
      %522 = arith.mulf %405, %521 : vector<16x128xf32>
      %523 = arith.addf %520, %522 : vector<16x128xf32>
      %524 = vector.broadcast %101 : f32 to vector<16x128xf32>
      %525 = arith.mulf %419, %524 : vector<16x128xf32>
      %526 = arith.addf %523, %525 : vector<16x128xf32>
      %527 = vector.broadcast %111 : f32 to vector<16x128xf32>
      %528 = arith.mulf %433, %527 : vector<16x128xf32>
      %529 = arith.addf %526, %528 : vector<16x128xf32>
      %530 = vector.broadcast %121 : f32 to vector<16x128xf32>
      %531 = arith.mulf %447, %530 : vector<16x128xf32>
      %532 = arith.addf %529, %531 : vector<16x128xf32>
      %533 = vector.broadcast %131 : f32 to vector<16x128xf32>
      %534 = arith.mulf %461, %533 : vector<16x128xf32>
      %535 = arith.addf %532, %534 : vector<16x128xf32>
      %536 = vector.broadcast %141 : f32 to vector<16x128xf32>
      %537 = arith.mulf %475, %536 : vector<16x128xf32>
      %538 = arith.addf %535, %537 : vector<16x128xf32>
      %539 = math.tanh %538 : vector<16x128xf32>
      %540 = vector.broadcast %52 : f32 to vector<16x128xf32>
      %541 = arith.mulf %349, %540 : vector<16x128xf32>
      %542 = vector.broadcast %152 : f32 to vector<16x128xf32>
      %543 = arith.addf %541, %542 : vector<16x128xf32>
      %544 = vector.broadcast %62 : f32 to vector<16x128xf32>
      %545 = arith.mulf %363, %544 : vector<16x128xf32>
      %546 = arith.addf %543, %545 : vector<16x128xf32>
      %547 = vector.broadcast %72 : f32 to vector<16x128xf32>
      %548 = arith.mulf %377, %547 : vector<16x128xf32>
      %549 = arith.addf %546, %548 : vector<16x128xf32>
      %550 = vector.broadcast %82 : f32 to vector<16x128xf32>
      %551 = arith.mulf %391, %550 : vector<16x128xf32>
      %552 = arith.addf %549, %551 : vector<16x128xf32>
      %553 = vector.broadcast %92 : f32 to vector<16x128xf32>
      %554 = arith.mulf %405, %553 : vector<16x128xf32>
      %555 = arith.addf %552, %554 : vector<16x128xf32>
      %556 = vector.broadcast %102 : f32 to vector<16x128xf32>
      %557 = arith.mulf %419, %556 : vector<16x128xf32>
      %558 = arith.addf %555, %557 : vector<16x128xf32>
      %559 = vector.broadcast %112 : f32 to vector<16x128xf32>
      %560 = arith.mulf %433, %559 : vector<16x128xf32>
      %561 = arith.addf %558, %560 : vector<16x128xf32>
      %562 = vector.broadcast %122 : f32 to vector<16x128xf32>
      %563 = arith.mulf %447, %562 : vector<16x128xf32>
      %564 = arith.addf %561, %563 : vector<16x128xf32>
      %565 = vector.broadcast %132 : f32 to vector<16x128xf32>
      %566 = arith.mulf %461, %565 : vector<16x128xf32>
      %567 = arith.addf %564, %566 : vector<16x128xf32>
      %568 = vector.broadcast %142 : f32 to vector<16x128xf32>
      %569 = arith.mulf %475, %568 : vector<16x128xf32>
      %570 = arith.addf %567, %569 : vector<16x128xf32>
      %571 = math.tanh %570 : vector<16x128xf32>
      %572 = vector.broadcast %53 : f32 to vector<16x128xf32>
      %573 = arith.mulf %349, %572 : vector<16x128xf32>
      %574 = vector.broadcast %153 : f32 to vector<16x128xf32>
      %575 = arith.addf %573, %574 : vector<16x128xf32>
      %576 = vector.broadcast %63 : f32 to vector<16x128xf32>
      %577 = arith.mulf %363, %576 : vector<16x128xf32>
      %578 = arith.addf %575, %577 : vector<16x128xf32>
      %579 = vector.broadcast %73 : f32 to vector<16x128xf32>
      %580 = arith.mulf %377, %579 : vector<16x128xf32>
      %581 = arith.addf %578, %580 : vector<16x128xf32>
      %582 = vector.broadcast %83 : f32 to vector<16x128xf32>
      %583 = arith.mulf %391, %582 : vector<16x128xf32>
      %584 = arith.addf %581, %583 : vector<16x128xf32>
      %585 = vector.broadcast %93 : f32 to vector<16x128xf32>
      %586 = arith.mulf %405, %585 : vector<16x128xf32>
      %587 = arith.addf %584, %586 : vector<16x128xf32>
      %588 = vector.broadcast %103 : f32 to vector<16x128xf32>
      %589 = arith.mulf %419, %588 : vector<16x128xf32>
      %590 = arith.addf %587, %589 : vector<16x128xf32>
      %591 = vector.broadcast %113 : f32 to vector<16x128xf32>
      %592 = arith.mulf %433, %591 : vector<16x128xf32>
      %593 = arith.addf %590, %592 : vector<16x128xf32>
      %594 = vector.broadcast %123 : f32 to vector<16x128xf32>
      %595 = arith.mulf %447, %594 : vector<16x128xf32>
      %596 = arith.addf %593, %595 : vector<16x128xf32>
      %597 = vector.broadcast %133 : f32 to vector<16x128xf32>
      %598 = arith.mulf %461, %597 : vector<16x128xf32>
      %599 = arith.addf %596, %598 : vector<16x128xf32>
      %600 = vector.broadcast %143 : f32 to vector<16x128xf32>
      %601 = arith.mulf %475, %600 : vector<16x128xf32>
      %602 = arith.addf %599, %601 : vector<16x128xf32>
      %603 = math.tanh %602 : vector<16x128xf32>
      %604 = vector.broadcast %54 : f32 to vector<16x128xf32>
      %605 = arith.mulf %349, %604 : vector<16x128xf32>
      %606 = vector.broadcast %154 : f32 to vector<16x128xf32>
      %607 = arith.addf %605, %606 : vector<16x128xf32>
      %608 = vector.broadcast %64 : f32 to vector<16x128xf32>
      %609 = arith.mulf %363, %608 : vector<16x128xf32>
      %610 = arith.addf %607, %609 : vector<16x128xf32>
      %611 = vector.broadcast %74 : f32 to vector<16x128xf32>
      %612 = arith.mulf %377, %611 : vector<16x128xf32>
      %613 = arith.addf %610, %612 : vector<16x128xf32>
      %614 = vector.broadcast %84 : f32 to vector<16x128xf32>
      %615 = arith.mulf %391, %614 : vector<16x128xf32>
      %616 = arith.addf %613, %615 : vector<16x128xf32>
      %617 = vector.broadcast %94 : f32 to vector<16x128xf32>
      %618 = arith.mulf %405, %617 : vector<16x128xf32>
      %619 = arith.addf %616, %618 : vector<16x128xf32>
      %620 = vector.broadcast %104 : f32 to vector<16x128xf32>
      %621 = arith.mulf %419, %620 : vector<16x128xf32>
      %622 = arith.addf %619, %621 : vector<16x128xf32>
      %623 = vector.broadcast %114 : f32 to vector<16x128xf32>
      %624 = arith.mulf %433, %623 : vector<16x128xf32>
      %625 = arith.addf %622, %624 : vector<16x128xf32>
      %626 = vector.broadcast %124 : f32 to vector<16x128xf32>
      %627 = arith.mulf %447, %626 : vector<16x128xf32>
      %628 = arith.addf %625, %627 : vector<16x128xf32>
      %629 = vector.broadcast %134 : f32 to vector<16x128xf32>
      %630 = arith.mulf %461, %629 : vector<16x128xf32>
      %631 = arith.addf %628, %630 : vector<16x128xf32>
      %632 = vector.broadcast %144 : f32 to vector<16x128xf32>
      %633 = arith.mulf %475, %632 : vector<16x128xf32>
      %634 = arith.addf %631, %633 : vector<16x128xf32>
      %635 = math.tanh %634 : vector<16x128xf32>
      %636 = vector.broadcast %55 : f32 to vector<16x128xf32>
      %637 = arith.mulf %349, %636 : vector<16x128xf32>
      %638 = vector.broadcast %155 : f32 to vector<16x128xf32>
      %639 = arith.addf %637, %638 : vector<16x128xf32>
      %640 = vector.broadcast %65 : f32 to vector<16x128xf32>
      %641 = arith.mulf %363, %640 : vector<16x128xf32>
      %642 = arith.addf %639, %641 : vector<16x128xf32>
      %643 = vector.broadcast %75 : f32 to vector<16x128xf32>
      %644 = arith.mulf %377, %643 : vector<16x128xf32>
      %645 = arith.addf %642, %644 : vector<16x128xf32>
      %646 = vector.broadcast %85 : f32 to vector<16x128xf32>
      %647 = arith.mulf %391, %646 : vector<16x128xf32>
      %648 = arith.addf %645, %647 : vector<16x128xf32>
      %649 = vector.broadcast %95 : f32 to vector<16x128xf32>
      %650 = arith.mulf %405, %649 : vector<16x128xf32>
      %651 = arith.addf %648, %650 : vector<16x128xf32>
      %652 = vector.broadcast %105 : f32 to vector<16x128xf32>
      %653 = arith.mulf %419, %652 : vector<16x128xf32>
      %654 = arith.addf %651, %653 : vector<16x128xf32>
      %655 = vector.broadcast %115 : f32 to vector<16x128xf32>
      %656 = arith.mulf %433, %655 : vector<16x128xf32>
      %657 = arith.addf %654, %656 : vector<16x128xf32>
      %658 = vector.broadcast %125 : f32 to vector<16x128xf32>
      %659 = arith.mulf %447, %658 : vector<16x128xf32>
      %660 = arith.addf %657, %659 : vector<16x128xf32>
      %661 = vector.broadcast %135 : f32 to vector<16x128xf32>
      %662 = arith.mulf %461, %661 : vector<16x128xf32>
      %663 = arith.addf %660, %662 : vector<16x128xf32>
      %664 = vector.broadcast %145 : f32 to vector<16x128xf32>
      %665 = arith.mulf %475, %664 : vector<16x128xf32>
      %666 = arith.addf %663, %665 : vector<16x128xf32>
      %667 = math.tanh %666 : vector<16x128xf32>
      %668 = vector.broadcast %56 : f32 to vector<16x128xf32>
      %669 = arith.mulf %349, %668 : vector<16x128xf32>
      %670 = vector.broadcast %156 : f32 to vector<16x128xf32>
      %671 = arith.addf %669, %670 : vector<16x128xf32>
      %672 = vector.broadcast %66 : f32 to vector<16x128xf32>
      %673 = arith.mulf %363, %672 : vector<16x128xf32>
      %674 = arith.addf %671, %673 : vector<16x128xf32>
      %675 = vector.broadcast %76 : f32 to vector<16x128xf32>
      %676 = arith.mulf %377, %675 : vector<16x128xf32>
      %677 = arith.addf %674, %676 : vector<16x128xf32>
      %678 = vector.broadcast %86 : f32 to vector<16x128xf32>
      %679 = arith.mulf %391, %678 : vector<16x128xf32>
      %680 = arith.addf %677, %679 : vector<16x128xf32>
      %681 = vector.broadcast %96 : f32 to vector<16x128xf32>
      %682 = arith.mulf %405, %681 : vector<16x128xf32>
      %683 = arith.addf %680, %682 : vector<16x128xf32>
      %684 = vector.broadcast %106 : f32 to vector<16x128xf32>
      %685 = arith.mulf %419, %684 : vector<16x128xf32>
      %686 = arith.addf %683, %685 : vector<16x128xf32>
      %687 = vector.broadcast %116 : f32 to vector<16x128xf32>
      %688 = arith.mulf %433, %687 : vector<16x128xf32>
      %689 = arith.addf %686, %688 : vector<16x128xf32>
      %690 = vector.broadcast %126 : f32 to vector<16x128xf32>
      %691 = arith.mulf %447, %690 : vector<16x128xf32>
      %692 = arith.addf %689, %691 : vector<16x128xf32>
      %693 = vector.broadcast %136 : f32 to vector<16x128xf32>
      %694 = arith.mulf %461, %693 : vector<16x128xf32>
      %695 = arith.addf %692, %694 : vector<16x128xf32>
      %696 = vector.broadcast %146 : f32 to vector<16x128xf32>
      %697 = arith.mulf %475, %696 : vector<16x128xf32>
      %698 = arith.addf %695, %697 : vector<16x128xf32>
      %699 = math.tanh %698 : vector<16x128xf32>
      %700 = vector.broadcast %57 : f32 to vector<16x128xf32>
      %701 = arith.mulf %349, %700 : vector<16x128xf32>
      %702 = vector.broadcast %157 : f32 to vector<16x128xf32>
      %703 = arith.addf %701, %702 : vector<16x128xf32>
      %704 = vector.broadcast %67 : f32 to vector<16x128xf32>
      %705 = arith.mulf %363, %704 : vector<16x128xf32>
      %706 = arith.addf %703, %705 : vector<16x128xf32>
      %707 = vector.broadcast %77 : f32 to vector<16x128xf32>
      %708 = arith.mulf %377, %707 : vector<16x128xf32>
      %709 = arith.addf %706, %708 : vector<16x128xf32>
      %710 = vector.broadcast %87 : f32 to vector<16x128xf32>
      %711 = arith.mulf %391, %710 : vector<16x128xf32>
      %712 = arith.addf %709, %711 : vector<16x128xf32>
      %713 = vector.broadcast %97 : f32 to vector<16x128xf32>
      %714 = arith.mulf %405, %713 : vector<16x128xf32>
      %715 = arith.addf %712, %714 : vector<16x128xf32>
      %716 = vector.broadcast %107 : f32 to vector<16x128xf32>
      %717 = arith.mulf %419, %716 : vector<16x128xf32>
      %718 = arith.addf %715, %717 : vector<16x128xf32>
      %719 = vector.broadcast %117 : f32 to vector<16x128xf32>
      %720 = arith.mulf %433, %719 : vector<16x128xf32>
      %721 = arith.addf %718, %720 : vector<16x128xf32>
      %722 = vector.broadcast %127 : f32 to vector<16x128xf32>
      %723 = arith.mulf %447, %722 : vector<16x128xf32>
      %724 = arith.addf %721, %723 : vector<16x128xf32>
      %725 = vector.broadcast %137 : f32 to vector<16x128xf32>
      %726 = arith.mulf %461, %725 : vector<16x128xf32>
      %727 = arith.addf %724, %726 : vector<16x128xf32>
      %728 = vector.broadcast %147 : f32 to vector<16x128xf32>
      %729 = arith.mulf %475, %728 : vector<16x128xf32>
      %730 = arith.addf %727, %729 : vector<16x128xf32>
      %731 = math.tanh %730 : vector<16x128xf32>
      %732 = vector.broadcast %58 : f32 to vector<16x128xf32>
      %733 = arith.mulf %349, %732 : vector<16x128xf32>
      %734 = vector.broadcast %158 : f32 to vector<16x128xf32>
      %735 = arith.addf %733, %734 : vector<16x128xf32>
      %736 = vector.broadcast %68 : f32 to vector<16x128xf32>
      %737 = arith.mulf %363, %736 : vector<16x128xf32>
      %738 = arith.addf %735, %737 : vector<16x128xf32>
      %739 = vector.broadcast %78 : f32 to vector<16x128xf32>
      %740 = arith.mulf %377, %739 : vector<16x128xf32>
      %741 = arith.addf %738, %740 : vector<16x128xf32>
      %742 = vector.broadcast %88 : f32 to vector<16x128xf32>
      %743 = arith.mulf %391, %742 : vector<16x128xf32>
      %744 = arith.addf %741, %743 : vector<16x128xf32>
      %745 = vector.broadcast %98 : f32 to vector<16x128xf32>
      %746 = arith.mulf %405, %745 : vector<16x128xf32>
      %747 = arith.addf %744, %746 : vector<16x128xf32>
      %748 = vector.broadcast %108 : f32 to vector<16x128xf32>
      %749 = arith.mulf %419, %748 : vector<16x128xf32>
      %750 = arith.addf %747, %749 : vector<16x128xf32>
      %751 = vector.broadcast %118 : f32 to vector<16x128xf32>
      %752 = arith.mulf %433, %751 : vector<16x128xf32>
      %753 = arith.addf %750, %752 : vector<16x128xf32>
      %754 = vector.broadcast %128 : f32 to vector<16x128xf32>
      %755 = arith.mulf %447, %754 : vector<16x128xf32>
      %756 = arith.addf %753, %755 : vector<16x128xf32>
      %757 = vector.broadcast %138 : f32 to vector<16x128xf32>
      %758 = arith.mulf %461, %757 : vector<16x128xf32>
      %759 = arith.addf %756, %758 : vector<16x128xf32>
      %760 = vector.broadcast %148 : f32 to vector<16x128xf32>
      %761 = arith.mulf %475, %760 : vector<16x128xf32>
      %762 = arith.addf %759, %761 : vector<16x128xf32>
      %763 = math.tanh %762 : vector<16x128xf32>
      %764 = vector.broadcast %59 : f32 to vector<16x128xf32>
      %765 = arith.mulf %349, %764 : vector<16x128xf32>
      %766 = vector.broadcast %159 : f32 to vector<16x128xf32>
      %767 = arith.addf %765, %766 : vector<16x128xf32>
      %768 = vector.broadcast %69 : f32 to vector<16x128xf32>
      %769 = arith.mulf %363, %768 : vector<16x128xf32>
      %770 = arith.addf %767, %769 : vector<16x128xf32>
      %771 = vector.broadcast %79 : f32 to vector<16x128xf32>
      %772 = arith.mulf %377, %771 : vector<16x128xf32>
      %773 = arith.addf %770, %772 : vector<16x128xf32>
      %774 = vector.broadcast %89 : f32 to vector<16x128xf32>
      %775 = arith.mulf %391, %774 : vector<16x128xf32>
      %776 = arith.addf %773, %775 : vector<16x128xf32>
      %777 = vector.broadcast %99 : f32 to vector<16x128xf32>
      %778 = arith.mulf %405, %777 : vector<16x128xf32>
      %779 = arith.addf %776, %778 : vector<16x128xf32>
      %780 = vector.broadcast %109 : f32 to vector<16x128xf32>
      %781 = arith.mulf %419, %780 : vector<16x128xf32>
      %782 = arith.addf %779, %781 : vector<16x128xf32>
      %783 = vector.broadcast %119 : f32 to vector<16x128xf32>
      %784 = arith.mulf %433, %783 : vector<16x128xf32>
      %785 = arith.addf %782, %784 : vector<16x128xf32>
      %786 = vector.broadcast %129 : f32 to vector<16x128xf32>
      %787 = arith.mulf %447, %786 : vector<16x128xf32>
      %788 = arith.addf %785, %787 : vector<16x128xf32>
      %789 = vector.broadcast %139 : f32 to vector<16x128xf32>
      %790 = arith.mulf %461, %789 : vector<16x128xf32>
      %791 = arith.addf %788, %790 : vector<16x128xf32>
      %792 = vector.broadcast %149 : f32 to vector<16x128xf32>
      %793 = arith.mulf %475, %792 : vector<16x128xf32>
      %794 = arith.addf %791, %793 : vector<16x128xf32>
      %795 = math.tanh %794 : vector<16x128xf32>
      %796 = vector.broadcast %160 : f32 to vector<16x128xf32>
      %797 = arith.mulf %507, %796 : vector<16x128xf32>
      %798 = vector.broadcast %260 : f32 to vector<16x128xf32>
      %799 = arith.addf %797, %798 : vector<16x128xf32>
      %800 = vector.broadcast %170 : f32 to vector<16x128xf32>
      %801 = arith.mulf %539, %800 : vector<16x128xf32>
      %802 = arith.addf %799, %801 : vector<16x128xf32>
      %803 = vector.broadcast %180 : f32 to vector<16x128xf32>
      %804 = arith.mulf %571, %803 : vector<16x128xf32>
      %805 = arith.addf %802, %804 : vector<16x128xf32>
      %806 = vector.broadcast %190 : f32 to vector<16x128xf32>
      %807 = arith.mulf %603, %806 : vector<16x128xf32>
      %808 = arith.addf %805, %807 : vector<16x128xf32>
      %809 = vector.broadcast %200 : f32 to vector<16x128xf32>
      %810 = arith.mulf %635, %809 : vector<16x128xf32>
      %811 = arith.addf %808, %810 : vector<16x128xf32>
      %812 = vector.broadcast %210 : f32 to vector<16x128xf32>
      %813 = arith.mulf %667, %812 : vector<16x128xf32>
      %814 = arith.addf %811, %813 : vector<16x128xf32>
      %815 = vector.broadcast %220 : f32 to vector<16x128xf32>
      %816 = arith.mulf %699, %815 : vector<16x128xf32>
      %817 = arith.addf %814, %816 : vector<16x128xf32>
      %818 = vector.broadcast %230 : f32 to vector<16x128xf32>
      %819 = arith.mulf %731, %818 : vector<16x128xf32>
      %820 = arith.addf %817, %819 : vector<16x128xf32>
      %821 = vector.broadcast %240 : f32 to vector<16x128xf32>
      %822 = arith.mulf %763, %821 : vector<16x128xf32>
      %823 = arith.addf %820, %822 : vector<16x128xf32>
      %824 = vector.broadcast %250 : f32 to vector<16x128xf32>
      %825 = arith.mulf %795, %824 : vector<16x128xf32>
      %826 = arith.addf %823, %825 : vector<16x128xf32>
      %827 = math.tanh %826 : vector<16x128xf32>
      %828 = vector.broadcast %161 : f32 to vector<16x128xf32>
      %829 = arith.mulf %507, %828 : vector<16x128xf32>
      %830 = vector.broadcast %261 : f32 to vector<16x128xf32>
      %831 = arith.addf %829, %830 : vector<16x128xf32>
      %832 = vector.broadcast %171 : f32 to vector<16x128xf32>
      %833 = arith.mulf %539, %832 : vector<16x128xf32>
      %834 = arith.addf %831, %833 : vector<16x128xf32>
      %835 = vector.broadcast %181 : f32 to vector<16x128xf32>
      %836 = arith.mulf %571, %835 : vector<16x128xf32>
      %837 = arith.addf %834, %836 : vector<16x128xf32>
      %838 = vector.broadcast %191 : f32 to vector<16x128xf32>
      %839 = arith.mulf %603, %838 : vector<16x128xf32>
      %840 = arith.addf %837, %839 : vector<16x128xf32>
      %841 = vector.broadcast %201 : f32 to vector<16x128xf32>
      %842 = arith.mulf %635, %841 : vector<16x128xf32>
      %843 = arith.addf %840, %842 : vector<16x128xf32>
      %844 = vector.broadcast %211 : f32 to vector<16x128xf32>
      %845 = arith.mulf %667, %844 : vector<16x128xf32>
      %846 = arith.addf %843, %845 : vector<16x128xf32>
      %847 = vector.broadcast %221 : f32 to vector<16x128xf32>
      %848 = arith.mulf %699, %847 : vector<16x128xf32>
      %849 = arith.addf %846, %848 : vector<16x128xf32>
      %850 = vector.broadcast %231 : f32 to vector<16x128xf32>
      %851 = arith.mulf %731, %850 : vector<16x128xf32>
      %852 = arith.addf %849, %851 : vector<16x128xf32>
      %853 = vector.broadcast %241 : f32 to vector<16x128xf32>
      %854 = arith.mulf %763, %853 : vector<16x128xf32>
      %855 = arith.addf %852, %854 : vector<16x128xf32>
      %856 = vector.broadcast %251 : f32 to vector<16x128xf32>
      %857 = arith.mulf %795, %856 : vector<16x128xf32>
      %858 = arith.addf %855, %857 : vector<16x128xf32>
      %859 = math.tanh %858 : vector<16x128xf32>
      %860 = vector.broadcast %162 : f32 to vector<16x128xf32>
      %861 = arith.mulf %507, %860 : vector<16x128xf32>
      %862 = vector.broadcast %262 : f32 to vector<16x128xf32>
      %863 = arith.addf %861, %862 : vector<16x128xf32>
      %864 = vector.broadcast %172 : f32 to vector<16x128xf32>
      %865 = arith.mulf %539, %864 : vector<16x128xf32>
      %866 = arith.addf %863, %865 : vector<16x128xf32>
      %867 = vector.broadcast %182 : f32 to vector<16x128xf32>
      %868 = arith.mulf %571, %867 : vector<16x128xf32>
      %869 = arith.addf %866, %868 : vector<16x128xf32>
      %870 = vector.broadcast %192 : f32 to vector<16x128xf32>
      %871 = arith.mulf %603, %870 : vector<16x128xf32>
      %872 = arith.addf %869, %871 : vector<16x128xf32>
      %873 = vector.broadcast %202 : f32 to vector<16x128xf32>
      %874 = arith.mulf %635, %873 : vector<16x128xf32>
      %875 = arith.addf %872, %874 : vector<16x128xf32>
      %876 = vector.broadcast %212 : f32 to vector<16x128xf32>
      %877 = arith.mulf %667, %876 : vector<16x128xf32>
      %878 = arith.addf %875, %877 : vector<16x128xf32>
      %879 = vector.broadcast %222 : f32 to vector<16x128xf32>
      %880 = arith.mulf %699, %879 : vector<16x128xf32>
      %881 = arith.addf %878, %880 : vector<16x128xf32>
      %882 = vector.broadcast %232 : f32 to vector<16x128xf32>
      %883 = arith.mulf %731, %882 : vector<16x128xf32>
      %884 = arith.addf %881, %883 : vector<16x128xf32>
      %885 = vector.broadcast %242 : f32 to vector<16x128xf32>
      %886 = arith.mulf %763, %885 : vector<16x128xf32>
      %887 = arith.addf %884, %886 : vector<16x128xf32>
      %888 = vector.broadcast %252 : f32 to vector<16x128xf32>
      %889 = arith.mulf %795, %888 : vector<16x128xf32>
      %890 = arith.addf %887, %889 : vector<16x128xf32>
      %891 = math.tanh %890 : vector<16x128xf32>
      %892 = vector.broadcast %163 : f32 to vector<16x128xf32>
      %893 = arith.mulf %507, %892 : vector<16x128xf32>
      %894 = vector.broadcast %263 : f32 to vector<16x128xf32>
      %895 = arith.addf %893, %894 : vector<16x128xf32>
      %896 = vector.broadcast %173 : f32 to vector<16x128xf32>
      %897 = arith.mulf %539, %896 : vector<16x128xf32>
      %898 = arith.addf %895, %897 : vector<16x128xf32>
      %899 = vector.broadcast %183 : f32 to vector<16x128xf32>
      %900 = arith.mulf %571, %899 : vector<16x128xf32>
      %901 = arith.addf %898, %900 : vector<16x128xf32>
      %902 = vector.broadcast %193 : f32 to vector<16x128xf32>
      %903 = arith.mulf %603, %902 : vector<16x128xf32>
      %904 = arith.addf %901, %903 : vector<16x128xf32>
      %905 = vector.broadcast %203 : f32 to vector<16x128xf32>
      %906 = arith.mulf %635, %905 : vector<16x128xf32>
      %907 = arith.addf %904, %906 : vector<16x128xf32>
      %908 = vector.broadcast %213 : f32 to vector<16x128xf32>
      %909 = arith.mulf %667, %908 : vector<16x128xf32>
      %910 = arith.addf %907, %909 : vector<16x128xf32>
      %911 = vector.broadcast %223 : f32 to vector<16x128xf32>
      %912 = arith.mulf %699, %911 : vector<16x128xf32>
      %913 = arith.addf %910, %912 : vector<16x128xf32>
      %914 = vector.broadcast %233 : f32 to vector<16x128xf32>
      %915 = arith.mulf %731, %914 : vector<16x128xf32>
      %916 = arith.addf %913, %915 : vector<16x128xf32>
      %917 = vector.broadcast %243 : f32 to vector<16x128xf32>
      %918 = arith.mulf %763, %917 : vector<16x128xf32>
      %919 = arith.addf %916, %918 : vector<16x128xf32>
      %920 = vector.broadcast %253 : f32 to vector<16x128xf32>
      %921 = arith.mulf %795, %920 : vector<16x128xf32>
      %922 = arith.addf %919, %921 : vector<16x128xf32>
      %923 = math.tanh %922 : vector<16x128xf32>
      %924 = vector.broadcast %164 : f32 to vector<16x128xf32>
      %925 = arith.mulf %507, %924 : vector<16x128xf32>
      %926 = vector.broadcast %264 : f32 to vector<16x128xf32>
      %927 = arith.addf %925, %926 : vector<16x128xf32>
      %928 = vector.broadcast %174 : f32 to vector<16x128xf32>
      %929 = arith.mulf %539, %928 : vector<16x128xf32>
      %930 = arith.addf %927, %929 : vector<16x128xf32>
      %931 = vector.broadcast %184 : f32 to vector<16x128xf32>
      %932 = arith.mulf %571, %931 : vector<16x128xf32>
      %933 = arith.addf %930, %932 : vector<16x128xf32>
      %934 = vector.broadcast %194 : f32 to vector<16x128xf32>
      %935 = arith.mulf %603, %934 : vector<16x128xf32>
      %936 = arith.addf %933, %935 : vector<16x128xf32>
      %937 = vector.broadcast %204 : f32 to vector<16x128xf32>
      %938 = arith.mulf %635, %937 : vector<16x128xf32>
      %939 = arith.addf %936, %938 : vector<16x128xf32>
      %940 = vector.broadcast %214 : f32 to vector<16x128xf32>
      %941 = arith.mulf %667, %940 : vector<16x128xf32>
      %942 = arith.addf %939, %941 : vector<16x128xf32>
      %943 = vector.broadcast %224 : f32 to vector<16x128xf32>
      %944 = arith.mulf %699, %943 : vector<16x128xf32>
      %945 = arith.addf %942, %944 : vector<16x128xf32>
      %946 = vector.broadcast %234 : f32 to vector<16x128xf32>
      %947 = arith.mulf %731, %946 : vector<16x128xf32>
      %948 = arith.addf %945, %947 : vector<16x128xf32>
      %949 = vector.broadcast %244 : f32 to vector<16x128xf32>
      %950 = arith.mulf %763, %949 : vector<16x128xf32>
      %951 = arith.addf %948, %950 : vector<16x128xf32>
      %952 = vector.broadcast %254 : f32 to vector<16x128xf32>
      %953 = arith.mulf %795, %952 : vector<16x128xf32>
      %954 = arith.addf %951, %953 : vector<16x128xf32>
      %955 = math.tanh %954 : vector<16x128xf32>
      %956 = vector.broadcast %165 : f32 to vector<16x128xf32>
      %957 = arith.mulf %507, %956 : vector<16x128xf32>
      %958 = vector.broadcast %265 : f32 to vector<16x128xf32>
      %959 = arith.addf %957, %958 : vector<16x128xf32>
      %960 = vector.broadcast %175 : f32 to vector<16x128xf32>
      %961 = arith.mulf %539, %960 : vector<16x128xf32>
      %962 = arith.addf %959, %961 : vector<16x128xf32>
      %963 = vector.broadcast %185 : f32 to vector<16x128xf32>
      %964 = arith.mulf %571, %963 : vector<16x128xf32>
      %965 = arith.addf %962, %964 : vector<16x128xf32>
      %966 = vector.broadcast %195 : f32 to vector<16x128xf32>
      %967 = arith.mulf %603, %966 : vector<16x128xf32>
      %968 = arith.addf %965, %967 : vector<16x128xf32>
      %969 = vector.broadcast %205 : f32 to vector<16x128xf32>
      %970 = arith.mulf %635, %969 : vector<16x128xf32>
      %971 = arith.addf %968, %970 : vector<16x128xf32>
      %972 = vector.broadcast %215 : f32 to vector<16x128xf32>
      %973 = arith.mulf %667, %972 : vector<16x128xf32>
      %974 = arith.addf %971, %973 : vector<16x128xf32>
      %975 = vector.broadcast %225 : f32 to vector<16x128xf32>
      %976 = arith.mulf %699, %975 : vector<16x128xf32>
      %977 = arith.addf %974, %976 : vector<16x128xf32>
      %978 = vector.broadcast %235 : f32 to vector<16x128xf32>
      %979 = arith.mulf %731, %978 : vector<16x128xf32>
      %980 = arith.addf %977, %979 : vector<16x128xf32>
      %981 = vector.broadcast %245 : f32 to vector<16x128xf32>
      %982 = arith.mulf %763, %981 : vector<16x128xf32>
      %983 = arith.addf %980, %982 : vector<16x128xf32>
      %984 = vector.broadcast %255 : f32 to vector<16x128xf32>
      %985 = arith.mulf %795, %984 : vector<16x128xf32>
      %986 = arith.addf %983, %985 : vector<16x128xf32>
      %987 = math.tanh %986 : vector<16x128xf32>
      %988 = vector.broadcast %166 : f32 to vector<16x128xf32>
      %989 = arith.mulf %507, %988 : vector<16x128xf32>
      %990 = vector.broadcast %266 : f32 to vector<16x128xf32>
      %991 = arith.addf %989, %990 : vector<16x128xf32>
      %992 = vector.broadcast %176 : f32 to vector<16x128xf32>
      %993 = arith.mulf %539, %992 : vector<16x128xf32>
      %994 = arith.addf %991, %993 : vector<16x128xf32>
      %995 = vector.broadcast %186 : f32 to vector<16x128xf32>
      %996 = arith.mulf %571, %995 : vector<16x128xf32>
      %997 = arith.addf %994, %996 : vector<16x128xf32>
      %998 = vector.broadcast %196 : f32 to vector<16x128xf32>
      %999 = arith.mulf %603, %998 : vector<16x128xf32>
      %1000 = arith.addf %997, %999 : vector<16x128xf32>
      %1001 = vector.broadcast %206 : f32 to vector<16x128xf32>
      %1002 = arith.mulf %635, %1001 : vector<16x128xf32>
      %1003 = arith.addf %1000, %1002 : vector<16x128xf32>
      %1004 = vector.broadcast %216 : f32 to vector<16x128xf32>
      %1005 = arith.mulf %667, %1004 : vector<16x128xf32>
      %1006 = arith.addf %1003, %1005 : vector<16x128xf32>
      %1007 = vector.broadcast %226 : f32 to vector<16x128xf32>
      %1008 = arith.mulf %699, %1007 : vector<16x128xf32>
      %1009 = arith.addf %1006, %1008 : vector<16x128xf32>
      %1010 = vector.broadcast %236 : f32 to vector<16x128xf32>
      %1011 = arith.mulf %731, %1010 : vector<16x128xf32>
      %1012 = arith.addf %1009, %1011 : vector<16x128xf32>
      %1013 = vector.broadcast %246 : f32 to vector<16x128xf32>
      %1014 = arith.mulf %763, %1013 : vector<16x128xf32>
      %1015 = arith.addf %1012, %1014 : vector<16x128xf32>
      %1016 = vector.broadcast %256 : f32 to vector<16x128xf32>
      %1017 = arith.mulf %795, %1016 : vector<16x128xf32>
      %1018 = arith.addf %1015, %1017 : vector<16x128xf32>
      %1019 = math.tanh %1018 : vector<16x128xf32>
      %1020 = vector.broadcast %167 : f32 to vector<16x128xf32>
      %1021 = arith.mulf %507, %1020 : vector<16x128xf32>
      %1022 = vector.broadcast %267 : f32 to vector<16x128xf32>
      %1023 = arith.addf %1021, %1022 : vector<16x128xf32>
      %1024 = vector.broadcast %177 : f32 to vector<16x128xf32>
      %1025 = arith.mulf %539, %1024 : vector<16x128xf32>
      %1026 = arith.addf %1023, %1025 : vector<16x128xf32>
      %1027 = vector.broadcast %187 : f32 to vector<16x128xf32>
      %1028 = arith.mulf %571, %1027 : vector<16x128xf32>
      %1029 = arith.addf %1026, %1028 : vector<16x128xf32>
      %1030 = vector.broadcast %197 : f32 to vector<16x128xf32>
      %1031 = arith.mulf %603, %1030 : vector<16x128xf32>
      %1032 = arith.addf %1029, %1031 : vector<16x128xf32>
      %1033 = vector.broadcast %207 : f32 to vector<16x128xf32>
      %1034 = arith.mulf %635, %1033 : vector<16x128xf32>
      %1035 = arith.addf %1032, %1034 : vector<16x128xf32>
      %1036 = vector.broadcast %217 : f32 to vector<16x128xf32>
      %1037 = arith.mulf %667, %1036 : vector<16x128xf32>
      %1038 = arith.addf %1035, %1037 : vector<16x128xf32>
      %1039 = vector.broadcast %227 : f32 to vector<16x128xf32>
      %1040 = arith.mulf %699, %1039 : vector<16x128xf32>
      %1041 = arith.addf %1038, %1040 : vector<16x128xf32>
      %1042 = vector.broadcast %237 : f32 to vector<16x128xf32>
      %1043 = arith.mulf %731, %1042 : vector<16x128xf32>
      %1044 = arith.addf %1041, %1043 : vector<16x128xf32>
      %1045 = vector.broadcast %247 : f32 to vector<16x128xf32>
      %1046 = arith.mulf %763, %1045 : vector<16x128xf32>
      %1047 = arith.addf %1044, %1046 : vector<16x128xf32>
      %1048 = vector.broadcast %257 : f32 to vector<16x128xf32>
      %1049 = arith.mulf %795, %1048 : vector<16x128xf32>
      %1050 = arith.addf %1047, %1049 : vector<16x128xf32>
      %1051 = math.tanh %1050 : vector<16x128xf32>
      %1052 = vector.broadcast %168 : f32 to vector<16x128xf32>
      %1053 = arith.mulf %507, %1052 : vector<16x128xf32>
      %1054 = vector.broadcast %268 : f32 to vector<16x128xf32>
      %1055 = arith.addf %1053, %1054 : vector<16x128xf32>
      %1056 = vector.broadcast %178 : f32 to vector<16x128xf32>
      %1057 = arith.mulf %539, %1056 : vector<16x128xf32>
      %1058 = arith.addf %1055, %1057 : vector<16x128xf32>
      %1059 = vector.broadcast %188 : f32 to vector<16x128xf32>
      %1060 = arith.mulf %571, %1059 : vector<16x128xf32>
      %1061 = arith.addf %1058, %1060 : vector<16x128xf32>
      %1062 = vector.broadcast %198 : f32 to vector<16x128xf32>
      %1063 = arith.mulf %603, %1062 : vector<16x128xf32>
      %1064 = arith.addf %1061, %1063 : vector<16x128xf32>
      %1065 = vector.broadcast %208 : f32 to vector<16x128xf32>
      %1066 = arith.mulf %635, %1065 : vector<16x128xf32>
      %1067 = arith.addf %1064, %1066 : vector<16x128xf32>
      %1068 = vector.broadcast %218 : f32 to vector<16x128xf32>
      %1069 = arith.mulf %667, %1068 : vector<16x128xf32>
      %1070 = arith.addf %1067, %1069 : vector<16x128xf32>
      %1071 = vector.broadcast %228 : f32 to vector<16x128xf32>
      %1072 = arith.mulf %699, %1071 : vector<16x128xf32>
      %1073 = arith.addf %1070, %1072 : vector<16x128xf32>
      %1074 = vector.broadcast %238 : f32 to vector<16x128xf32>
      %1075 = arith.mulf %731, %1074 : vector<16x128xf32>
      %1076 = arith.addf %1073, %1075 : vector<16x128xf32>
      %1077 = vector.broadcast %248 : f32 to vector<16x128xf32>
      %1078 = arith.mulf %763, %1077 : vector<16x128xf32>
      %1079 = arith.addf %1076, %1078 : vector<16x128xf32>
      %1080 = vector.broadcast %258 : f32 to vector<16x128xf32>
      %1081 = arith.mulf %795, %1080 : vector<16x128xf32>
      %1082 = arith.addf %1079, %1081 : vector<16x128xf32>
      %1083 = math.tanh %1082 : vector<16x128xf32>
      %1084 = vector.broadcast %169 : f32 to vector<16x128xf32>
      %1085 = arith.mulf %507, %1084 : vector<16x128xf32>
      %1086 = vector.broadcast %269 : f32 to vector<16x128xf32>
      %1087 = arith.addf %1085, %1086 : vector<16x128xf32>
      %1088 = vector.broadcast %179 : f32 to vector<16x128xf32>
      %1089 = arith.mulf %539, %1088 : vector<16x128xf32>
      %1090 = arith.addf %1087, %1089 : vector<16x128xf32>
      %1091 = vector.broadcast %189 : f32 to vector<16x128xf32>
      %1092 = arith.mulf %571, %1091 : vector<16x128xf32>
      %1093 = arith.addf %1090, %1092 : vector<16x128xf32>
      %1094 = vector.broadcast %199 : f32 to vector<16x128xf32>
      %1095 = arith.mulf %603, %1094 : vector<16x128xf32>
      %1096 = arith.addf %1093, %1095 : vector<16x128xf32>
      %1097 = vector.broadcast %209 : f32 to vector<16x128xf32>
      %1098 = arith.mulf %635, %1097 : vector<16x128xf32>
      %1099 = arith.addf %1096, %1098 : vector<16x128xf32>
      %1100 = vector.broadcast %219 : f32 to vector<16x128xf32>
      %1101 = arith.mulf %667, %1100 : vector<16x128xf32>
      %1102 = arith.addf %1099, %1101 : vector<16x128xf32>
      %1103 = vector.broadcast %229 : f32 to vector<16x128xf32>
      %1104 = arith.mulf %699, %1103 : vector<16x128xf32>
      %1105 = arith.addf %1102, %1104 : vector<16x128xf32>
      %1106 = vector.broadcast %239 : f32 to vector<16x128xf32>
      %1107 = arith.mulf %731, %1106 : vector<16x128xf32>
      %1108 = arith.addf %1105, %1107 : vector<16x128xf32>
      %1109 = vector.broadcast %249 : f32 to vector<16x128xf32>
      %1110 = arith.mulf %763, %1109 : vector<16x128xf32>
      %1111 = arith.addf %1108, %1110 : vector<16x128xf32>
      %1112 = vector.broadcast %259 : f32 to vector<16x128xf32>
      %1113 = arith.mulf %795, %1112 : vector<16x128xf32>
      %1114 = arith.addf %1111, %1113 : vector<16x128xf32>
      %1115 = math.tanh %1114 : vector<16x128xf32>
      %1116 = vector.broadcast %270 : f32 to vector<16x128xf32>
      %1117 = arith.mulf %827, %1116 : vector<16x128xf32>
      %1118 = vector.broadcast %310 : f32 to vector<16x128xf32>
      %1119 = arith.addf %1117, %1118 : vector<16x128xf32>
      %1120 = vector.broadcast %274 : f32 to vector<16x128xf32>
      %1121 = arith.mulf %859, %1120 : vector<16x128xf32>
      %1122 = arith.addf %1119, %1121 : vector<16x128xf32>
      %1123 = vector.broadcast %278 : f32 to vector<16x128xf32>
      %1124 = arith.mulf %891, %1123 : vector<16x128xf32>
      %1125 = arith.addf %1122, %1124 : vector<16x128xf32>
      %1126 = vector.broadcast %282 : f32 to vector<16x128xf32>
      %1127 = arith.mulf %923, %1126 : vector<16x128xf32>
      %1128 = arith.addf %1125, %1127 : vector<16x128xf32>
      %1129 = vector.broadcast %286 : f32 to vector<16x128xf32>
      %1130 = arith.mulf %955, %1129 : vector<16x128xf32>
      %1131 = arith.addf %1128, %1130 : vector<16x128xf32>
      %1132 = vector.broadcast %290 : f32 to vector<16x128xf32>
      %1133 = arith.mulf %987, %1132 : vector<16x128xf32>
      %1134 = arith.addf %1131, %1133 : vector<16x128xf32>
      %1135 = vector.broadcast %294 : f32 to vector<16x128xf32>
      %1136 = arith.mulf %1019, %1135 : vector<16x128xf32>
      %1137 = arith.addf %1134, %1136 : vector<16x128xf32>
      %1138 = vector.broadcast %298 : f32 to vector<16x128xf32>
      %1139 = arith.mulf %1051, %1138 : vector<16x128xf32>
      %1140 = arith.addf %1137, %1139 : vector<16x128xf32>
      %1141 = vector.broadcast %302 : f32 to vector<16x128xf32>
      %1142 = arith.mulf %1083, %1141 : vector<16x128xf32>
      %1143 = arith.addf %1140, %1142 : vector<16x128xf32>
      %1144 = vector.broadcast %306 : f32 to vector<16x128xf32>
      %1145 = arith.mulf %1115, %1144 : vector<16x128xf32>
      %1146 = arith.addf %1143, %1145 : vector<16x128xf32>
      %1147 = math.tanh %1146 : vector<16x128xf32>
      %1148 = vector.broadcast %271 : f32 to vector<16x128xf32>
      %1149 = arith.mulf %827, %1148 : vector<16x128xf32>
      %1150 = vector.broadcast %311 : f32 to vector<16x128xf32>
      %1151 = arith.addf %1149, %1150 : vector<16x128xf32>
      %1152 = vector.broadcast %275 : f32 to vector<16x128xf32>
      %1153 = arith.mulf %859, %1152 : vector<16x128xf32>
      %1154 = arith.addf %1151, %1153 : vector<16x128xf32>
      %1155 = vector.broadcast %279 : f32 to vector<16x128xf32>
      %1156 = arith.mulf %891, %1155 : vector<16x128xf32>
      %1157 = arith.addf %1154, %1156 : vector<16x128xf32>
      %1158 = vector.broadcast %283 : f32 to vector<16x128xf32>
      %1159 = arith.mulf %923, %1158 : vector<16x128xf32>
      %1160 = arith.addf %1157, %1159 : vector<16x128xf32>
      %1161 = vector.broadcast %287 : f32 to vector<16x128xf32>
      %1162 = arith.mulf %955, %1161 : vector<16x128xf32>
      %1163 = arith.addf %1160, %1162 : vector<16x128xf32>
      %1164 = vector.broadcast %291 : f32 to vector<16x128xf32>
      %1165 = arith.mulf %987, %1164 : vector<16x128xf32>
      %1166 = arith.addf %1163, %1165 : vector<16x128xf32>
      %1167 = vector.broadcast %295 : f32 to vector<16x128xf32>
      %1168 = arith.mulf %1019, %1167 : vector<16x128xf32>
      %1169 = arith.addf %1166, %1168 : vector<16x128xf32>
      %1170 = vector.broadcast %299 : f32 to vector<16x128xf32>
      %1171 = arith.mulf %1051, %1170 : vector<16x128xf32>
      %1172 = arith.addf %1169, %1171 : vector<16x128xf32>
      %1173 = vector.broadcast %303 : f32 to vector<16x128xf32>
      %1174 = arith.mulf %1083, %1173 : vector<16x128xf32>
      %1175 = arith.addf %1172, %1174 : vector<16x128xf32>
      %1176 = vector.broadcast %307 : f32 to vector<16x128xf32>
      %1177 = arith.mulf %1115, %1176 : vector<16x128xf32>
      %1178 = arith.addf %1175, %1177 : vector<16x128xf32>
      %1179 = math.tanh %1178 : vector<16x128xf32>
      %1180 = vector.broadcast %272 : f32 to vector<16x128xf32>
      %1181 = arith.mulf %827, %1180 : vector<16x128xf32>
      %1182 = vector.broadcast %312 : f32 to vector<16x128xf32>
      %1183 = arith.addf %1181, %1182 : vector<16x128xf32>
      %1184 = vector.broadcast %276 : f32 to vector<16x128xf32>
      %1185 = arith.mulf %859, %1184 : vector<16x128xf32>
      %1186 = arith.addf %1183, %1185 : vector<16x128xf32>
      %1187 = vector.broadcast %280 : f32 to vector<16x128xf32>
      %1188 = arith.mulf %891, %1187 : vector<16x128xf32>
      %1189 = arith.addf %1186, %1188 : vector<16x128xf32>
      %1190 = vector.broadcast %284 : f32 to vector<16x128xf32>
      %1191 = arith.mulf %923, %1190 : vector<16x128xf32>
      %1192 = arith.addf %1189, %1191 : vector<16x128xf32>
      %1193 = vector.broadcast %288 : f32 to vector<16x128xf32>
      %1194 = arith.mulf %955, %1193 : vector<16x128xf32>
      %1195 = arith.addf %1192, %1194 : vector<16x128xf32>
      %1196 = vector.broadcast %292 : f32 to vector<16x128xf32>
      %1197 = arith.mulf %987, %1196 : vector<16x128xf32>
      %1198 = arith.addf %1195, %1197 : vector<16x128xf32>
      %1199 = vector.broadcast %296 : f32 to vector<16x128xf32>
      %1200 = arith.mulf %1019, %1199 : vector<16x128xf32>
      %1201 = arith.addf %1198, %1200 : vector<16x128xf32>
      %1202 = vector.broadcast %300 : f32 to vector<16x128xf32>
      %1203 = arith.mulf %1051, %1202 : vector<16x128xf32>
      %1204 = arith.addf %1201, %1203 : vector<16x128xf32>
      %1205 = vector.broadcast %304 : f32 to vector<16x128xf32>
      %1206 = arith.mulf %1083, %1205 : vector<16x128xf32>
      %1207 = arith.addf %1204, %1206 : vector<16x128xf32>
      %1208 = vector.broadcast %308 : f32 to vector<16x128xf32>
      %1209 = arith.mulf %1115, %1208 : vector<16x128xf32>
      %1210 = arith.addf %1207, %1209 : vector<16x128xf32>
      %1211 = math.tanh %1210 : vector<16x128xf32>
      %1212 = vector.broadcast %273 : f32 to vector<16x128xf32>
      %1213 = arith.mulf %827, %1212 : vector<16x128xf32>
      %1214 = vector.broadcast %313 : f32 to vector<16x128xf32>
      %1215 = arith.addf %1213, %1214 : vector<16x128xf32>
      %1216 = vector.broadcast %277 : f32 to vector<16x128xf32>
      %1217 = arith.mulf %859, %1216 : vector<16x128xf32>
      %1218 = arith.addf %1215, %1217 : vector<16x128xf32>
      %1219 = vector.broadcast %281 : f32 to vector<16x128xf32>
      %1220 = arith.mulf %891, %1219 : vector<16x128xf32>
      %1221 = arith.addf %1218, %1220 : vector<16x128xf32>
      %1222 = vector.broadcast %285 : f32 to vector<16x128xf32>
      %1223 = arith.mulf %923, %1222 : vector<16x128xf32>
      %1224 = arith.addf %1221, %1223 : vector<16x128xf32>
      %1225 = vector.broadcast %289 : f32 to vector<16x128xf32>
      %1226 = arith.mulf %955, %1225 : vector<16x128xf32>
      %1227 = arith.addf %1224, %1226 : vector<16x128xf32>
      %1228 = vector.broadcast %293 : f32 to vector<16x128xf32>
      %1229 = arith.mulf %987, %1228 : vector<16x128xf32>
      %1230 = arith.addf %1227, %1229 : vector<16x128xf32>
      %1231 = vector.broadcast %297 : f32 to vector<16x128xf32>
      %1232 = arith.mulf %1019, %1231 : vector<16x128xf32>
      %1233 = arith.addf %1230, %1232 : vector<16x128xf32>
      %1234 = vector.broadcast %301 : f32 to vector<16x128xf32>
      %1235 = arith.mulf %1051, %1234 : vector<16x128xf32>
      %1236 = arith.addf %1233, %1235 : vector<16x128xf32>
      %1237 = vector.broadcast %305 : f32 to vector<16x128xf32>
      %1238 = arith.mulf %1083, %1237 : vector<16x128xf32>
      %1239 = arith.addf %1236, %1238 : vector<16x128xf32>
      %1240 = vector.broadcast %309 : f32 to vector<16x128xf32>
      %1241 = arith.mulf %1115, %1240 : vector<16x128xf32>
      %1242 = arith.addf %1239, %1241 : vector<16x128xf32>
      %1243 = math.tanh %1242 : vector<16x128xf32>
      %1244 = arith.addf %1147, %1179 : vector<16x128xf32>
      %1245 = arith.addf %1244, %1211 : vector<16x128xf32>
      %1246 = arith.addf %1245, %1243 : vector<16x128xf32>
      %cst = arith.constant 2.500000e-01 : f32
      %1247 = vector.broadcast %cst : f32 to vector<16x128xf32>
      %1248 = arith.mulf %1246, %1247 : vector<16x128xf32>
      %1249 = arith.subf %1147, %1248 : vector<16x128xf32>
      %1250 = arith.subf %1179, %1248 : vector<16x128xf32>
      %1251 = arith.subf %1211, %1248 : vector<16x128xf32>
      %1252 = arith.subf %1243, %1248 : vector<16x128xf32>
      %1253 = arith.mulf %1249, %1249 : vector<16x128xf32>
      %1254 = arith.mulf %1250, %1250 : vector<16x128xf32>
      %1255 = arith.addf %1253, %1254 : vector<16x128xf32>
      %1256 = arith.mulf %1251, %1251 : vector<16x128xf32>
      %1257 = arith.addf %1255, %1256 : vector<16x128xf32>
      %1258 = arith.mulf %1252, %1252 : vector<16x128xf32>
      %1259 = arith.addf %1257, %1258 : vector<16x128xf32>
      %cst_230 = arith.constant 2.500000e-01 : f32
      %1260 = vector.broadcast %cst_230 : f32 to vector<16x128xf32>
      %1261 = arith.mulf %1259, %1260 : vector<16x128xf32>
      %cst_231 = arith.constant 9.99999974E-6 : f32
      %1262 = vector.broadcast %cst_231 : f32 to vector<16x128xf32>
      %1263 = arith.addf %1261, %1262 : vector<16x128xf32>
      %1264 = math.rsqrt %1263 : vector<16x128xf32>
      %1265 = vector.broadcast %314 : f32 to vector<16x128xf32>
      %1266 = arith.mulf %1249, %1265 : vector<16x128xf32>
      %1267 = vector.broadcast %315 : f32 to vector<16x128xf32>
      %1268 = arith.mulf %1250, %1267 : vector<16x128xf32>
      %1269 = arith.addf %1266, %1268 : vector<16x128xf32>
      %1270 = vector.broadcast %316 : f32 to vector<16x128xf32>
      %1271 = arith.mulf %1251, %1270 : vector<16x128xf32>
      %1272 = arith.addf %1269, %1271 : vector<16x128xf32>
      %1273 = vector.broadcast %317 : f32 to vector<16x128xf32>
      %1274 = arith.mulf %1252, %1273 : vector<16x128xf32>
      %1275 = arith.addf %1272, %1274 : vector<16x128xf32>
      %1276 = arith.mulf %1275, %1264 : vector<16x128xf32>
      %1277 = vector.broadcast %318 : f32 to vector<16x128xf32>
      %1278 = arith.addf %1276, %1277 : vector<16x128xf32>
      %1279 = arith.index_cast %323 : i32 to index
      %c0_232 = arith.constant 0 : index
      %1280 = vector.load %arg12[%1279, %c0_232] : memref<32x128xf32, #tpu.memory_space<vmem>>, vector<16x128xf32>
      tpu.vector_store %arg12[%1279, %c0_232], %1278 {strides = array<i32>} : memref<32x128xf32, #tpu.memory_space<vmem>>, vector<16x128xf32>,
    }
    %c2_i32_219 = arith.constant 2 : i32
    return
  }
  func.func @transform_0(%arg0: i32) -> (i32, i32, i32) {
    %c0_i32 = arith.constant 0 : i32
    %c0_i32_0 = arith.constant 0 : i32
    %c0_i32_1 = arith.constant 0 : i32
    return %c0_i32, %arg0, %c0_i32_0 : i32, i32, i32
  }
  func.func @transform_1(%arg0: i32) -> i32 {
    %c0_i32 = arith.constant 0 : i32
    %c0_i32_0 = arith.constant 0 : i32
    return %c0_i32 : i32
  }
  func.func @transform_2(%arg0: i32) -> i32 {
    %c0_i32 = arith.constant 0 : i32
    %c0_i32_0 = arith.constant 0 : i32
    return %c0_i32 : i32
  }
  func.func @transform_3(%arg0: i32) -> i32 {
    %c0_i32 = arith.constant 0 : i32
    %c0_i32_0 = arith.constant 0 : i32
    return %c0_i32 : i32
  }
  func.func @transform_4(%arg0: i32) -> i32 {
    %c0_i32 = arith.constant 0 : i32
    %c0_i32_0 = arith.constant 0 : i32
    return %c0_i32 : i32
  }
  func.func @transform_5(%arg0: i32) -> i32 {
    %c0_i32 = arith.constant 0 : i32
    %c0_i32_0 = arith.constant 0 : i32
    return %c0_i32 : i32
  }
  func.func @transform_6(%arg0: i32) -> i32 {
    %c0_i32 = arith.constant 0 : i32
    %c0_i32_0 = arith.constant 0 : i32
    return %c0_i32 : i32
  }
  func.func @transform_7(%arg0: i32) -> i32 {
    %c0_i32 = arith.constant 0 : i32
    %c0_i32_0 = arith.constant 0 : i32
    return %c0_i32 : i32
  }
  func.func @transform_8(%arg0: i32) -> i32 {
    %c0_i32 = arith.constant 0 : i32
    %c0_i32_0 = arith.constant 0 : i32
    return %c0_i32 : i32
  }
  func.func @transform_9(%arg0: i32) -> i32 {
    %c0_i32 = arith.constant 0 : i32
    %c0_i32_0 = arith.constant 0 : i32
    return %c0_i32 : i32
  }
  func.func @transform_10(%arg0: i32) -> i32 {
    %c0_i32 = arith.constant 0 : i32
    %c0_i32_0 = arith.constant 0 : i32
    return %c0_i32 : i32
  }
  func.func @transform_11(%arg0: i32) -> (i32, i32) {
    %c0_i32 = arith.constant 0 : i32
    %c0_i32_0 = arith.constant 0 : i32
    return %arg0, %c0_i32 : i32, i32
  }
}

</mosaic_0001>

<llo_original>
// kernel: _forward_jit.1
$region0: #{_forward_jit.1}
  #allocation0 [shape = 'u32[]', space=smem, size = 0x4, offset = 0x4, fixed_abs, tag = 'smem constant byte address 0x4 - core index']
  #allocation1 [shape = 'u32[144,128]{1,0:T(1,128)}', space=vmem, size = 0x12000, scoped, tag = 'internal scratch']
  #allocation2 [shape = 'f32[1]{0:T(128)S(6)}', space=smem, size = 0x200, scoped, tag = 'scoped memory for _forward_jit.1']
  %s0 = inlined_call_operand.vmem [shape: f32[4,96,128], index: 0, kind: input, shape index: {}]
  %s1 = inlined_call_operand.vmem [shape: f32[40], index: 1, kind: input, shape index: {}]
  %s2 = inlined_call_operand.vmem [shape: f32[10], index: 2, kind: input, shape index: {}]
  %s3 = inlined_call_operand.vmem [shape: f32[100], index: 3, kind: input, shape index: {}]
  %s4 = inlined_call_operand.vmem [shape: f32[10], index: 4, kind: input, shape index: {}]
  %s5 = inlined_call_operand.vmem [shape: f32[100], index: 5, kind: input, shape index: {}]
  %s6 = inlined_call_operand.vmem [shape: f32[10], index: 6, kind: input, shape index: {}]
  %s7 = inlined_call_operand.vmem [shape: f32[40], index: 7, kind: input, shape index: {}]
  %s8 = inlined_call_operand.vmem [shape: f32[4], index: 8, kind: input, shape index: {}]
  %s9 = inlined_call_operand.vmem [shape: f32[4], index: 9, kind: input, shape index: {}]
  %s10 = inlined_call_operand.<no memory space> [shape: f32[1], index: 10, kind: input, shape index: {}]
  %s11 = inlined_call_operand.vmem [shape: f32[96,128], index: 11, kind: output, shape index: {}]
  %s12 = sld [smem:[#allocation0]]
  $region158: #{_forward_jit.1} parent=0
    _
  %s14 = ssub.s32 1, %s12
  %s15 = scalar_select 0, %s14, %s12
  %16 = sst [smem:[#allocation2]] %s10
  $region1: #{_forward_jit.1} parent=0
    #allocation3 [shape = 'u8[131072]{0}', space=vmem, size = 0x20000, scoped, tag = 'input window, operand 0']
    #allocation4 [shape = 'u8[512]{0}', space=smem, size = 0x200, scoped, tag = 'input window, operand 1, single buffered']
    #allocation5 [shape = 's32[2]{0}', space=sflag, size = 0x8, scoped, tag = 'scoped memory for _forward_jit.1']
    #allocation6 [shape = 'u8[512]{0}', space=smem, size = 0x200, scoped, tag = 'input window, operand 2, single buffered']
    #allocation7 [shape = 's32[1]{0}', space=sflag, size = 0x4, scoped, tag = 'scoped memory for _forward_jit.1']
    #allocation8 [shape = 'u8[512]{0}', space=smem, size = 0x200, scoped, tag = 'input window, operand 3, single buffered']
    #allocation9 [shape = 'u8[512]{0}', space=smem, size = 0x200, scoped, tag = 'input window, operand 4, single buffered']
    #allocation10 [shape = 's32[1]{0}', space=sflag, size = 0x4, scoped, tag = 'scoped memory for _forward_jit.1']
    #allocation11 [shape = 'u8[512]{0}', space=smem, size = 0x200, scoped, tag = 'input window, operand 5, single buffered']
    #allocation12 [shape = 'u8[512]{0}', space=smem, size = 0x200, scoped, tag = 'input window, operand 6, single buffered']
    #allocation13 [shape = 's32[1]{0}', space=sflag, size = 0x4, scoped, tag = 'scoped memory for _forward_jit.1']
    #allocation14 [shape = 'u8[512]{0}', space=smem, size = 0x200, scoped, tag = 'input window, operand 7, single buffered']
    #allocation15 [shape = 'u8[512]{0}', space=smem, size = 0x200, scoped, tag = 'input window, operand 8, single buffered']
    #allocation16 [shape = 's32[1]{0}', space=sflag, size = 0x4, scoped, tag = 'scoped memory for _forward_jit.1']
    #allocation17 [shape = 'u8[512]{0}', space=smem, size = 0x200, scoped, tag = 'input window, operand 9, single buffered']
    %17 = vsyncpa [#allocation5], 0
    %18 = vsyncpa [#allocation7], 0
    %19 = vsyncpa [#allocation10], 0
    %20 = vsyncpa [#allocation13], 0
    %21 = vsyncpa [#allocation16], 0
    loop: start=0, step=1, limit=5
    $region2: #{_forward_jit.1} parent=1 // loop_pre_header
      _
    $region3: #{_forward_jit.1} parent=1 // loop_header
      %s23 = sphi 0, %s27
      %p24 = scmp.ge.s32.totalorder %s23, 5
      %s33 = sphi 0, %s35
      %s36 = sphi 0, %s33
      %s37 = sphi 0, %s36
      %s53 = sphi 0, %s37
      %s57 = sphi 0, %s57
      %s59 = sphi 0, %s57
      %s60 = sphi 0, %s59
      %s74 = sphi 0, %s60
      %s78 = sphi 0, %s78
      %s80 = sphi 0, %s78
      %s81 = sphi 0, %s80
      %s95 = sphi 0, %s81
      %s99 = sphi 0, %s99
      %s101 = sphi 0, %s99
      %s102 = sphi 0, %s101
      %s116 = sphi 0, %s102
      %s120 = sphi 0, %s120
      %s122 = sphi 0, %s120
      %s123 = sphi 0, %s122
      %s137 = sphi 0, %s123
      %s141 = sphi 0, %s141
      %s143 = sphi 0, %s141
      %s144 = sphi 0, %s143
      %s158 = sphi 0, %s144
      %s162 = sphi 0, %s162
      %s164 = sphi 0, %s162
      %s165 = sphi 0, %s164
      %s179 = sphi 0, %s165
      %s183 = sphi 0, %s183
      %s185 = sphi 0, %s183
      %s186 = sphi 0, %s185
      %s200 = sphi 0, %s186
      %s204 = sphi 0, %s204
      %s206 = sphi 0, %s204
      %s207 = sphi 0, %s206
      %s221 = sphi 0, %s207
      %s225 = sphi 0, %s225
      %s227 = sphi 0, %s225
      %s228 = sphi 0, %s227
      %s242 = sphi 0, %s228
      %s246 = sphi 0, %s246
      %s248 = sphi 0, %s246
      %s249 = sphi 0, %s248
      %s263 = sphi 0, %s249
      %s269 = sphi 0, %s271
      %s272 = sphi 0, %s269
      %s273 = sphi 0, %s272
      %s289 = sphi 0, %s273
    $region4: #{_forward_jit.1} parent=1 // loop_header_branch
      %26 = sbr.rel (%p24) target = $region8
    $region5: #{_forward_jit.1} parent=1 // loop_body
      %s28 = ssub.s32 %s23, 1
      %s29 = ssub.s32 %s23, 2
      %s30 = sadd.s32 %s23, 1
      %s31 = ssub.s32 %s23, %s30
      %p32 = scmp.eq.s32.totalorder %s31, 0
      %s34 = sadd.s32 %s33, 1
      %s35 = scalar_select %p32, %s33, %s34
      %p38 = pneg %p32
      %p39 = scmp.eq.s32.totalorder %s23, 2
      %p40 = por %p38, %p39
      %p41 = scmp.ne.s32.totalorder %s33, %s36
      %p42 = scmp.eq.s32.totalorder %s23, 0
      %p43 = por %p41, %p42
      %p44 = scmp.ne.s32.totalorder %s33, %s36
      %p45 = scmp.eq.s32.totalorder %s28, 2
      %p46 = por %p44, %p45
      %p47 = scmp.ne.s32.totalorder %s36, %s37
      %p48 = scmp.eq.s32.totalorder %s28, 0
      %p49 = por %p47, %p48
      %p50 = scmp.ne.s32.totalorder %s36, %s37
      %p51 = scmp.eq.s32.totalorder %s29, 2
      %p52 = por %p50, %p51
      %p54 = scmp.ne.s32.totalorder %s37, %s53
      %p55 = scmp.eq.s32.totalorder %s29, 0
      %p56 = por %p54, %p55
      %s58 = sadd.s32 %s57, 1
      %p61 = scmp.eq.s32.totalorder %s23, 2
      %p62 = scmp.ne.s32.totalorder %s57, %s59
      %p63 = scmp.eq.s32.totalorder %s23, 0
      %p64 = por %p62, %p63
      %p65 = scmp.ne.s32.totalorder %s57, %s59
      %p66 = scmp.eq.s32.totalorder %s28, 2
      %p67 = por %p65, %p66
      %p68 = scmp.ne.s32.totalorder %s59, %s60
      %p69 = scmp.eq.s32.totalorder %s28, 0
      %p70 = por %p68, %p69
      %p71 = scmp.ne.s32.totalorder %s59, %s60
      %p72 = scmp.eq.s32.totalorder %s29, 2
      %p73 = por %p71, %p72
      %p75 = scmp.ne.s32.totalorder %s60, %s74
      %p76 = scmp.eq.s32.totalorder %s29, 0
      %p77 = por %p75, %p76
      %s79 = sadd.s32 %s78, 1
      %p82 = scmp.eq.s32.totalorder %s23, 2
      %p83 = scmp.ne.s32.totalorder %s78, %s80
      %p84 = scmp.eq.s32.totalorder %s23, 0
      %p85 = por %p83, %p84
      %p86 = scmp.ne.s32.totalorder %s78, %s80
      %p87 = scmp.eq.s32.totalorder %s28, 2
      %p88 = por %p86, %p87
      %p89 = scmp.ne.s32.totalorder %s80, %s81
      %p90 = scmp.eq.s32.totalorder %s28, 0
      %p91 = por %p89, %p90
      %p92 = scmp.ne.s32.totalorder %s80, %s81
      %p93 = scmp.eq.s32.totalorder %s29, 2
      %p94 = por %p92, %p93
      %p96 = scmp.ne.s32.totalorder %s81, %s95
      %p97 = scmp.eq.s32.totalorder %s29, 0
      %p98 = por %p96, %p97
      %s100 = sadd.s32 %s99, 1
      %p103 = scmp.eq.s32.totalorder %s23, 2
      %p104 = scmp.ne.s32.totalorder %s99, %s101
      %p105 = scmp.eq.s32.totalorder %s23, 0
      %p106 = por %p104, %p105
      %p107 = scmp.ne.s32.totalorder %s99, %s101
      %p108 = scmp.eq.s32.totalorder %s28, 2
      %p109 = por %p107, %p108
      %p110 = scmp.ne.s32.totalorder %s101, %s102
      %p111 = scmp.eq.s32.totalorder %s28, 0
      %p112 = por %p110, %p111
      %p113 = scmp.ne.s32.totalorder %s101, %s102
      %p114 = scmp.eq.s32.totalorder %s29, 2
      %p115 = por %p113, %p114
      %p117 = scmp.ne.s32.totalorder %s102, %s116
      %p118 = scmp.eq.s32.totalorder %s29, 0
      %p119 = por %p117, %p118
      %s121 = sadd.s32 %s120, 1
      %p124 = scmp.eq.s32.totalorder %s23, 2
      %p125 = scmp.ne.s32.totalorder %s120, %s122
      %p126 = scmp.eq.s32.totalorder %s23, 0
      %p127 = por %p125, %p126
      %p128 = scmp.ne.s32.totalorder %s120, %s122
      %p129 = scmp.eq.s32.totalorder %s28, 2
      %p130 = por %p128, %p129
      %p131 = scmp.ne.s32.totalorder %s122, %s123
      %p132 = scmp.eq.s32.totalorder %s28, 0
      %p133 = por %p131, %p132
      %p134 = scmp.ne.s32.totalorder %s122, %s123
      %p135 = scmp.eq.s32.totalorder %s29, 2
      %p136 = por %p134, %p135
      %p138 = scmp.ne.s32.totalorder %s123, %s137
      %p139 = scmp.eq.s32.totalorder %s29, 0
      %p140 = por %p138, %p139
      %s142 = sadd.s32 %s141, 1
      %p145 = scmp.eq.s32.totalorder %s23, 2
      %p146 = scmp.ne.s32.totalorder %s141, %s143
      %p147 = scmp.eq.s32.totalorder %s23, 0
      %p148 = por %p146, %p147
      %p149 = scmp.ne.s32.totalorder %s141, %s143
      %p150 = scmp.eq.s32.totalorder %s28, 2
      %p151 = por %p149, %p150
      %p152 = scmp.ne.s32.totalorder %s143, %s144
      %p153 = scmp.eq.s32.totalorder %s28, 0
      %p154 = por %p152, %p153
      %p155 = scmp.ne.s32.totalorder %s143, %s144
      %p156 = scmp.eq.s32.totalorder %s29, 2
      %p157 = por %p155, %p156
      %p159 = scmp.ne.s32.totalorder %s144, %s158
      %p160 = scmp.eq.s32.totalorder %s29, 0
      %p161 = por %p159, %p160
      %s163 = sadd.s32 %s162, 1
      %p166 = scmp.eq.s32.totalorder %s23, 2
      %p167 = scmp.ne.s32.totalorder %s162, %s164
      %p168 = scmp.eq.s32.totalorder %s23, 0
      %p169 = por %p167, %p168
      %p170 = scmp.ne.s32.totalorder %s162, %s164
      %p171 = scmp.eq.s32.totalorder %s28, 2
      %p172 = por %p170, %p171
      %p173 = scmp.ne.s32.totalorder %s164, %s165
      %p174 = scmp.eq.s32.totalorder %s28, 0
      %p175 = por %p173, %p174
      %p176 = scmp.ne.s32.totalorder %s164, %s165
      %p177 = scmp.eq.s32.totalorder %s29, 2
      %p178 = por %p176, %p177
      %p180 = scmp.ne.s32.totalorder %s165, %s179
      %p181 = scmp.eq.s32.totalorder %s29, 0
      %p182 = por %p180, %p181
      %s184 = sadd.s32 %s183, 1
      %p187 = scmp.eq.s32.totalorder %s23, 2
      %p188 = scmp.ne.s32.totalorder %s183, %s185
      %p189 = scmp.eq.s32.totalorder %s23, 0
      %p190 = por %p188, %p189
      %p191 = scmp.ne.s32.totalorder %s183, %s185
      %p192 = scmp.eq.s32.totalorder %s28, 2
      %p193 = por %p191, %p192
      %p194 = scmp.ne.s32.totalorder %s185, %s186
      %p195 = scmp.eq.s32.totalorder %s28, 0
      %p196 = por %p194, %p195
      %p197 = scmp.ne.s32.totalorder %s185, %s186
      %p198 = scmp.eq.s32.totalorder %s29, 2
      %p199 = por %p197, %p198
      %p201 = scmp.ne.s32.totalorder %s186, %s200
      %p202 = scmp.eq.s32.totalorder %s29, 0
      %p203 = por %p201, %p202
      %s205 = sadd.s32 %s204, 1
      %p208 = scmp.eq.s32.totalorder %s23, 2
      %p209 = scmp.ne.s32.totalorder %s204, %s206
      %p210 = scmp.eq.s32.totalorder %s23, 0
      %p211 = por %p209, %p210
      %p212 = scmp.ne.s32.totalorder %s204, %s206
      %p213 = scmp.eq.s32.totalorder %s28, 2
      %p214 = por %p212, %p213
      %p215 = scmp.ne.s32.totalorder %s206, %s207
      %p216 = scmp.eq.s32.totalorder %s28, 0
      %p217 = por %p215, %p216
      %p218 = scmp.ne.s32.totalorder %s206, %s207
      %p219 = scmp.eq.s32.totalorder %s29, 2
      %p220 = por %p218, %p219
      %p222 = scmp.ne.s32.totalorder %s207, %s221
      %p223 = scmp.eq.s32.totalorder %s29, 0
      %p224 = por %p222, %p223
      %s226 = sadd.s32 %s225, 1
      %p229 = scmp.eq.s32.totalorder %s23, 2
      %p230 = scmp.ne.s32.totalorder %s225, %s227
      %p231 = scmp.eq.s32.totalorder %s23, 0
      %p232 = por %p230, %p231
      %p233 = scmp.ne.s32.totalorder %s225, %s227
      %p234 = scmp.eq.s32.totalorder %s28, 2
      %p235 = por %p233, %p234
      %p236 = scmp.ne.s32.totalorder %s227, %s228
      %p237 = scmp.eq.s32.totalorder %s28, 0
      %p238 = por %p236, %p237
      %p239 = scmp.ne.s32.totalorder %s227, %s228
      %p240 = scmp.eq.s32.totalorder %s29, 2
      %p241 = por %p239, %p240
      %p243 = scmp.ne.s32.totalorder %s228, %s242
      %p244 = scmp.eq.s32.totalorder %s29, 0
      %p245 = por %p243, %p244
      %s247 = sadd.s32 %s246, 1
      %p250 = scmp.eq.s32.totalorder %s23, 2
      %p251 = scmp.ne.s32.totalorder %s246, %s248
      %p252 = scmp.eq.s32.totalorder %s23, 0
      %p253 = por %p251, %p252
      %p254 = scmp.ne.s32.totalorder %s246, %s248
      %p255 = scmp.eq.s32.totalorder %s28, 2
      %p256 = por %p254, %p255
      %p257 = scmp.ne.s32.totalorder %s248, %s249
      %p258 = scmp.eq.s32.totalorder %s28, 0
      %p259 = por %p257, %p258
      %p260 = scmp.ne.s32.totalorder %s248, %s249
      %p261 = scmp.eq.s32.totalorder %s29, 2
      %p262 = por %p260, %p261
      %p264 = scmp.ne.s32.totalorder %s249, %s263
      %p265 = scmp.eq.s32.totalorder %s29, 0
      %p266 = por %p264, %p265
      %s267 = ssub.s32 %s23, %s30
      %p268 = scmp.eq.s32.totalorder %s267, 0
      %s270 = sadd.s32 %s269, 1
      %s271 = scalar_select %p268, %s269, %s270
      %p274 = pneg %p268
      %p275 = scmp.eq.s32.totalorder %s23, 2
      %p276 = por %p274, %p275
      %p277 = scmp.ne.s32.totalorder %s269, %s272
      %p278 = scmp.eq.s32.totalorder %s23, 0
      %p279 = por %p277, %p278
      %p280 = scmp.ne.s32.totalorder %s269, %s272
      %p281 = scmp.eq.s32.totalorder %s28, 2
      %p282 = por %p280, %p281
      %p283 = scmp.ne.s32.totalorder %s272, %s273
      %p284 = scmp.eq.s32.totalorder %s28, 0
      %p285 = por %p283, %p284
      %p286 = scmp.ne.s32.totalorder %s272, %s273
      %p287 = scmp.eq.s32.totalorder %s29, 2
      %p288 = por %p286, %p287
      %p290 = scmp.ne.s32.totalorder %s273, %s289
      %p291 = scmp.eq.s32.totalorder %s29, 0
      %p292 = por %p290, %p291
      %p293 = scmp.le.s32.totalorder 1, %s23
      %p294 = scmp.lt.s32.totalorder %s23, 4
      %p295 = pnand %p293, %p294
      %p296 = pneg %p295
      // Predicated region
      $region9: #{_forward_jit.1} parent=5 // pred_check
        _
      $region10: #{_forward_jit.1} parent=5 // pred_check_branch
        %298 = sbr.rel (%p295) target = $region12
      $region11: #{_forward_jit.1} parent=5 // pred_region
        %s299 = ssub.s32 %s23, 1
        // Predicated region
        $region13: #{_forward_jit.1} parent=11 // pred_check
          %p300 = pneg %p70
        $region14: #{_forward_jit.1} parent=11 // pred_check_branch
          %302 = sbr.rel (%p300) target = $region16
        $region15: #{_forward_jit.1} parent=11 // pred_region
          %s304 = ssub.s32 16, 16
          %305 = vsyncadd [#allocation5], %s304
          %s307 = sshll.u32 %s1, 4
          %s308 = int_to_ptr.vmem [resolvable:$true] %s307
          %310 = dma.vmem_to_smem %s308, 16, [#allocation4], [#allocation5]
        $region16: #{_forward_jit.1} parent=11 // pred_fallthru
          _
        // Predicated region
        $region17: #{_forward_jit.1} parent=11 // pred_check
          %p311 = pneg %p91
        $region18: #{_forward_jit.1} parent=11 // pred_check_branch
          %313 = sbr.rel (%p311) target = $region20
        $region19: #{_forward_jit.1} parent=11 // pred_region
          %s315 = ssub.s32 16, 16
          %316 = vsyncadd [#allocation7], %s315
          %s318 = sshll.u32 %s2, 4
          %s319 = int_to_ptr.vmem [resolvable:$true] %s318
          %321 = dma.vmem_to_smem %s319, 16, [#allocation6], [#allocation7]
        $region20: #{_forward_jit.1} parent=11 // pred_fallthru
          _
        // Predicated region
        $region21: #{_forward_jit.1} parent=11 // pred_check
          %p322 = pneg %p112
        $region22: #{_forward_jit.1} parent=11 // pred_check_branch
          %324 = sbr.rel (%p322) target = $region24
        $region23: #{_forward_jit.1} parent=11 // pred_region
          %s326 = ssub.s32 16, 16
          %327 = vsyncadd [#allocation7], %s326
          %s329 = sshll.u32 %s3, 4
          %s330 = int_to_ptr.vmem [resolvable:$true] %s329
          %332 = dma.vmem_to_smem %s330, 16, [#allocation8], [#allocation7]
        $region24: #{_forward_jit.1} parent=11 // pred_fallthru
          _
        // Predicated region
        $region25: #{_forward_jit.1} parent=11 // pred_check
          %p333 = pneg %p133
        $region26: #{_forward_jit.1} parent=11 // pred_check_branch
          %335 = sbr.rel (%p333) target = $region28
        $region27: #{_forward_jit.1} parent=11 // pred_region
          %s337 = ssub.s32 16, 16
          %338 = vsyncadd [#allocation10], %s337
          %s340 = sshll.u32 %s4, 4
          %s341 = int_to_ptr.vmem [resolvable:$true] %s340
          %343 = dma.vmem_to_smem %s341, 16, [#allocation9], [#allocation10]
        $region28: #{_forward_jit.1} parent=11 // pred_fallthru
          _
        // Predicated region
        $region29: #{_forward_jit.1} parent=11 // pred_check
          %p344 = pneg %p154
        $region30: #{_forward_jit.1} parent=11 // pred_check_branch
          %346 = sbr.rel (%p344) target = $region32
        $region31: #{_forward_jit.1} parent=11 // pred_region
          %s348 = ssub.s32 16, 16
          %349 = vsyncadd [#allocation10], %s348
          %s351 = sshll.u32 %s5, 4
          %s352 = int_to_ptr.vmem [resolvable:$true] %s351
          %354 = dma.vmem_to_smem %s352, 16, [#allocation11], [#allocation10]
        $region32: #{_forward_jit.1} parent=11 // pred_fallthru
          _
        // Predicated region
        $region33: #{_forward_jit.1} parent=11 // pred_check
          %p355 = pneg %p175
        $region34: #{_forward_jit.1} parent=11 // pred_check_branch
          %357 = sbr.rel (%p355) target = $region36
        $region35: #{_forward_jit.1} parent=11 // pred_region
          %s359 = ssub.s32 16, 16
          %360 = vsyncadd [#allocation13], %s359
          %s362 = sshll.u32 %s6, 4
          %s363 = int_to_ptr.vmem [resolvable:$true] %s362
          %365 = dma.vmem_to_smem %s363, 16, [#allocation12], [#allocation13]
        $region36: #{_forward_jit.1} parent=11 // pred_fallthru
          _
        // Predicated region
        $region37: #{_forward_jit.1} parent=11 // pred_check
          %p366 = pneg %p196
        $region38: #{_forward_jit.1} parent=11 // pred_check_branch
          %368 = sbr.rel (%p366) target = $region40
        $region39: #{_forward_jit.1} parent=11 // pred_region
          %s370 = ssub.s32 16, 16
          %371 = vsyncadd [#allocation13], %s370
          %s373 = sshll.u32 %s7, 4
          %s374 = int_to_ptr.vmem [resolvable:$true] %s373
          %376 = dma.vmem_to_smem %s374, 16, [#allocation14], [#allocation13]
        $region40: #{_forward_jit.1} parent=11 // pred_fallthru
          _
        // Predicated region
        $region41: #{_forward_jit.1} parent=11 // pred_check
          %p377 = pneg %p217
        $region42: #{_forward_jit.1} parent=11 // pred_check_branch
          %379 = sbr.rel (%p377) target = $region44
        $region43: #{_forward_jit.1} parent=11 // pred_region
          %s381 = ssub.s32 16, 16
          %382 = vsyncadd [#allocation16], %s381
          %s384 = sshll.u32 %s8, 4
          %s385 = int_to_ptr.vmem [resolvable:$true] %s384
          %387 = dma.vmem_to_smem %s385, 16, [#allocation15], [#allocation16]
        $region44: #{_forward_jit.1} parent=11 // pred_fallthru
          _
        // Predicated region
        $region45: #{_forward_jit.1} parent=11 // pred_check
          %p388 = pneg %p238
        $region46: #{_forward_jit.1} parent=11 // pred_check_branch
          %390 = sbr.rel (%p388) target = $region48
        $region47: #{_forward_jit.1} parent=11 // pred_region
          %s392 = ssub.s32 16, 16
          %393 = vsyncadd [#allocation16], %s392
          %s395 = sshll.u32 %s9, 4
          %s396 = int_to_ptr.vmem [resolvable:$true] %s395
          %398 = dma.vmem_to_smem %s396, 16, [#allocation17], [#allocation16]
        $region48: #{_forward_jit.1} parent=11 // pred_fallthru
          _
        // Predicated region
        $region49: #{_forward_jit.1} parent=11 // pred_check
          %p399 = pneg %p259
        $region50: #{_forward_jit.1} parent=11 // pred_check_branch
          %401 = sbr.rel (%p399) target = $region52
        $region51: #{_forward_jit.1} parent=11 // pred_region
          _
        $region52: #{_forward_jit.1} parent=11 // pred_fallthru
          _
      $region12: #{_forward_jit.1} parent=5 // pred_fallthru
        _
      %p402 = scmp.lt.s32.totalorder %s23, 3
      // Predicated region
      $region53: #{_forward_jit.1} parent=5 // pred_check
        %p403 = pneg %p402
      $region54: #{_forward_jit.1} parent=5 // pred_check_branch
        %405 = sbr.rel (%p403) target = $region56
      $region55: #{_forward_jit.1} parent=5 // pred_region
        // Predicated region
        $region57: #{_forward_jit.1} parent=55 // pred_check
          %p406 = pneg %p43
        $region58: #{_forward_jit.1} parent=55 // pred_check_branch
          %408 = sbr.rel (%p406) target = $region60
        $region59: #{_forward_jit.1} parent=55 // pred_region
          %s409 = sand.u32 %s33, 1
          %s410 = sand.u32 %s33, 1
          %s411 = smul.addr %s410, 128
          %s412 = scalar_lea.vmem [#allocation3], %s411
          %s413 = smul.u32 4, %s23
          %s414 = smul.addr %s413, 8
          %s415 = scalar_lea.vmem %s0, %s414
          // Predicated region
          $region61: #{_forward_jit.1} parent=59 // pred_check
            _
          $region62: #{_forward_jit.1} parent=59 // pred_check_branch
            %417 = sbr.rel (0) target = $region64
          $region63: #{_forward_jit.1} parent=59 // pred_region
            // Predicated region
            $region65: #{_forward_jit.1} parent=63 // pred_check
              _
            $region66: #{_forward_jit.1} parent=63 // pred_check_branch
              %419 = sbr.rel (0) target = $region68
            $region67: #{_forward_jit.1} parent=63 // pred_region
              // Predicated region
              $region80: #{_forward_jit.1} parent=67 // pred_check
                _
              $region81: #{_forward_jit.1} parent=67 // pred_check_branch
                %464 = sbr.rel (0) target = $region83
              $region82: #{_forward_jit.1} parent=67 // pred_region
                loop: start=0, step=1, limit=1
                $region84: #{_forward_jit.1} parent=82 // loop_pre_header
                  _
                $region85: #{_forward_jit.1} parent=82 // loop_header
                  %s466 = sphi 0, %s470
                  %p467 = scmp.ge.s32.totalorder %s466, 1
                  %s471 = sphi %s415, %s415
                  %s472 = sphi %s412, %s412
                $region86: #{_forward_jit.1} parent=82 // loop_header_branch
                  %469 = sbr.rel (%p467) target = $region90
                $region87: #{_forward_jit.1} parent=82 // loop_body
                  %v473 = vld [vmem:[%s471] sm:$0xff]
                  %474 = vst [vmem:[%s472] sm:$0xff] %v473
                  %v475 = vld [vmem:[%s471 + $0x8] sm:$0xff]
                  %476 = vst [vmem:[%s472 + $0x8] sm:$0xff] %v475
                  %v477 = vld [vmem:[%s471 + $0x10] sm:$0xff]
                  %478 = vst [vmem:[%s472 + $0x10] sm:$0xff] %v477
                  %v479 = vld [vmem:[%s471 + $0x18] sm:$0xff]
                  %480 = vst [vmem:[%s472 + $0x18] sm:$0xff] %v479
                  %v481 = vld [vmem:[%s471 + $0x60] sm:$0xff]
                  %482 = vst [vmem:[%s472 + $0x20] sm:$0xff] %v481
                  %v483 = vld [vmem:[%s471 + $0x68] sm:$0xff]
                  %484 = vst [vmem:[%s472 + $0x28] sm:$0xff] %v483
                  %v485 = vld [vmem:[%s471 + $0x70] sm:$0xff]
                  %486 = vst [vmem:[%s472 + $0x30] sm:$0xff] %v485
                  %v487 = vld [vmem:[%s471 + $0x78] sm:$0xff]
                  %488 = vst [vmem:[%s472 + $0x38] sm:$0xff] %v487
                  %v489 = vld [vmem:[%s471 + $0xc0] sm:$0xff]
                  %490 = vst [vmem:[%s472 + $0x40] sm:$0xff] %v489
                  %v491 = vld [vmem:[%s471 + $0xc8] sm:$0xff]
                  %492 = vst [vmem:[%s472 + $0x48] sm:$0xff] %v491
                  %v493 = vld [vmem:[%s471 + $0xd0] sm:$0xff]
                  %494 = vst [vmem:[%s472 + $0x50] sm:$0xff] %v493
                  %v495 = vld [vmem:[%s471 + $0xd8] sm:$0xff]
                  %496 = vst [vmem:[%s472 + $0x58] sm:$0xff] %v495
                  %v497 = vld [vmem:[%s471 + $0x120] sm:$0xff]
                  %498 = vst [vmem:[%s472 + $0x60] sm:$0xff] %v497
                  %v499 = vld [vmem:[%s471 + $0x128] sm:$0xff]
                  %500 = vst [vmem:[%s472 + $0x68] sm:$0xff] %v499
                  %v501 = vld [vmem:[%s471 + $0x130] sm:$0xff]
                  %502 = vst [vmem:[%s472 + $0x70] sm:$0xff] %v501
                  %v503 = vld [vmem:[%s471 + $0x138] sm:$0xff]
                  %504 = vst [vmem:[%s472 + $0x78] sm:$0xff] %v503
                $region88: #{_forward_jit.1} parent=82 // loop_footer
                  %s470 = sadd.s32 1, %s466
                $region89: #{_forward_jit.1} parent=82 // loop_footer_branch
                  %465 = sbr.rel target = $region85
                $region90: #{_forward_jit.1} parent=82 // loop_exit
                  _
              $region83: #{_forward_jit.1} parent=67 // pred_fallthru
                _
              // Predicated region
              $region91: #{_forward_jit.1} parent=67 // pred_check
                _
              $region92: #{_forward_jit.1} parent=67 // pred_check_branch
                %506 = sbr.rel target = $region94
              $region93: #{_forward_jit.1} parent=67 // pred_region
                _
              $region94: #{_forward_jit.1} parent=67 // pred_fallthru
                _
            $region68: #{_forward_jit.1} parent=63 // pred_fallthru
              _
            // Predicated region
            $region69: #{_forward_jit.1} parent=63 // pred_check
              _
            $region70: #{_forward_jit.1} parent=63 // pred_check_branch
              %421 = sbr.rel target = $region72
            $region71: #{_forward_jit.1} parent=63 // pred_region
              loop: start=0, step=1, limit=1
              $region73: #{_forward_jit.1} parent=71 // loop_pre_header
                _
              $region74: #{_forward_jit.1} parent=71 // loop_header
                %s424 = sphi 0, %s428
                %p425 = scmp.ge.s32.totalorder %s424, 1
                %s429 = sphi %s415, %s415
                %s430 = sphi %s412, %s412
              $region75: #{_forward_jit.1} parent=71 // loop_header_branch
                %427 = sbr.rel (%p425) target = $region79
              $region76: #{_forward_jit.1} parent=71 // loop_body
                %v431 = vld [vmem:[%s429] sm:$0xff]
                %432 = vst [vmem:[%s430] sm:$0xff] %v431
                %v433 = vld [vmem:[%s429 + $0x8] sm:$0xff]
                %434 = vst [vmem:[%s430 + $0x8] sm:$0xff] %v433
                %v435 = vld [vmem:[%s429 + $0x10] sm:$0xff]
                %436 = vst [vmem:[%s430 + $0x10] sm:$0xff] %v435
                %v437 = vld [vmem:[%s429 + $0x18] sm:$0xff]
                %438 = vst [vmem:[%s430 + $0x18] sm:$0xff] %v437
                %v439 = vld [vmem:[%s429 + $0x60] sm:$0xff]
                %440 = vst [vmem:[%s430 + $0x20] sm:$0xff] %v439
                %v441 = vld [vmem:[%s429 + $0x68] sm:$0xff]
                %442 = vst [vmem:[%s430 + $0x28] sm:$0xff] %v441
                %v443 = vld [vmem:[%s429 + $0x70] sm:$0xff]
                %444 = vst [vmem:[%s430 + $0x30] sm:$0xff] %v443
                %v445 = vld [vmem:[%s429 + $0x78] sm:$0xff]
                %446 = vst [vmem:[%s430 + $0x38] sm:$0xff] %v445
                %v447 = vld [vmem:[%s429 + $0xc0] sm:$0xff]
                %448 = vst [vmem:[%s430 + $0x40] sm:$0xff] %v447
                %v449 = vld [vmem:[%s429 + $0xc8] sm:$0xff]
                %450 = vst [vmem:[%s430 + $0x48] sm:$0xff] %v449
                %v451 = vld [vmem:[%s429 + $0xd0] sm:$0xff]
                %452 = vst [vmem:[%s430 + $0x50] sm:$0xff] %v451
                %v453 = vld [vmem:[%s429 + $0xd8] sm:$0xff]
                %454 = vst [vmem:[%s430 + $0x58] sm:$0xff] %v453
                %v455 = vld [vmem:[%s429 + $0x120] sm:$0xff]
                %456 = vst [vmem:[%s430 + $0x60] sm:$0xff] %v455
                %v457 = vld [vmem:[%s429 + $0x128] sm:$0xff]
                %458 = vst [vmem:[%s430 + $0x68] sm:$0xff] %v457
                %v459 = vld [vmem:[%s429 + $0x130] sm:$0xff]
                %460 = vst [vmem:[%s430 + $0x70] sm:$0xff] %v459
                %v461 = vld [vmem:[%s429 + $0x138] sm:$0xff]
                %462 = vst [vmem:[%s430 + $0x78] sm:$0xff] %v461
              $region77: #{_forward_jit.1} parent=71 // loop_footer
                %s428 = sadd.s32 1, %s424
              $region78: #{_forward_jit.1} parent=71 // loop_footer_branch
                %423 = sbr.rel target = $region74
              $region79: #{_forward_jit.1} parent=71 // loop_exit
                _
            $region72: #{_forward_jit.1} parent=63 // pred_fallthru
              _
          $region64: #{_forward_jit.1} parent=59 // pred_fallthru
            _
          %507 = vnop
        $region60: #{_forward_jit.1} parent=55 // pred_fallthru
          _
      $region56: #{_forward_jit.1} parent=5 // pred_fallthru
        _
      %p508 = scmp.le.s32.totalorder 1, %s23
      %p509 = scmp.lt.s32.totalorder %s23, 4
      %p510 = pnand %p508, %p509
      %p511 = pneg %p510
      // Predicated region
      $region95: #{_forward_jit.1} parent=5 // pred_check
        _
      $region96: #{_forward_jit.1} parent=5 // pred_check_branch
        %513 = sbr.rel (%p510) target = $region98
      $region97: #{_forward_jit.1} parent=5 // pred_region
        %s514 = ssub.s32 %s23, 1
        %s515 = sand.u32 %s36, 1
        %s516 = sand.u32 %s36, 1
        %s517 = smul.addr %s516, 128
        %s518 = scalar_lea.vmem [#allocation3], %s517
        // Predicated region
        $region99: #{_forward_jit.1} parent=97 // pred_check
          %p519 = pneg %p49
        $region100: #{_forward_jit.1} parent=97 // pred_check_branch
          %521 = sbr.rel (%p519) target = $region102
        $region101: #{_forward_jit.1} parent=97 // pred_region
          _
        $region102: #{_forward_jit.1} parent=97 // pred_fallthru
          _
        // Predicated region
        $region103: #{_forward_jit.1} parent=97 // pred_check
          %p522 = pneg %p70
        $region104: #{_forward_jit.1} parent=97 // pred_check_branch
          %524 = sbr.rel (%p522) target = $region106
        $region105: #{_forward_jit.1} parent=97 // pred_region
          %525 = dma.done [#allocation5], 16
        $region106: #{_forward_jit.1} parent=97 // pred_fallthru
          _
        // Predicated region
        $region107: #{_forward_jit.1} parent=97 // pred_check
          %p526 = pneg %p91
        $region108: #{_forward_jit.1} parent=97 // pred_check_branch
          %528 = sbr.rel (%p526) target = $region110
        $region109: #{_forward_jit.1} parent=97 // pred_region
          %529 = dma.done [#allocation7], 16
        $region110: #{_forward_jit.1} parent=97 // pred_fallthru
          _
        // Predicated region
        $region111: #{_forward_jit.1} parent=97 // pred_check
          %p530 = pneg %p112
        $region112: #{_forward_jit.1} parent=97 // pred_check_branch
          %532 = sbr.rel (%p530) target = $region114
        $region113: #{_forward_jit.1} parent=97 // pred_region
          %533 = dma.done [#allocation7], 16
        $region114: #{_forward_jit.1} parent=97 // pred_fallthru
          _
        // Predicated region
        $region115: #{_forward_jit.1} parent=97 // pred_check
          %p534 = pneg %p133
        $region116: #{_forward_jit.1} parent=97 // pred_check_branch
          %536 = sbr.rel (%p534) target = $region118
        $region117: #{_forward_jit.1} parent=97 // pred_region
          %537 = dma.done [#allocation10], 16
        $region118: #{_forward_jit.1} parent=97 // pred_fallthru
          _
        // Predicated region
        $region119: #{_forward_jit.1} parent=97 // pred_check
          %p538 = pneg %p154
        $region120: #{_forward_jit.1} parent=97 // pred_check_branch
          %540 = sbr.rel (%p538) target = $region122
        $region121: #{_forward_jit.1} parent=97 // pred_region
          %541 = dma.done [#allocation10], 16
        $region122: #{_forward_jit.1} parent=97 // pred_fallthru
          _
        // Predicated region
        $region123: #{_forward_jit.1} parent=97 // pred_check
          %p542 = pneg %p175
        $region124: #{_forward_jit.1} parent=97 // pred_check_branch
          %544 = sbr.rel (%p542) target = $region126
        $region125: #{_forward_jit.1} parent=97 // pred_region
          %545 = dma.done [#allocation13], 16
        $region126: #{_forward_jit.1} parent=97 // pred_fallthru
          _
        // Predicated region
        $region127: #{_forward_jit.1} parent=97 // pred_check
          %p546 = pneg %p196
        $region128: #{_forward_jit.1} parent=97 // pred_check_branch
          %548 = sbr.rel (%p546) target = $region130
        $region129: #{_forward_jit.1} parent=97 // pred_region
          %549 = dma.done [#allocation13], 16
        $region130: #{_forward_jit.1} parent=97 // pred_fallthru
          _
        // Predicated region
        $region131: #{_forward_jit.1} parent=97 // pred_check
          %p550 = pneg %p217
        $region132: #{_forward_jit.1} parent=97 // pred_check_branch
          %552 = sbr.rel (%p550) target = $region134
        $region133: #{_forward_jit.1} parent=97 // pred_region
          %553 = dma.done [#allocation16], 16
        $region134: #{_forward_jit.1} parent=97 // pred_fallthru
          _
        // Predicated region
        $region135: #{_forward_jit.1} parent=97 // pred_check
          %p554 = pneg %p238
        $region136: #{_forward_jit.1} parent=97 // pred_check_branch
          %556 = sbr.rel (%p554) target = $region138
        $region137: #{_forward_jit.1} parent=97 // pred_region
          %557 = dma.done [#allocation16], 16
        $region138: #{_forward_jit.1} parent=97 // pred_fallthru
          _
        %558 = sfence
        %s559 = sand.u32 %s36, 1
        %s560 = sand.u32 %s36, 1
        %s561 = smul.addr %s560, 128
        %s562 = scalar_lea.vmem [#allocation3], %s561
        %p563 = pneg %p49
        %p564 = pneg %p46
        %p565 = pneg %p70
        %p566 = pneg %p67
        %p567 = pneg %p91
        %p568 = pneg %p88
        %p569 = pneg %p112
        %p570 = pneg %p109
        %p571 = pneg %p133
        %p572 = pneg %p130
        %p573 = pneg %p154
        %p574 = pneg %p151
        %p575 = pneg %p175
        %p576 = pneg %p172
        %p577 = pneg %p196
        %p578 = pneg %p193
        %p579 = pneg %p217
        %p580 = pneg %p214
        %p581 = pneg %p238
        %p582 = pneg %p235
        %p583 = pneg %p259
        %p584 = pneg %p256
        %p585 = pneg %p285
        %p586 = pneg %p282
        %s587 = smul.u32 4, %s28
        %p588 = scmp.lt.s32.totalorder %s587, 11
        %s589 = scalar_select %p588, %s587, 11
        %s590 = smul.addr %s589, 8
        %s591 = scalar_lea.vmem %s11, %s590
        %s592 = smul.u32 4, %s28
        %s593 = smul.u32 4, %s28
        %p594 = scmp.lt.s32.totalorder %s593, 11
        %s595 = scalar_select %p594, %s593, 11
        %s596 = smul.addr %s595, 8
        %s597 = scalar_lea.vmem %s11, %s596
        %s598 = smul.u32 4, %s28
        %s599 = sld [smem:[#allocation4]]
        %s600 = sld [smem:[#allocation4 + $0x1]]
        %s601 = sld [smem:[#allocation4 + $0x2]]
        %s602 = sld [smem:[#allocation4 + $0x3]]
        %s603 = sld [smem:[#allocation4 + $0x4]]
        %s604 = sld [smem:[#allocation4 + $0x5]]
        %s605 = sld [smem:[#allocation4 + $0x6]]
        %s606 = sld [smem:[#allocation4 + $0x7]]
        %s607 = sld [smem:[#allocation4 + $0x8]]
        %s608 = sld [smem:[#allocation4 + $0x9]]
        %s609 = sld [smem:[#allocation4 + $0xa]]
        %s610 = sld [smem:[#allocation4 + $0xb]]
        %s611 = sld [smem:[#allocation4 + $0xc]]
        %s612 = sld [smem:[#allocation4 + $0xd]]
        %s613 = sld [smem:[#allocation4 + $0xe]]
        %s614 = sld [smem:[#allocation4 + $0xf]]
        %s615 = sld [smem:[#allocation4 + $0x10]]
        %s616 = sld [smem:[#allocation4 + $0x11]]
        %s617 = sld [smem:[#allocation4 + $0x12]]
        %s618 = sld [smem:[#allocation4 + $0x13]]
        %s619 = sld [smem:[#allocation4 + $0x14]]
        %s620 = sld [smem:[#allocation4 + $0x15]]
        %s621 = sld [smem:[#allocation4 + $0x16]]
        %s622 = sld [smem:[#allocation4 + $0x17]]
        %s623 = sld [smem:[#allocation4 + $0x18]]
        %s624 = sld [smem:[#allocation4 + $0x19]]
        %s625 = sld [smem:[#allocation4 + $0x1a]]
        %s626 = sld [smem:[#allocation4 + $0x1b]]
        %s627 = sld [smem:[#allocation4 + $0x1c]]
        %s628 = sld [smem:[#allocation4 + $0x1d]]
        %s629 = sld [smem:[#allocation4 + $0x1e]]
        %s630 = sld [smem:[#allocation4 + $0x1f]]
        %s631 = sld [smem:[#allocation4 + $0x20]]
        %s632 = sld [smem:[#allocation4 + $0x21]]
        %s633 = sld [smem:[#allocation4 + $0x22]]
        %s634 = sld [smem:[#allocation4 + $0x23]]
        %s635 = sld [smem:[#allocation4 + $0x24]]
        %s636 = sld [smem:[#allocation4 + $0x25]]
        %s637 = sld [smem:[#allocation4 + $0x26]]
        %s638 = sld [smem:[#allocation4 + $0x27]]
        %s639 = sld [smem:[#allocation6]]
        %s640 = sld [smem:[#allocation6 + $0x1]]
        %s641 = sld [smem:[#allocation6 + $0x2]]
        %s642 = sld [smem:[#allocation6 + $0x3]]
        %s643 = sld [smem:[#allocation6 + $0x4]]
        %s644 = sld [smem:[#allocation6 + $0x5]]
        %s645 = sld [smem:[#allocation6 + $0x6]]
        %s646 = sld [smem:[#allocation6 + $0x7]]
        %s647 = sld [smem:[#allocation6 + $0x8]]
        %s648 = sld [smem:[#allocation6 + $0x9]]
        %s649 = sld [smem:[#allocation8]]
        %s650 = sld [smem:[#allocation8 + $0x1]]
        %s651 = sld [smem:[#allocation8 + $0x2]]
        %s652 = sld [smem:[#allocation8 + $0x3]]
        %s653 = sld [smem:[#allocation8 + $0x4]]
        %s654 = sld [smem:[#allocation8 + $0x5]]
        %s655 = sld [smem:[#allocation8 + $0x6]]
        %s656 = sld [smem:[#allocation8 + $0x7]]
        %s657 = sld [smem:[#allocation8 + $0x8]]
        %s658 = sld [smem:[#allocation8 + $0x9]]
        %s659 = sld [smem:[#allocation8 + $0xa]]
        %s660 = sld [smem:[#allocation8 + $0xb]]
        %s661 = sld [smem:[#allocation8 + $0xc]]
        %s662 = sld [smem:[#allocation8 + $0xd]]
        %s663 = sld [smem:[#allocation8 + $0xe]]
        %s664 = sld [smem:[#allocation8 + $0xf]]
        %s665 = sld [smem:[#allocation8 + $0x10]]
        %s666 = sld [smem:[#allocation8 + $0x11]]
        %s667 = sld [smem:[#allocation8 + $0x12]]
        %s668 = sld [smem:[#allocation8 + $0x13]]
        %s669 = sld [smem:[#allocation8 + $0x14]]
        %s670 = sld [smem:[#allocation8 + $0x15]]
        %s671 = sld [smem:[#allocation8 + $0x16]]
        %s672 = sld [smem:[#allocation8 + $0x17]]
        %s673 = sld [smem:[#allocation8 + $0x18]]
        %s674 = sld [smem:[#allocation8 + $0x19]]
        %s675 = sld [smem:[#allocation8 + $0x1a]]
        %s676 = sld [smem:[#allocation8 + $0x1b]]
        %s677 = sld [smem:[#allocation8 + $0x1c]]
        %s678 = sld [smem:[#allocation8 + $0x1d]]
        %s679 = sld [smem:[#allocation8 + $0x1e]]
        %s680 = sld [smem:[#allocation8 + $0x1f]]
        %s681 = sld [smem:[#allocation8 + $0x20]]
        %s682 = sld [smem:[#allocation8 + $0x21]]
        %s683 = sld [smem:[#allocation8 + $0x22]]
        %s684 = sld [smem:[#allocation8 + $0x23]]
        %s685 = sld [smem:[#allocation8 + $0x24]]
        %s686 = sld [smem:[#allocation8 + $0x25]]
        %s687 = sld [smem:[#allocation8 + $0x26]]
        %s688 = sld [smem:[#allocation8 + $0x27]]
        %s689 = sld [smem:[#allocation8 + $0x28]]
        %s690 = sld [smem:[#allocation8 + $0x29]]
        %s691 = sld [smem:[#allocation8 + $0x2a]]
        %s692 = sld [smem:[#allocation8 + $0x2b]]
        %s693 = sld [smem:[#allocation8 + $0x2c]]
        %s694 = sld [smem:[#allocation8 + $0x2d]]
        %s695 = sld [smem:[#allocation8 + $0x2e]]
        %s696 = sld [smem:[#allocation8 + $0x2f]]
        %s697 = sld [smem:[#allocation8 + $0x30]]
        %s698 = sld [smem:[#allocation8 + $0x31]]
        %s699 = sld [smem:[#allocation8 + $0x32]]
        %s700 = sld [smem:[#allocation8 + $0x33]]
        %s701 = sld [smem:[#allocation8 + $0x34]]
        %s702 = sld [smem:[#allocation8 + $0x35]]
        %s703 = sld [smem:[#allocation8 + $0x36]]
        %s704 = sld [smem:[#allocation8 + $0x37]]
        %s705 = sld [smem:[#allocation8 + $0x38]]
        %s706 = sld [smem:[#allocation8 + $0x39]]
        %s707 = sld [smem:[#allocation8 + $0x3a]]
        %s708 = sld [smem:[#allocation8 + $0x3b]]
        %s709 = sld [smem:[#allocation8 + $0x3c]]
        %s710 = sld [smem:[#allocation8 + $0x3d]]
        %s711 = sld [smem:[#allocation8 + $0x3e]]
        %s712 = sld [smem:[#allocation8 + $0x3f]]
        %s713 = sld [smem:[#allocation8 + $0x40]]
        %s714 = sld [smem:[#allocation8 + $0x41]]
        %s715 = sld [smem:[#allocation8 + $0x42]]
        %s716 = sld [smem:[#allocation8 + $0x43]]
        %s717 = sld [smem:[#allocation8 + $0x44]]
        %s718 = sld [smem:[#allocation8 + $0x45]]
        %s719 = sld [smem:[#allocation8 + $0x46]]
        %s720 = sld [smem:[#allocation8 + $0x47]]
        %s721 = sld [smem:[#allocation8 + $0x48]]
        %s722 = sld [smem:[#allocation8 + $0x49]]
        %s723 = sld [smem:[#allocation8 + $0x4a]]
        %s724 = sld [smem:[#allocation8 + $0x4b]]
        %s725 = sld [smem:[#allocation8 + $0x4c]]
        %s726 = sld [smem:[#allocation8 + $0x4d]]
        %s727 = sld [smem:[#allocation8 + $0x4e]]
        %s728 = sld [smem:[#allocation8 + $0x4f]]
        %s729 = sld [smem:[#allocation8 + $0x50]]
        %s730 = sld [smem:[#allocation8 + $0x51]]
        %s731 = sld [smem:[#allocation8 + $0x52]]
        %s732 = sld [smem:[#allocation8 + $0x53]]
        %s733 = sld [smem:[#allocation8 + $0x54]]
        %s734 = sld [smem:[#allocation8 + $0x55]]
        %s735 = sld [smem:[#allocation8 + $0x56]]
        %s736 = sld [smem:[#allocation8 + $0x57]]
        %s737 = sld [smem:[#allocation8 + $0x58]]
        %s738 = sld [smem:[#allocation8 + $0x59]]
        %s739 = sld [smem:[#allocation8 + $0x5a]]
        %s740 = sld [smem:[#allocation8 + $0x5b]]
        %s741 = sld [smem:[#allocation8 + $0x5c]]
        %s742 = sld [smem:[#allocation8 + $0x5d]]
        %s743 = sld [smem:[#allocation8 + $0x5e]]
        %s744 = sld [smem:[#allocation8 + $0x5f]]
        %s745 = sld [smem:[#allocation8 + $0x60]]
        %s746 = sld [smem:[#allocation8 + $0x61]]
        %s747 = sld [smem:[#allocation8 + $0x62]]
        %s748 = sld [smem:[#allocation8 + $0x63]]
        %s749 = sld [smem:[#allocation9]]
        %s750 = sld [smem:[#allocation9 + $0x1]]
        %s751 = sld [smem:[#allocation9 + $0x2]]
        %s752 = sld [smem:[#allocation9 + $0x3]]
        %s753 = sld [smem:[#allocation9 + $0x4]]
        %s754 = sld [smem:[#allocation9 + $0x5]]
        %s755 = sld [smem:[#allocation9 + $0x6]]
        %s756 = sld [smem:[#allocation9 + $0x7]]
        %s757 = sld [smem:[#allocation9 + $0x8]]
        %s758 = sld [smem:[#allocation9 + $0x9]]
        %s759 = sld [smem:[#allocation11]]
        %s760 = sld [smem:[#allocation11 + $0x1]]
        %s761 = sld [smem:[#allocation11 + $0x2]]
        %s762 = sld [smem:[#allocation11 + $0x3]]
        %s763 = sld [smem:[#allocation11 + $0x4]]
        %s764 = sld [smem:[#allocation11 + $0x5]]
        %s765 = sld [smem:[#allocation11 + $0x6]]
        %s766 = sld [smem:[#allocation11 + $0x7]]
        %s767 = sld [smem:[#allocation11 + $0x8]]
        %s768 = sld [smem:[#allocation11 + $0x9]]
        %s769 = sld [smem:[#allocation11 + $0xa]]
        %s770 = sld [smem:[#allocation11 + $0xb]]
        %s771 = sld [smem:[#allocation11 + $0xc]]
        %s772 = sld [smem:[#allocation11 + $0xd]]
        %s773 = sld [smem:[#allocation11 + $0xe]]
        %s774 = sld [smem:[#allocation11 + $0xf]]
        %s775 = sld [smem:[#allocation11 + $0x10]]
        %s776 = sld [smem:[#allocation11 + $0x11]]
        %s777 = sld [smem:[#allocation11 + $0x12]]
        %s778 = sld [smem:[#allocation11 + $0x13]]
        %s779 = sld [smem:[#allocation11 + $0x14]]
        %s780 = sld [smem:[#allocation11 + $0x15]]
        %s781 = sld [smem:[#allocation11 + $0x16]]
        %s782 = sld [smem:[#allocation11 + $0x17]]
        %s783 = sld [smem:[#allocation11 + $0x18]]
        %s784 = sld [smem:[#allocation11 + $0x19]]
        %s785 = sld [smem:[#allocation11 + $0x1a]]
        %s786 = sld [smem:[#allocation11 + $0x1b]]
        %s787 = sld [smem:[#allocation11 + $0x1c]]
        %s788 = sld [smem:[#allocation11 + $0x1d]]
        %s789 = sld [smem:[#allocation11 + $0x1e]]
        %s790 = sld [smem:[#allocation11 + $0x1f]]
        %s791 = sld [smem:[#allocation11 + $0x20]]
        %s792 = sld [smem:[#allocation11 + $0x21]]
        %s793 = sld [smem:[#allocation11 + $0x22]]
        %s794 = sld [smem:[#allocation11 + $0x23]]
        %s795 = sld [smem:[#allocation11 + $0x24]]
        %s796 = sld [smem:[#allocation11 + $0x25]]
        %s797 = sld [smem:[#allocation11 + $0x26]]
        %s798 = sld [smem:[#allocation11 + $0x27]]
        %s799 = sld [smem:[#allocation11 + $0x28]]
        %s800 = sld [smem:[#allocation11 + $0x29]]
        %s801 = sld [smem:[#allocation11 + $0x2a]]
        %s802 = sld [smem:[#allocation11 + $0x2b]]
        %s803 = sld [smem:[#allocation11 + $0x2c]]
        %s804 = sld [smem:[#allocation11 + $0x2d]]
        %s805 = sld [smem:[#allocation11 + $0x2e]]
        %s806 = sld [smem:[#allocation11 + $0x2f]]
        %s807 = sld [smem:[#allocation11 + $0x30]]
        %s808 = sld [smem:[#allocation11 + $0x31]]
        %s809 = sld [smem:[#allocation11 + $0x32]]
        %s810 = sld [smem:[#allocation11 + $0x33]]
        %s811 = sld [smem:[#allocation11 + $0x34]]
        %s812 = sld [smem:[#allocation11 + $0x35]]
        %s813 = sld [smem:[#allocation11 + $0x36]]
        %s814 = sld [smem:[#allocation11 + $0x37]]
        %s815 = sld [smem:[#allocation11 + $0x38]]
        %s816 = sld [smem:[#allocation11 + $0x39]]
        %s817 = sld [smem:[#allocation11 + $0x3a]]
        %s818 = sld [smem:[#allocation11 + $0x3b]]
        %s819 = sld [smem:[#allocation11 + $0x3c]]
        %s820 = sld [smem:[#allocation11 + $0x3d]]
        %s821 = sld [smem:[#allocation11 + $0x3e]]
        %s822 = sld [smem:[#allocation11 + $0x3f]]
        %s823 = sld [smem:[#allocation11 + $0x40]]
        %s824 = sld [smem:[#allocation11 + $0x41]]
        %s825 = sld [smem:[#allocation11 + $0x42]]
        %s826 = sld [smem:[#allocation11 + $0x43]]
        %s827 = sld [smem:[#allocation11 + $0x44]]
        %s828 = sld [smem:[#allocation11 + $0x45]]
        %s829 = sld [smem:[#allocation11 + $0x46]]
        %s830 = sld [smem:[#allocation11 + $0x47]]
        %s831 = sld [smem:[#allocation11 + $0x48]]
        %s832 = sld [smem:[#allocation11 + $0x49]]
        %s833 = sld [smem:[#allocation11 + $0x4a]]
        %s834 = sld [smem:[#allocation11 + $0x4b]]
        %s835 = sld [smem:[#allocation11 + $0x4c]]
        %s836 = sld [smem:[#allocation11 + $0x4d]]
        %s837 = sld [smem:[#allocation11 + $0x4e]]
        %s838 = sld [smem:[#allocation11 + $0x4f]]
        %s839 = sld [smem:[#allocation11 + $0x50]]
        %s840 = sld [smem:[#allocation11 + $0x51]]
        %s841 = sld [smem:[#allocation11 + $0x52]]
        %s842 = sld [smem:[#allocation11 + $0x53]]
        %s843 = sld [smem:[#allocation11 + $0x54]]
        %s844 = sld [smem:[#allocation11 + $0x55]]
        %s845 = sld [smem:[#allocation11 + $0x56]]
        %s846 = sld [smem:[#allocation11 + $0x57]]
        %s847 = sld [smem:[#allocation11 + $0x58]]
        %s848 = sld [smem:[#allocation11 + $0x59]]
        %s849 = sld [smem:[#allocation11 + $0x5a]]
        %s850 = sld [smem:[#allocation11 + $0x5b]]
        %s851 = sld [smem:[#allocation11 + $0x5c]]
        %s852 = sld [smem:[#allocation11 + $0x5d]]
        %s853 = sld [smem:[#allocation11 + $0x5e]]
        %s854 = sld [smem:[#allocation11 + $0x5f]]
        %s855 = sld [smem:[#allocation11 + $0x60]]
        %s856 = sld [smem:[#allocation11 + $0x61]]
        %s857 = sld [smem:[#allocation11 + $0x62]]
        %s858 = sld [smem:[#allocation11 + $0x63]]
        %s859 = sld [smem:[#allocation12]]
        %s860 = sld [smem:[#allocation12 + $0x1]]
        %s861 = sld [smem:[#allocation12 + $0x2]]
        %s862 = sld [smem:[#allocation12 + $0x3]]
        %s863 = sld [smem:[#allocation12 + $0x4]]
        %s864 = sld [smem:[#allocation12 + $0x5]]
        %s865 = sld [smem:[#allocation12 + $0x6]]
        %s866 = sld [smem:[#allocation12 + $0x7]]
        %s867 = sld [smem:[#allocation12 + $0x8]]
        %s868 = sld [smem:[#allocation12 + $0x9]]
        %s869 = sld [smem:[#allocation14]]
        %s870 = sld [smem:[#allocation14 + $0x1]]
        %s871 = sld [smem:[#allocation14 + $0x2]]
        %s872 = sld [smem:[#allocation14 + $0x3]]
        %s873 = sld [smem:[#allocation14 + $0x4]]
        %s874 = sld [smem:[#allocation14 + $0x5]]
        %s875 = sld [smem:[#allocation14 + $0x6]]
        %s876 = sld [smem:[#allocation14 + $0x7]]
        %s877 = sld [smem:[#allocation14 + $0x8]]
        %s878 = sld [smem:[#allocation14 + $0x9]]
        %s879 = sld [smem:[#allocation14 + $0xa]]
        %s880 = sld [smem:[#allocation14 + $0xb]]
        %s881 = sld [smem:[#allocation14 + $0xc]]
        %s882 = sld [smem:[#allocation14 + $0xd]]
        %s883 = sld [smem:[#allocation14 + $0xe]]
        %s884 = sld [smem:[#allocation14 + $0xf]]
        %s885 = sld [smem:[#allocation14 + $0x10]]
        %s886 = sld [smem:[#allocation14 + $0x11]]
        %s887 = sld [smem:[#allocation14 + $0x12]]
        %s888 = sld [smem:[#allocation14 + $0x13]]
        %s889 = sld [smem:[#allocation14 + $0x14]]
        %s890 = sld [smem:[#allocation14 + $0x15]]
        %s891 = sld [smem:[#allocation14 + $0x16]]
        %s892 = sld [smem:[#allocation14 + $0x17]]
        %s893 = sld [smem:[#allocation14 + $0x18]]
        %s894 = sld [smem:[#allocation14 + $0x19]]
        %s895 = sld [smem:[#allocation14 + $0x1a]]
        %s896 = sld [smem:[#allocation14 + $0x1b]]
        %s897 = sld [smem:[#allocation14 + $0x1c]]
        %s898 = sld [smem:[#allocation14 + $0x1d]]
        %s899 = sld [smem:[#allocation14 + $0x1e]]
        %s900 = sld [smem:[#allocation14 + $0x1f]]
        %s901 = sld [smem:[#allocation14 + $0x20]]
        %s902 = sld [smem:[#allocation14 + $0x21]]
        %s903 = sld [smem:[#allocation14 + $0x22]]
        %s904 = sld [smem:[#allocation14 + $0x23]]
        %s905 = sld [smem:[#allocation14 + $0x24]]
        %s906 = sld [smem:[#allocation14 + $0x25]]
        %s907 = sld [smem:[#allocation14 + $0x26]]
        %s908 = sld [smem:[#allocation14 + $0x27]]
        %s909 = sld [smem:[#allocation15]]
        %s910 = sld [smem:[#allocation15 + $0x1]]
        %s911 = sld [smem:[#allocation15 + $0x2]]
        %s912 = sld [smem:[#allocation15 + $0x3]]
        %s913 = sld [smem:[#allocation17]]
        %s914 = sld [smem:[#allocation17 + $0x1]]
        %s915 = sld [smem:[#allocation17 + $0x2]]
        %s916 = sld [smem:[#allocation17 + $0x3]]
        %s917 = sld [smem:[#allocation2]]
        loop: start=0, step=1, limit=2
        $region139: #{_forward_jit.1} parent=97 // loop_pre_header
          _
        $region140: #{_forward_jit.1} parent=97 // loop_header
          %s919 = sphi 0, %s923
          %p920 = scmp.ge.s32.totalorder %s919, 2
        $region141: #{_forward_jit.1} parent=97 // loop_header_branch
          %922 = sbr.rel (%p920) target = $region145
        $region142: #{_forward_jit.1} parent=97 // loop_body
          %s924 = smul.u32 %s919, 16
          %s925 = scalar_lea.vmem %s518, %s924 [#allocation3]
          %v926 = vld [vmem:[%s925] sm:$0xff]
          %v927 = vld [vmem:[%s925 + $0x8] sm:$0xff]
          %s928 = sadd.s32 %s924, 32
          %s929 = scalar_lea.vmem %s518, %s928 [#allocation3]
          %v930 = vld [vmem:[%s929] sm:$0xff]
          %v931 = vld [vmem:[%s929 + $0x8] sm:$0xff]
          %s932 = sadd.s32 %s924, 64
          %s933 = scalar_lea.vmem %s518, %s932 [#allocation3]
          %v934 = vld [vmem:[%s933] sm:$0xff]
          %v935 = vld [vmem:[%s933 + $0x8] sm:$0xff]
          %s936 = sadd.s32 %s924, 96
          %s937 = scalar_lea.vmem %s518, %s936 [#allocation3]
          %v938 = vld [vmem:[%s937] sm:$0xff]
          %v939 = vld [vmem:[%s937 + $0x8] sm:$0xff]
          %v940 = vstv %s599
          %v941 = vmul.f32 %v926, %v940
          %v942 = vmul.f32 %v927, %v940
          %v943 = vstv %s639
          %v944 = vadd.f32 %v941, %v943
          %v945 = vadd.f32 %v942, %v943
          %v946 = vstv %s609
          %v947 = vmul.f32 %v930, %v946
          %v948 = vmul.f32 %v931, %v946
          %v949 = vadd.f32 %v944, %v947
          %v950 = vadd.f32 %v945, %v948
          %v951 = vstv %s619
          %v952 = vmul.f32 %v934, %v951
          %v953 = vmul.f32 %v935, %v951
          %v954 = vadd.f32 %v949, %v952
          %v955 = vadd.f32 %v950, %v953
          %v956 = vstv %s629
          %v957 = vmul.f32 %v938, %v956
          %v958 = vmul.f32 %v939, %v956
          %v959 = vadd.f32 %v954, %v957
          %v960 = vadd.f32 %v955, %v958
          %v961 = vtanh.pop %v959
          %v962 = vtanh.pop %v960
          %v963 = vstv %s600
          %v964 = vmul.f32 %v926, %v963
          %v965 = vmul.f32 %v927, %v963
          %v966 = vstv %s640
          %v967 = vadd.f32 %v964, %v966
          %v968 = vadd.f32 %v965, %v966
          %v969 = vstv %s610
          %v970 = vmul.f32 %v930, %v969
          %v971 = vmul.f32 %v931, %v969
          %v972 = vadd.f32 %v967, %v970
          %v973 = vadd.f32 %v968, %v971
          %v974 = vstv %s620
          %v975 = vmul.f32 %v934, %v974
          %v976 = vmul.f32 %v935, %v974
          %v977 = vadd.f32 %v972, %v975
          %v978 = vadd.f32 %v973, %v976
          %v979 = vstv %s630
          %v980 = vmul.f32 %v938, %v979
          %v981 = vmul.f32 %v939, %v979
          %v982 = vadd.f32 %v977, %v980
          %v983 = vadd.f32 %v978, %v981
          %v984 = vtanh.pop %v982
          %v985 = vtanh.pop %v983
          %v986 = vstv %s601
          %v987 = vmul.f32 %v926, %v986
          %v988 = vmul.f32 %v927, %v986
          %v989 = vstv %s641
          %v990 = vadd.f32 %v987, %v989
          %v991 = vadd.f32 %v988, %v989
          %v992 = vstv %s611
          %v993 = vmul.f32 %v930, %v992
          %v994 = vmul.f32 %v931, %v992
          %v995 = vadd.f32 %v990, %v993
          %v996 = vadd.f32 %v991, %v994
          %v997 = vstv %s621
          %v998 = vmul.f32 %v934, %v997
          %v999 = vmul.f32 %v935, %v997
          %v1000 = vadd.f32 %v995, %v998
          %v1001 = vadd.f32 %v996, %v999
          %v1002 = vstv %s631
          %v1003 = vmul.f32 %v938, %v1002
          %v1004 = vmul.f32 %v939, %v1002
          %v1005 = vadd.f32 %v1000, %v1003
          %v1006 = vadd.f32 %v1001, %v1004
          %v1007 = vtanh.pop %v1005
          %v1008 = vtanh.pop %v1006
          %v1009 = vstv %s602
          %v1010 = vmul.f32 %v926, %v1009
          %v1011 = vmul.f32 %v927, %v1009
          %v1012 = vstv %s642
          %v1013 = vadd.f32 %v1010, %v1012
          %v1014 = vadd.f32 %v1011, %v1012
          %v1015 = vstv %s612
          %v1016 = vmul.f32 %v930, %v1015
          %v1017 = vmul.f32 %v931, %v1015
          %v1018 = vadd.f32 %v1013, %v1016
          %v1019 = vadd.f32 %v1014, %v1017
          %v1020 = vstv %s622
          %v1021 = vmul.f32 %v934, %v1020
          %v1022 = vmul.f32 %v935, %v1020
          %v1023 = vadd.f32 %v1018, %v1021
          %v1024 = vadd.f32 %v1019, %v1022
          %v1025 = vstv %s632
          %v1026 = vmul.f32 %v938, %v1025
          %v1027 = vmul.f32 %v939, %v1025
          %v1028 = vadd.f32 %v1023, %v1026
          %v1029 = vadd.f32 %v1024, %v1027
          %v1030 = vtanh.pop %v1028
          %v1031 = vtanh.pop %v1029
          %v1032 = vstv %s603
          %v1033 = vmul.f32 %v926, %v1032
          %v1034 = vmul.f32 %v927, %v1032
          %v1035 = vstv %s643
          %v1036 = vadd.f32 %v1033, %v1035
          %v1037 = vadd.f32 %v1034, %v1035
          %v1038 = vstv %s613
          %v1039 = vmul.f32 %v930, %v1038
          %v1040 = vmul.f32 %v931, %v1038
          %v1041 = vadd.f32 %v1036, %v1039
          %v1042 = vadd.f32 %v1037, %v1040
          %v1043 = vstv %s623
          %v1044 = vmul.f32 %v934, %v1043
          %v1045 = vmul.f32 %v935, %v1043
          %v1046 = vadd.f32 %v1041, %v1044
          %v1047 = vadd.f32 %v1042, %v1045
          %v1048 = vstv %s633
          %v1049 = vmul.f32 %v938, %v1048
          %v1050 = vmul.f32 %v939, %v1048
          %v1051 = vadd.f32 %v1046, %v1049
          %v1052 = vadd.f32 %v1047, %v1050
          %v1053 = vtanh.pop %v1051
          %v1054 = vtanh.pop %v1052
          %v1055 = vstv %s604
          %v1056 = vmul.f32 %v926, %v1055
          %v1057 = vmul.f32 %v927, %v1055
          %v1058 = vstv %s644
          %v1059 = vadd.f32 %v1056, %v1058
          %v1060 = vadd.f32 %v1057, %v1058
          %v1061 = vstv %s614
          %v1062 = vmul.f32 %v930, %v1061
          %v1063 = vmul.f32 %v931, %v1061
          %v1064 = vadd.f32 %v1059, %v1062
          %v1065 = vadd.f32 %v1060, %v1063
          %v1066 = vstv %s624
          %v1067 = vmul.f32 %v934, %v1066
          %v1068 = vmul.f32 %v935, %v1066
          %v1069 = vadd.f32 %v1064, %v1067
          %v1070 = vadd.f32 %v1065, %v1068
          %v1071 = vstv %s634
          %v1072 = vmul.f32 %v938, %v1071
          %v1073 = vmul.f32 %v939, %v1071
          %v1074 = vadd.f32 %v1069, %v1072
          %v1075 = vadd.f32 %v1070, %v1073
          %v1076 = vtanh.pop %v1074
          %v1077 = vtanh.pop %v1075
          %v1078 = vstv %s605
          %v1079 = vmul.f32 %v926, %v1078
          %v1080 = vmul.f32 %v927, %v1078
          %v1081 = vstv %s645
          %v1082 = vadd.f32 %v1079, %v1081
          %v1083 = vadd.f32 %v1080, %v1081
          %v1084 = vstv %s615
          %v1085 = vmul.f32 %v930, %v1084
          %v1086 = vmul.f32 %v931, %v1084
          %v1087 = vadd.f32 %v1082, %v1085
          %v1088 = vadd.f32 %v1083, %v1086
          %v1089 = vstv %s625
          %v1090 = vmul.f32 %v934, %v1089
          %v1091 = vmul.f32 %v935, %v1089
          %v1092 = vadd.f32 %v1087, %v1090
          %v1093 = vadd.f32 %v1088, %v1091
          %v1094 = vstv %s635
          %v1095 = vmul.f32 %v938, %v1094
          %v1096 = vmul.f32 %v939, %v1094
          %v1097 = vadd.f32 %v1092, %v1095
          %v1098 = vadd.f32 %v1093, %v1096
          %v1099 = vtanh.pop %v1097
          %v1100 = vtanh.pop %v1098
          %v1101 = vstv %s606
          %v1102 = vmul.f32 %v926, %v1101
          %v1103 = vmul.f32 %v927, %v1101
          %v1104 = vstv %s646
          %v1105 = vadd.f32 %v1102, %v1104
          %v1106 = vadd.f32 %v1103, %v1104
          %v1107 = vstv %s616
          %v1108 = vmul.f32 %v930, %v1107
          %v1109 = vmul.f32 %v931, %v1107
          %v1110 = vadd.f32 %v1105, %v1108
          %v1111 = vadd.f32 %v1106, %v1109
          %v1112 = vstv %s626
          %v1113 = vmul.f32 %v934, %v1112
          %v1114 = vmul.f32 %v935, %v1112
          %v1115 = vadd.f32 %v1110, %v1113
          %v1116 = vadd.f32 %v1111, %v1114
          %v1117 = vstv %s636
          %v1118 = vmul.f32 %v938, %v1117
          %v1119 = vmul.f32 %v939, %v1117
          %v1120 = vadd.f32 %v1115, %v1118
          %v1121 = vadd.f32 %v1116, %v1119
          %v1122 = vtanh.pop %v1120
          %v1123 = vtanh.pop %v1121
          %v1124 = vstv %s607
          %v1125 = vmul.f32 %v926, %v1124
          %v1126 = vmul.f32 %v927, %v1124
          %v1127 = vstv %s647
          %v1128 = vadd.f32 %v1125, %v1127
          %v1129 = vadd.f32 %v1126, %v1127
          %v1130 = vstv %s617
          %v1131 = vmul.f32 %v930, %v1130
          %v1132 = vmul.f32 %v931, %v1130
          %v1133 = vadd.f32 %v1128, %v1131
          %v1134 = vadd.f32 %v1129, %v1132
          %v1135 = vstv %s627
          %v1136 = vmul.f32 %v934, %v1135
          %v1137 = vmul.f32 %v935, %v1135
          %v1138 = vadd.f32 %v1133, %v1136
          %v1139 = vadd.f32 %v1134, %v1137
          %v1140 = vstv %s637
          %v1141 = vmul.f32 %v938, %v1140
          %v1142 = vmul.f32 %v939, %v1140
          %v1143 = vadd.f32 %v1138, %v1141
          %v1144 = vadd.f32 %v1139, %v1142
          %v1145 = vtanh.pop %v1143
          %v1146 = vtanh.pop %v1144
          %v1147 = vstv %s608
          %v1148 = vmul.f32 %v926, %v1147
          %v1149 = vmul.f32 %v927, %v1147
          %v1150 = vstv %s648
          %v1151 = vadd.f32 %v1148, %v1150
          %v1152 = vadd.f32 %v1149, %v1150
          %v1153 = vstv %s618
          %v1154 = vmul.f32 %v930, %v1153
          %v1155 = vmul.f32 %v931, %v1153
          %v1156 = vadd.f32 %v1151, %v1154
          %v1157 = vadd.f32 %v1152, %v1155
          %v1158 = vstv %s628
          %v1159 = vmul.f32 %v934, %v1158
          %v1160 = vmul.f32 %v935, %v1158
          %v1161 = vadd.f32 %v1156, %v1159
          %v1162 = vadd.f32 %v1157, %v1160
          %v1163 = vstv %s638
          %v1164 = vmul.f32 %v938, %v1163
          %v1165 = vmul.f32 %v939, %v1163
          %v1166 = vadd.f32 %v1161, %v1164
          %v1167 = vadd.f32 %v1162, %v1165
          %v1168 = vtanh.pop %v1166
          %v1169 = vtanh.pop %v1167
          %v1170 = vstv %s649
          %v1171 = vmul.f32 %v961, %v1170
          %v1172 = vmul.f32 %v962, %v1170
          %v1173 = vstv %s749
          %v1174 = vadd.f32 %v1171, %v1173
          %v1175 = vadd.f32 %v1172, %v1173
          %v1176 = vstv %s659
          %v1177 = vmul.f32 %v984, %v1176
          %v1178 = vmul.f32 %v985, %v1176
          %v1179 = vadd.f32 %v1174, %v1177
          %v1180 = vadd.f32 %v1175, %v1178
          %v1181 = vstv %s669
          %v1182 = vmul.f32 %v1007, %v1181
          %v1183 = vmul.f32 %v1008, %v1181
          %v1184 = vadd.f32 %v1179, %v1182
          %v1185 = vadd.f32 %v1180, %v1183
          %v1186 = vstv %s679
          %v1187 = vmul.f32 %v1030, %v1186
          %v1188 = vmul.f32 %v1031, %v1186
          %v1189 = vadd.f32 %v1184, %v1187
          %v1190 = vadd.f32 %v1185, %v1188
          %v1191 = vstv %s689
          %v1192 = vmul.f32 %v1053, %v1191
          %v1193 = vmul.f32 %v1054, %v1191
          %v1194 = vadd.f32 %v1189, %v1192
          %v1195 = vadd.f32 %v1190, %v1193
          %v1196 = vstv %s699
          %v1197 = vmul.f32 %v1076, %v1196
          %v1198 = vmul.f32 %v1077, %v1196
          %v1199 = vadd.f32 %v1194, %v1197
          %v1200 = vadd.f32 %v1195, %v1198
          %v1201 = vstv %s709
          %v1202 = vmul.f32 %v1099, %v1201
          %v1203 = vmul.f32 %v1100, %v1201
          %v1204 = vadd.f32 %v1199, %v1202
          %v1205 = vadd.f32 %v1200, %v1203
          %v1206 = vstv %s719
          %v1207 = vmul.f32 %v1122, %v1206
          %v1208 = vmul.f32 %v1123, %v1206
          %v1209 = vadd.f32 %v1204, %v1207
          %v1210 = vadd.f32 %v1205, %v1208
          %v1211 = vstv %s729
          %v1212 = vmul.f32 %v1145, %v1211
          %v1213 = vmul.f32 %v1146, %v1211
          %v1214 = vadd.f32 %v1209, %v1212
          %v1215 = vadd.f32 %v1210, %v1213
          %v1216 = vstv %s739
          %v1217 = vmul.f32 %v1168, %v1216
          %v1218 = vmul.f32 %v1169, %v1216
          %v1219 = vadd.f32 %v1214, %v1217
          %v1220 = vadd.f32 %v1215, %v1218
          %v1221 = vtanh.pop %v1219
          %v1222 = vtanh.pop %v1220
          %v1223 = vstv %s650
          %v1224 = vmul.f32 %v961, %v1223
          %v1225 = vmul.f32 %v962, %v1223
          %v1226 = vstv %s750
          %v1227 = vadd.f32 %v1224, %v1226
          %v1228 = vadd.f32 %v1225, %v1226
          %v1229 = vstv %s660
          %v1230 = vmul.f32 %v984, %v1229
          %v1231 = vmul.f32 %v985, %v1229
          %v1232 = vadd.f32 %v1227, %v1230
          %v1233 = vadd.f32 %v1228, %v1231
          %v1234 = vstv %s670
          %v1235 = vmul.f32 %v1007, %v1234
          %v1236 = vmul.f32 %v1008, %v1234
          %v1237 = vadd.f32 %v1232, %v1235
          %v1238 = vadd.f32 %v1233, %v1236
          %v1239 = vstv %s680
          %v1240 = vmul.f32 %v1030, %v1239
          %v1241 = vmul.f32 %v1031, %v1239
          %v1242 = vadd.f32 %v1237, %v1240
          %v1243 = vadd.f32 %v1238, %v1241
          %v1244 = vstv %s690
          %v1245 = vmul.f32 %v1053, %v1244
          %v1246 = vmul.f32 %v1054, %v1244
          %v1247 = vadd.f32 %v1242, %v1245
          %v1248 = vadd.f32 %v1243, %v1246
          %v1249 = vstv %s700
          %v1250 = vmul.f32 %v1076, %v1249
          %v1251 = vmul.f32 %v1077, %v1249
          %v1252 = vadd.f32 %v1247, %v1250
          %v1253 = vadd.f32 %v1248, %v1251
          %v1254 = vstv %s710
          %v1255 = vmul.f32 %v1099, %v1254
          %v1256 = vmul.f32 %v1100, %v1254
          %v1257 = vadd.f32 %v1252, %v1255
          %v1258 = vadd.f32 %v1253, %v1256
          %v1259 = vstv %s720
          %v1260 = vmul.f32 %v1122, %v1259
          %v1261 = vmul.f32 %v1123, %v1259
          %v1262 = vadd.f32 %v1257, %v1260
          %v1263 = vadd.f32 %v1258, %v1261
          %v1264 = vstv %s730
          %v1265 = vmul.f32 %v1145, %v1264
          %v1266 = vmul.f32 %v1146, %v1264
          %v1267 = vadd.f32 %v1262, %v1265
          %v1268 = vadd.f32 %v1263, %v1266
          %v1269 = vstv %s740
          %v1270 = vmul.f32 %v1168, %v1269
          %v1271 = vmul.f32 %v1169, %v1269
          %v1272 = vadd.f32 %v1267, %v1270
          %v1273 = vadd.f32 %v1268, %v1271
          %v1274 = vtanh.pop %v1272
          %v1275 = vtanh.pop %v1273
          %v1276 = vstv %s651
          %v1277 = vmul.f32 %v961, %v1276
          %v1278 = vmul.f32 %v962, %v1276
          %v1279 = vstv %s751
          %v1280 = vadd.f32 %v1277, %v1279
          %v1281 = vadd.f32 %v1278, %v1279
          %v1282 = vstv %s661
          %v1283 = vmul.f32 %v984, %v1282
          %v1284 = vmul.f32 %v985, %v1282
          %v1285 = vadd.f32 %v1280, %v1283
          %v1286 = vadd.f32 %v1281, %v1284
          %v1287 = vstv %s671
          %v1288 = vmul.f32 %v1007, %v1287
          %v1289 = vmul.f32 %v1008, %v1287
          %v1290 = vadd.f32 %v1285, %v1288
          %v1291 = vadd.f32 %v1286, %v1289
          %v1292 = vstv %s681
          %v1293 = vmul.f32 %v1030, %v1292
          %v1294 = vmul.f32 %v1031, %v1292
          %v1295 = vadd.f32 %v1290, %v1293
          %v1296 = vadd.f32 %v1291, %v1294
          %v1297 = vstv %s691
          %v1298 = vmul.f32 %v1053, %v1297
          %v1299 = vmul.f32 %v1054, %v1297
          %v1300 = vadd.f32 %v1295, %v1298
          %v1301 = vadd.f32 %v1296, %v1299
          %v1302 = vstv %s701
          %v1303 = vmul.f32 %v1076, %v1302
          %v1304 = vmul.f32 %v1077, %v1302
          %v1305 = vadd.f32 %v1300, %v1303
          %v1306 = vadd.f32 %v1301, %v1304
          %v1307 = vstv %s711
          %v1308 = vmul.f32 %v1099, %v1307
          %v1309 = vmul.f32 %v1100, %v1307
          %v1310 = vadd.f32 %v1305, %v1308
          %v1311 = vadd.f32 %v1306, %v1309
          %v1312 = vstv %s721
          %v1313 = vmul.f32 %v1122, %v1312
          %v1314 = vmul.f32 %v1123, %v1312
          %v1315 = vadd.f32 %v1310, %v1313
          %v1316 = vadd.f32 %v1311, %v1314
          %v1317 = vstv %s731
          %v1318 = vmul.f32 %v1145, %v1317
          %v1319 = vmul.f32 %v1146, %v1317
          %v1320 = vadd.f32 %v1315, %v1318
          %v1321 = vadd.f32 %v1316, %v1319
          %v1322 = vstv %s741
          %v1323 = vmul.f32 %v1168, %v1322
          %v1324 = vmul.f32 %v1169, %v1322
          %v1325 = vadd.f32 %v1320, %v1323
          %v1326 = vadd.f32 %v1321, %v1324
          %v1327 = vtanh.pop %v1325
          %v1328 = vtanh.pop %v1326
          %v1329 = vstv %s652
          %v1330 = vmul.f32 %v961, %v1329
          %v1331 = vmul.f32 %v962, %v1329
          %v1332 = vstv %s752
          %v1333 = vadd.f32 %v1330, %v1332
          %v1334 = vadd.f32 %v1331, %v1332
          %v1335 = vstv %s662
          %v1336 = vmul.f32 %v984, %v1335
          %v1337 = vmul.f32 %v985, %v1335
          %v1338 = vadd.f32 %v1333, %v1336
          %v1339 = vadd.f32 %v1334, %v1337
          %v1340 = vstv %s672
          %v1341 = vmul.f32 %v1007, %v1340
          %v1342 = vmul.f32 %v1008, %v1340
          %v1343 = vadd.f32 %v1338, %v1341
          %v1344 = vadd.f32 %v1339, %v1342
          %v1345 = vstv %s682
          %v1346 = vmul.f32 %v1030, %v1345
          %v1347 = vmul.f32 %v1031, %v1345
          %v1348 = vadd.f32 %v1343, %v1346
          %v1349 = vadd.f32 %v1344, %v1347
          %v1350 = vstv %s692
          %v1351 = vmul.f32 %v1053, %v1350
          %v1352 = vmul.f32 %v1054, %v1350
          %v1353 = vadd.f32 %v1348, %v1351
          %v1354 = vadd.f32 %v1349, %v1352
          %v1355 = vstv %s702
          %v1356 = vmul.f32 %v1076, %v1355
          %v1357 = vmul.f32 %v1077, %v1355
          %v1358 = vadd.f32 %v1353, %v1356
          %v1359 = vadd.f32 %v1354, %v1357
          %v1360 = vstv %s712
          %v1361 = vmul.f32 %v1099, %v1360
          %v1362 = vmul.f32 %v1100, %v1360
          %v1363 = vadd.f32 %v1358, %v1361
          %v1364 = vadd.f32 %v1359, %v1362
          %v1365 = vstv %s722
          %v1366 = vmul.f32 %v1122, %v1365
          %v1367 = vmul.f32 %v1123, %v1365
          %v1368 = vadd.f32 %v1363, %v1366
          %v1369 = vadd.f32 %v1364, %v1367
          %v1370 = vstv %s732
          %v1371 = vmul.f32 %v1145, %v1370
          %v1372 = vmul.f32 %v1146, %v1370
          %v1373 = vadd.f32 %v1368, %v1371
          %v1374 = vadd.f32 %v1369, %v1372
          %v1375 = vstv %s742
          %v1376 = vmul.f32 %v1168, %v1375
          %v1377 = vmul.f32 %v1169, %v1375
          %v1378 = vadd.f32 %v1373, %v1376
          %v1379 = vadd.f32 %v1374, %v1377
          %v1380 = vtanh.pop %v1378
          %v1381 = vtanh.pop %v1379
          %v1382 = vstv %s653
          %v1383 = vmul.f32 %v961, %v1382
          %v1384 = vmul.f32 %v962, %v1382
          %v1385 = vstv %s753
          %v1386 = vadd.f32 %v1383, %v1385
          %v1387 = vadd.f32 %v1384, %v1385
          %v1388 = vstv %s663
          %v1389 = vmul.f32 %v984, %v1388
          %v1390 = vmul.f32 %v985, %v1388
          %v1391 = vadd.f32 %v1386, %v1389
          %v1392 = vadd.f32 %v1387, %v1390
          %v1393 = vstv %s673
          %v1394 = vmul.f32 %v1007, %v1393
          %v1395 = vmul.f32 %v1008, %v1393
          %v1396 = vadd.f32 %v1391, %v1394
          %v1397 = vadd.f32 %v1392, %v1395
          %v1398 = vstv %s683
          %v1399 = vmul.f32 %v1030, %v1398
          %v1400 = vmul.f32 %v1031, %v1398
          %v1401 = vadd.f32 %v1396, %v1399
          %v1402 = vadd.f32 %v1397, %v1400
          %v1403 = vstv %s693
          %v1404 = vmul.f32 %v1053, %v1403
          %v1405 = vmul.f32 %v1054, %v1403
          %v1406 = vadd.f32 %v1401, %v1404
          %v1407 = vadd.f32 %v1402, %v1405
          %v1408 = vstv %s703
          %v1409 = vmul.f32 %v1076, %v1408
          %v1410 = vmul.f32 %v1077, %v1408
          %v1411 = vadd.f32 %v1406, %v1409
          %v1412 = vadd.f32 %v1407, %v1410
          %v1413 = vstv %s713
          %v1414 = vmul.f32 %v1099, %v1413
          %v1415 = vmul.f32 %v1100, %v1413
          %v1416 = vadd.f32 %v1411, %v1414
          %v1417 = vadd.f32 %v1412, %v1415
          %v1418 = vstv %s723
          %v1419 = vmul.f32 %v1122, %v1418
          %v1420 = vmul.f32 %v1123, %v1418
          %v1421 = vadd.f32 %v1416, %v1419
          %v1422 = vadd.f32 %v1417, %v1420
          %v1423 = vstv %s733
          %v1424 = vmul.f32 %v1145, %v1423
          %v1425 = vmul.f32 %v1146, %v1423
          %v1426 = vadd.f32 %v1421, %v1424
          %v1427 = vadd.f32 %v1422, %v1425
          %v1428 = vstv %s743
          %v1429 = vmul.f32 %v1168, %v1428
          %v1430 = vmul.f32 %v1169, %v1428
          %v1431 = vadd.f32 %v1426, %v1429
          %v1432 = vadd.f32 %v1427, %v1430
          %v1433 = vtanh.pop %v1431
          %v1434 = vtanh.pop %v1432
          %v1435 = vstv %s654
          %v1436 = vmul.f32 %v961, %v1435
          %v1437 = vmul.f32 %v962, %v1435
          %v1438 = vstv %s754
          %v1439 = vadd.f32 %v1436, %v1438
          %v1440 = vadd.f32 %v1437, %v1438
          %v1441 = vstv %s664
          %v1442 = vmul.f32 %v984, %v1441
          %v1443 = vmul.f32 %v985, %v1441
          %v1444 = vadd.f32 %v1439, %v1442
          %v1445 = vadd.f32 %v1440, %v1443
          %v1446 = vstv %s674
          %v1447 = vmul.f32 %v1007, %v1446
          %v1448 = vmul.f32 %v1008, %v1446
          %v1449 = vadd.f32 %v1444, %v1447
          %v1450 = vadd.f32 %v1445, %v1448
          %v1451 = vstv %s684
          %v1452 = vmul.f32 %v1030, %v1451
          %v1453 = vmul.f32 %v1031, %v1451
          %v1454 = vadd.f32 %v1449, %v1452
          %v1455 = vadd.f32 %v1450, %v1453
          %v1456 = vstv %s694
          %v1457 = vmul.f32 %v1053, %v1456
          %v1458 = vmul.f32 %v1054, %v1456
          %v1459 = vadd.f32 %v1454, %v1457
          %v1460 = vadd.f32 %v1455, %v1458
          %v1461 = vstv %s704
          %v1462 = vmul.f32 %v1076, %v1461
          %v1463 = vmul.f32 %v1077, %v1461
          %v1464 = vadd.f32 %v1459, %v1462
          %v1465 = vadd.f32 %v1460, %v1463
          %v1466 = vstv %s714
          %v1467 = vmul.f32 %v1099, %v1466
          %v1468 = vmul.f32 %v1100, %v1466
          %v1469 = vadd.f32 %v1464, %v1467
          %v1470 = vadd.f32 %v1465, %v1468
          %v1471 = vstv %s724
          %v1472 = vmul.f32 %v1122, %v1471
          %v1473 = vmul.f32 %v1123, %v1471
          %v1474 = vadd.f32 %v1469, %v1472
          %v1475 = vadd.f32 %v1470, %v1473
          %v1476 = vstv %s734
          %v1477 = vmul.f32 %v1145, %v1476
          %v1478 = vmul.f32 %v1146, %v1476
          %v1479 = vadd.f32 %v1474, %v1477
          %v1480 = vadd.f32 %v1475, %v1478
          %v1481 = vstv %s744
          %v1482 = vmul.f32 %v1168, %v1481
          %v1483 = vmul.f32 %v1169, %v1481
          %v1484 = vadd.f32 %v1479, %v1482
          %v1485 = vadd.f32 %v1480, %v1483
          %v1486 = vtanh.pop %v1484
          %v1487 = vtanh.pop %v1485
          %v1488 = vstv %s655
          %v1489 = vmul.f32 %v961, %v1488
          %v1490 = vmul.f32 %v962, %v1488
          %v1491 = vstv %s755
          %v1492 = vadd.f32 %v1489, %v1491
          %v1493 = vadd.f32 %v1490, %v1491
          %v1494 = vstv %s665
          %v1495 = vmul.f32 %v984, %v1494
          %v1496 = vmul.f32 %v985, %v1494
          %v1497 = vadd.f32 %v1492, %v1495
          %v1498 = vadd.f32 %v1493, %v1496
          %v1499 = vstv %s675
          %v1500 = vmul.f32 %v1007, %v1499
          %v1501 = vmul.f32 %v1008, %v1499
          %v1502 = vadd.f32 %v1497, %v1500
          %v1503 = vadd.f32 %v1498, %v1501
          %v1504 = vstv %s685
          %v1505 = vmul.f32 %v1030, %v1504
          %v1506 = vmul.f32 %v1031, %v1504
          %v1507 = vadd.f32 %v1502, %v1505
          %v1508 = vadd.f32 %v1503, %v1506
          %v1509 = vstv %s695
          %v1510 = vmul.f32 %v1053, %v1509
          %v1511 = vmul.f32 %v1054, %v1509
          %v1512 = vadd.f32 %v1507, %v1510
          %v1513 = vadd.f32 %v1508, %v1511
          %v1514 = vstv %s705
          %v1515 = vmul.f32 %v1076, %v1514
          %v1516 = vmul.f32 %v1077, %v1514
          %v1517 = vadd.f32 %v1512, %v1515
          %v1518 = vadd.f32 %v1513, %v1516
          %v1519 = vstv %s715
          %v1520 = vmul.f32 %v1099, %v1519
          %v1521 = vmul.f32 %v1100, %v1519
          %v1522 = vadd.f32 %v1517, %v1520
          %v1523 = vadd.f32 %v1518, %v1521
          %v1524 = vstv %s725
          %v1525 = vmul.f32 %v1122, %v1524
          %v1526 = vmul.f32 %v1123, %v1524
          %v1527 = vadd.f32 %v1522, %v1525
          %v1528 = vadd.f32 %v1523, %v1526
          %v1529 = vstv %s735
          %v1530 = vmul.f32 %v1145, %v1529
          %v1531 = vmul.f32 %v1146, %v1529
          %v1532 = vadd.f32 %v1527, %v1530
          %v1533 = vadd.f32 %v1528, %v1531
          %v1534 = vstv %s745
          %v1535 = vmul.f32 %v1168, %v1534
          %v1536 = vmul.f32 %v1169, %v1534
          %v1537 = vadd.f32 %v1532, %v1535
          %v1538 = vadd.f32 %v1533, %v1536
          %v1539 = vtanh.pop %v1537
          %v1540 = vtanh.pop %v1538
          %v1541 = vstv %s656
          %v1542 = vmul.f32 %v961, %v1541
          %v1543 = vmul.f32 %v962, %v1541
          %v1544 = vstv %s756
          %v1545 = vadd.f32 %v1542, %v1544
          %v1546 = vadd.f32 %v1543, %v1544
          %v1547 = vstv %s666
          %v1548 = vmul.f32 %v984, %v1547
          %v1549 = vmul.f32 %v985, %v1547
          %v1550 = vadd.f32 %v1545, %v1548
          %v1551 = vadd.f32 %v1546, %v1549
          %v1552 = vstv %s676
          %v1553 = vmul.f32 %v1007, %v1552
          %v1554 = vmul.f32 %v1008, %v1552
          %v1555 = vadd.f32 %v1550, %v1553
          %v1556 = vadd.f32 %v1551, %v1554
          %v1557 = vstv %s686
          %v1558 = vmul.f32 %v1030, %v1557
          %v1559 = vmul.f32 %v1031, %v1557
          %v1560 = vadd.f32 %v1555, %v1558
          %v1561 = vadd.f32 %v1556, %v1559
          %v1562 = vstv %s696
          %v1563 = vmul.f32 %v1053, %v1562
          %v1564 = vmul.f32 %v1054, %v1562
          %v1565 = vadd.f32 %v1560, %v1563
          %v1566 = vadd.f32 %v1561, %v1564
          %v1567 = vstv %s706
          %v1568 = vmul.f32 %v1076, %v1567
          %v1569 = vmul.f32 %v1077, %v1567
          %v1570 = vadd.f32 %v1565, %v1568
          %v1571 = vadd.f32 %v1566, %v1569
          %v1572 = vstv %s716
          %v1573 = vmul.f32 %v1099, %v1572
          %v1574 = vmul.f32 %v1100, %v1572
          %v1575 = vadd.f32 %v1570, %v1573
          %v1576 = vadd.f32 %v1571, %v1574
          %v1577 = vstv %s726
          %v1578 = vmul.f32 %v1122, %v1577
          %v1579 = vmul.f32 %v1123, %v1577
          %v1580 = vadd.f32 %v1575, %v1578
          %v1581 = vadd.f32 %v1576, %v1579
          %v1582 = vstv %s736
          %v1583 = vmul.f32 %v1145, %v1582
          %v1584 = vmul.f32 %v1146, %v1582
          %v1585 = vadd.f32 %v1580, %v1583
          %v1586 = vadd.f32 %v1581, %v1584
          %v1587 = vstv %s746
          %v1588 = vmul.f32 %v1168, %v1587
          %v1589 = vmul.f32 %v1169, %v1587
          %v1590 = vadd.f32 %v1585, %v1588
          %v1591 = vadd.f32 %v1586, %v1589
          %v1592 = vtanh.pop %v1590
          %v1593 = vtanh.pop %v1591
          %v1594 = vstv %s657
          %v1595 = vmul.f32 %v961, %v1594
          %v1596 = vmul.f32 %v962, %v1594
          %v1597 = vstv %s757
          %v1598 = vadd.f32 %v1595, %v1597
          %v1599 = vadd.f32 %v1596, %v1597
          %v1600 = vstv %s667
          %v1601 = vmul.f32 %v984, %v1600
          %v1602 = vmul.f32 %v985, %v1600
          %v1603 = vadd.f32 %v1598, %v1601
          %v1604 = vadd.f32 %v1599, %v1602
          %v1605 = vstv %s677
          %v1606 = vmul.f32 %v1007, %v1605
          %v1607 = vmul.f32 %v1008, %v1605
          %v1608 = vadd.f32 %v1603, %v1606
          %v1609 = vadd.f32 %v1604, %v1607
          %v1610 = vstv %s687
          %v1611 = vmul.f32 %v1030, %v1610
          %v1612 = vmul.f32 %v1031, %v1610
          %v1613 = vadd.f32 %v1608, %v1611
          %v1614 = vadd.f32 %v1609, %v1612
          %v1615 = vstv %s697
          %v1616 = vmul.f32 %v1053, %v1615
          %v1617 = vmul.f32 %v1054, %v1615
          %v1618 = vadd.f32 %v1613, %v1616
          %v1619 = vadd.f32 %v1614, %v1617
          %v1620 = vstv %s707
          %v1621 = vmul.f32 %v1076, %v1620
          %v1622 = vmul.f32 %v1077, %v1620
          %v1623 = vadd.f32 %v1618, %v1621
          %v1624 = vadd.f32 %v1619, %v1622
          %v1625 = vstv %s717
          %v1626 = vmul.f32 %v1099, %v1625
          %v1627 = vmul.f32 %v1100, %v1625
          %v1628 = vadd.f32 %v1623, %v1626
          %v1629 = vadd.f32 %v1624, %v1627
          %v1630 = vstv %s727
          %v1631 = vmul.f32 %v1122, %v1630
          %v1632 = vmul.f32 %v1123, %v1630
          %v1633 = vadd.f32 %v1628, %v1631
          %v1634 = vadd.f32 %v1629, %v1632
          %v1635 = vstv %s737
          %v1636 = vmul.f32 %v1145, %v1635
          %v1637 = vmul.f32 %v1146, %v1635
          %v1638 = vadd.f32 %v1633, %v1636
          %v1639 = vadd.f32 %v1634, %v1637
          %v1640 = vstv %s747
          %v1641 = vmul.f32 %v1168, %v1640
          %v1642 = vmul.f32 %v1169, %v1640
          %v1643 = vadd.f32 %v1638, %v1641
          %v1644 = vadd.f32 %v1639, %v1642
          %v1645 = vtanh.pop %v1643
          %v1646 = vtanh.pop %v1644
          %v1647 = vstv %s658
          %v1648 = vmul.f32 %v961, %v1647
          %v1649 = vmul.f32 %v962, %v1647
          %v1650 = vstv %s758
          %v1651 = vadd.f32 %v1648, %v1650
          %v1652 = vadd.f32 %v1649, %v1650
          %v1653 = vstv %s668
          %v1654 = vmul.f32 %v984, %v1653
          %v1655 = vmul.f32 %v985, %v1653
          %v1656 = vadd.f32 %v1651, %v1654
          %v1657 = vadd.f32 %v1652, %v1655
          %v1658 = vstv %s678
          %v1659 = vmul.f32 %v1007, %v1658
          %v1660 = vmul.f32 %v1008, %v1658
          %v1661 = vadd.f32 %v1656, %v1659
          %v1662 = vadd.f32 %v1657, %v1660
          %v1663 = vstv %s688
          %v1664 = vmul.f32 %v1030, %v1663
          %v1665 = vmul.f32 %v1031, %v1663
          %v1666 = vadd.f32 %v1661, %v1664
          %v1667 = vadd.f32 %v1662, %v1665
          %v1668 = vstv %s698
          %v1669 = vmul.f32 %v1053, %v1668
          %v1670 = vmul.f32 %v1054, %v1668
          %v1671 = vadd.f32 %v1666, %v1669
          %v1672 = vadd.f32 %v1667, %v1670
          %v1673 = vstv %s708
          %v1674 = vmul.f32 %v1076, %v1673
          %v1675 = vmul.f32 %v1077, %v1673
          %v1676 = vadd.f32 %v1671, %v1674
          %v1677 = vadd.f32 %v1672, %v1675
          %v1678 = vstv %s718
          %v1679 = vmul.f32 %v1099, %v1678
          %v1680 = vmul.f32 %v1100, %v1678
          %v1681 = vadd.f32 %v1676, %v1679
          %v1682 = vadd.f32 %v1677, %v1680
          %v1683 = vstv %s728
          %v1684 = vmul.f32 %v1122, %v1683
          %v1685 = vmul.f32 %v1123, %v1683
          %v1686 = vadd.f32 %v1681, %v1684
          %v1687 = vadd.f32 %v1682, %v1685
          %v1688 = vstv %s738
          %v1689 = vmul.f32 %v1145, %v1688
          %v1690 = vmul.f32 %v1146, %v1688
          %v1691 = vadd.f32 %v1686, %v1689
          %v1692 = vadd.f32 %v1687, %v1690
          %v1693 = vstv %s748
          %v1694 = vmul.f32 %v1168, %v1693
          %v1695 = vmul.f32 %v1169, %v1693
          %v1696 = vadd.f32 %v1691, %v1694
          %v1697 = vadd.f32 %v1692, %v1695
          %v1698 = vtanh.pop %v1696
          %v1699 = vtanh.pop %v1697
          %v1700 = vstv %s759
          %v1701 = vmul.f32 %v1221, %v1700
          %v1702 = vmul.f32 %v1222, %v1700
          %v1703 = vstv %s859
          %v1704 = vadd.f32 %v1701, %v1703
          %v1705 = vadd.f32 %v1702, %v1703
          %v1706 = vstv %s769
          %v1707 = vmul.f32 %v1274, %v1706
          %v1708 = vmul.f32 %v1275, %v1706
          %v1709 = vadd.f32 %v1704, %v1707
          %v1710 = vadd.f32 %v1705, %v1708
          %v1711 = vstv %s779
          %v1712 = vmul.f32 %v1327, %v1711
          %v1713 = vmul.f32 %v1328, %v1711
          %v1714 = vadd.f32 %v1709, %v1712
          %v1715 = vadd.f32 %v1710, %v1713
          %v1716 = vstv %s789
          %v1717 = vmul.f32 %v1380, %v1716
          %v1718 = vmul.f32 %v1381, %v1716
          %v1719 = vadd.f32 %v1714, %v1717
          %v1720 = vadd.f32 %v1715, %v1718
          %v1721 = vstv %s799
          %v1722 = vmul.f32 %v1433, %v1721
          %v1723 = vmul.f32 %v1434, %v1721
          %v1724 = vadd.f32 %v1719, %v1722
          %v1725 = vadd.f32 %v1720, %v1723
          %v1726 = vstv %s809
          %v1727 = vmul.f32 %v1486, %v1726
          %v1728 = vmul.f32 %v1487, %v1726
          %v1729 = vadd.f32 %v1724, %v1727
          %v1730 = vadd.f32 %v1725, %v1728
          %v1731 = vstv %s819
          %v1732 = vmul.f32 %v1539, %v1731
          %v1733 = vmul.f32 %v1540, %v1731
          %v1734 = vadd.f32 %v1729, %v1732
          %v1735 = vadd.f32 %v1730, %v1733
          %v1736 = vstv %s829
          %v1737 = vmul.f32 %v1592, %v1736
          %v1738 = vmul.f32 %v1593, %v1736
          %v1739 = vadd.f32 %v1734, %v1737
          %v1740 = vadd.f32 %v1735, %v1738
          %v1741 = vstv %s839
          %v1742 = vmul.f32 %v1645, %v1741
          %v1743 = vmul.f32 %v1646, %v1741
          %v1744 = vadd.f32 %v1739, %v1742
          %v1745 = vadd.f32 %v1740, %v1743
          %v1746 = vstv %s849
          %v1747 = vmul.f32 %v1698, %v1746
          %v1748 = vmul.f32 %v1699, %v1746
          %v1749 = vadd.f32 %v1744, %v1747
          %v1750 = vadd.f32 %v1745, %v1748
          %v1751 = vtanh.pop %v1749
          %v1752 = vtanh.pop %v1750
          %v1753 = vstv %s760
          %v1754 = vmul.f32 %v1221, %v1753
          %v1755 = vmul.f32 %v1222, %v1753
          %v1756 = vstv %s860
          %v1757 = vadd.f32 %v1754, %v1756
          %v1758 = vadd.f32 %v1755, %v1756
          %v1759 = vstv %s770
          %v1760 = vmul.f32 %v1274, %v1759
          %v1761 = vmul.f32 %v1275, %v1759
          %v1762 = vadd.f32 %v1757, %v1760
          %v1763 = vadd.f32 %v1758, %v1761
          %v1764 = vstv %s780
          %v1765 = vmul.f32 %v1327, %v1764
          %v1766 = vmul.f32 %v1328, %v1764
          %v1767 = vadd.f32 %v1762, %v1765
          %v1768 = vadd.f32 %v1763, %v1766
          %v1769 = vstv %s790
          %v1770 = vmul.f32 %v1380, %v1769
          %v1771 = vmul.f32 %v1381, %v1769
          %v1772 = vadd.f32 %v1767, %v1770
          %v1773 = vadd.f32 %v1768, %v1771
          %v1774 = vstv %s800
          %v1775 = vmul.f32 %v1433, %v1774
          %v1776 = vmul.f32 %v1434, %v1774
          %v1777 = vadd.f32 %v1772, %v1775
          %v1778 = vadd.f32 %v1773, %v1776
          %v1779 = vstv %s810
          %v1780 = vmul.f32 %v1486, %v1779
          %v1781 = vmul.f32 %v1487, %v1779
          %v1782 = vadd.f32 %v1777, %v1780
          %v1783 = vadd.f32 %v1778, %v1781
          %v1784 = vstv %s820
          %v1785 = vmul.f32 %v1539, %v1784
          %v1786 = vmul.f32 %v1540, %v1784
          %v1787 = vadd.f32 %v1782, %v1785
          %v1788 = vadd.f32 %v1783, %v1786
          %v1789 = vstv %s830
          %v1790 = vmul.f32 %v1592, %v1789
          %v1791 = vmul.f32 %v1593, %v1789
          %v1792 = vadd.f32 %v1787, %v1790
          %v1793 = vadd.f32 %v1788, %v1791
          %v1794 = vstv %s840
          %v1795 = vmul.f32 %v1645, %v1794
          %v1796 = vmul.f32 %v1646, %v1794
          %v1797 = vadd.f32 %v1792, %v1795
          %v1798 = vadd.f32 %v1793, %v1796
          %v1799 = vstv %s850
          %v1800 = vmul.f32 %v1698, %v1799
          %v1801 = vmul.f32 %v1699, %v1799
          %v1802 = vadd.f32 %v1797, %v1800
          %v1803 = vadd.f32 %v1798, %v1801
          %v1804 = vtanh.pop %v1802
          %v1805 = vtanh.pop %v1803
          %v1806 = vstv %s761
          %v1807 = vmul.f32 %v1221, %v1806
          %v1808 = vmul.f32 %v1222, %v1806
          %v1809 = vstv %s861
          %v1810 = vadd.f32 %v1807, %v1809
          %v1811 = vadd.f32 %v1808, %v1809
          %v1812 = vstv %s771
          %v1813 = vmul.f32 %v1274, %v1812
          %v1814 = vmul.f32 %v1275, %v1812
          %v1815 = vadd.f32 %v1810, %v1813
          %v1816 = vadd.f32 %v1811, %v1814
          %v1817 = vstv %s781
          %v1818 = vmul.f32 %v1327, %v1817
          %v1819 = vmul.f32 %v1328, %v1817
          %v1820 = vadd.f32 %v1815, %v1818
          %v1821 = vadd.f32 %v1816, %v1819
          %v1822 = vstv %s791
          %v1823 = vmul.f32 %v1380, %v1822
          %v1824 = vmul.f32 %v1381, %v1822
          %v1825 = vadd.f32 %v1820, %v1823
          %v1826 = vadd.f32 %v1821, %v1824
          %v1827 = vstv %s801
          %v1828 = vmul.f32 %v1433, %v1827
          %v1829 = vmul.f32 %v1434, %v1827
          %v1830 = vadd.f32 %v1825, %v1828
          %v1831 = vadd.f32 %v1826, %v1829
          %v1832 = vstv %s811
          %v1833 = vmul.f32 %v1486, %v1832
          %v1834 = vmul.f32 %v1487, %v1832
          %v1835 = vadd.f32 %v1830, %v1833
          %v1836 = vadd.f32 %v1831, %v1834
          %v1837 = vstv %s821
          %v1838 = vmul.f32 %v1539, %v1837
          %v1839 = vmul.f32 %v1540, %v1837
          %v1840 = vadd.f32 %v1835, %v1838
          %v1841 = vadd.f32 %v1836, %v1839
          %v1842 = vstv %s831
          %v1843 = vmul.f32 %v1592, %v1842
          %v1844 = vmul.f32 %v1593, %v1842
          %v1845 = vadd.f32 %v1840, %v1843
          %v1846 = vadd.f32 %v1841, %v1844
          %v1847 = vstv %s841
          %v1848 = vmul.f32 %v1645, %v1847
          %v1849 = vmul.f32 %v1646, %v1847
          %v1850 = vadd.f32 %v1845, %v1848
          %v1851 = vadd.f32 %v1846, %v1849
          %v1852 = vstv %s851
          %v1853 = vmul.f32 %v1698, %v1852
          %v1854 = vmul.f32 %v1699, %v1852
          %v1855 = vadd.f32 %v1850, %v1853
          %v1856 = vadd.f32 %v1851, %v1854
          %v1857 = vtanh.pop %v1855
          %v1858 = vtanh.pop %v1856
          %v1859 = vstv %s762
          %v1860 = vmul.f32 %v1221, %v1859
          %v1861 = vmul.f32 %v1222, %v1859
          %v1862 = vstv %s862
          %v1863 = vadd.f32 %v1860, %v1862
          %v1864 = vadd.f32 %v1861, %v1862
          %v1865 = vstv %s772
          %v1866 = vmul.f32 %v1274, %v1865
          %v1867 = vmul.f32 %v1275, %v1865
          %v1868 = vadd.f32 %v1863, %v1866
          %v1869 = vadd.f32 %v1864, %v1867
          %v1870 = vstv %s782
          %v1871 = vmul.f32 %v1327, %v1870
          %v1872 = vmul.f32 %v1328, %v1870
          %v1873 = vadd.f32 %v1868, %v1871
          %v1874 = vadd.f32 %v1869, %v1872
          %v1875 = vstv %s792
          %v1876 = vmul.f32 %v1380, %v1875
          %v1877 = vmul.f32 %v1381, %v1875
          %v1878 = vadd.f32 %v1873, %v1876
          %v1879 = vadd.f32 %v1874, %v1877
          %v1880 = vstv %s802
          %v1881 = vmul.f32 %v1433, %v1880
          %v1882 = vmul.f32 %v1434, %v1880
          %v1883 = vadd.f32 %v1878, %v1881
          %v1884 = vadd.f32 %v1879, %v1882
          %v1885 = vstv %s812
          %v1886 = vmul.f32 %v1486, %v1885
          %v1887 = vmul.f32 %v1487, %v1885
          %v1888 = vadd.f32 %v1883, %v1886
          %v1889 = vadd.f32 %v1884, %v1887
          %v1890 = vstv %s822
          %v1891 = vmul.f32 %v1539, %v1890
          %v1892 = vmul.f32 %v1540, %v1890
          %v1893 = vadd.f32 %v1888, %v1891
          %v1894 = vadd.f32 %v1889, %v1892
          %v1895 = vstv %s832
          %v1896 = vmul.f32 %v1592, %v1895
          %v1897 = vmul.f32 %v1593, %v1895
          %v1898 = vadd.f32 %v1893, %v1896
          %v1899 = vadd.f32 %v1894, %v1897
          %v1900 = vstv %s842
          %v1901 = vmul.f32 %v1645, %v1900
          %v1902 = vmul.f32 %v1646, %v1900
          %v1903 = vadd.f32 %v1898, %v1901
          %v1904 = vadd.f32 %v1899, %v1902
          %v1905 = vstv %s852
          %v1906 = vmul.f32 %v1698, %v1905
          %v1907 = vmul.f32 %v1699, %v1905
          %v1908 = vadd.f32 %v1903, %v1906
          %v1909 = vadd.f32 %v1904, %v1907
          %v1910 = vtanh.pop %v1908
          %v1911 = vtanh.pop %v1909
          %v1912 = vstv %s763
          %v1913 = vmul.f32 %v1221, %v1912
          %v1914 = vmul.f32 %v1222, %v1912
          %v1915 = vstv %s863
          %v1916 = vadd.f32 %v1913, %v1915
          %v1917 = vadd.f32 %v1914, %v1915
          %v1918 = vstv %s773
          %v1919 = vmul.f32 %v1274, %v1918
          %v1920 = vmul.f32 %v1275, %v1918
          %v1921 = vadd.f32 %v1916, %v1919
          %v1922 = vadd.f32 %v1917, %v1920
          %v1923 = vstv %s783
          %v1924 = vmul.f32 %v1327, %v1923
          %v1925 = vmul.f32 %v1328, %v1923
          %v1926 = vadd.f32 %v1921, %v1924
          %v1927 = vadd.f32 %v1922, %v1925
          %v1928 = vstv %s793
          %v1929 = vmul.f32 %v1380, %v1928
          %v1930 = vmul.f32 %v1381, %v1928
          %v1931 = vadd.f32 %v1926, %v1929
          %v1932 = vadd.f32 %v1927, %v1930
          %v1933 = vstv %s803
          %v1934 = vmul.f32 %v1433, %v1933
          %v1935 = vmul.f32 %v1434, %v1933
          %v1936 = vadd.f32 %v1931, %v1934
          %v1937 = vadd.f32 %v1932, %v1935
          %v1938 = vstv %s813
          %v1939 = vmul.f32 %v1486, %v1938
          %v1940 = vmul.f32 %v1487, %v1938
          %v1941 = vadd.f32 %v1936, %v1939
          %v1942 = vadd.f32 %v1937, %v1940
          %v1943 = vstv %s823
          %v1944 = vmul.f32 %v1539, %v1943
          %v1945 = vmul.f32 %v1540, %v1943
          %v1946 = vadd.f32 %v1941, %v1944
          %v1947 = vadd.f32 %v1942, %v1945
          %v1948 = vstv %s833
          %v1949 = vmul.f32 %v1592, %v1948
          %v1950 = vmul.f32 %v1593, %v1948
          %v1951 = vadd.f32 %v1946, %v1949
          %v1952 = vadd.f32 %v1947, %v1950
          %v1953 = vstv %s843
          %v1954 = vmul.f32 %v1645, %v1953
          %v1955 = vmul.f32 %v1646, %v1953
          %v1956 = vadd.f32 %v1951, %v1954
          %v1957 = vadd.f32 %v1952, %v1955
          %v1958 = vstv %s853
          %v1959 = vmul.f32 %v1698, %v1958
          %v1960 = vmul.f32 %v1699, %v1958
          %v1961 = vadd.f32 %v1956, %v1959
          %v1962 = vadd.f32 %v1957, %v1960
          %v1963 = vtanh.pop %v1961
          %v1964 = vtanh.pop %v1962
          %v1965 = vstv %s764
          %v1966 = vmul.f32 %v1221, %v1965
          %v1967 = vmul.f32 %v1222, %v1965
          %v1968 = vstv %s864
          %v1969 = vadd.f32 %v1966, %v1968
          %v1970 = vadd.f32 %v1967, %v1968
          %v1971 = vstv %s774
          %v1972 = vmul.f32 %v1274, %v1971
          %v1973 = vmul.f32 %v1275, %v1971
          %v1974 = vadd.f32 %v1969, %v1972
          %v1975 = vadd.f32 %v1970, %v1973
          %v1976 = vstv %s784
          %v1977 = vmul.f32 %v1327, %v1976
          %v1978 = vmul.f32 %v1328, %v1976
          %v1979 = vadd.f32 %v1974, %v1977
          %v1980 = vadd.f32 %v1975, %v1978
          %v1981 = vstv %s794
          %v1982 = vmul.f32 %v1380, %v1981
          %v1983 = vmul.f32 %v1381, %v1981
          %v1984 = vadd.f32 %v1979, %v1982
          %v1985 = vadd.f32 %v1980, %v1983
          %v1986 = vstv %s804
          %v1987 = vmul.f32 %v1433, %v1986
          %v1988 = vmul.f32 %v1434, %v1986
          %v1989 = vadd.f32 %v1984, %v1987
          %v1990 = vadd.f32 %v1985, %v1988
          %v1991 = vstv %s814
          %v1992 = vmul.f32 %v1486, %v1991
          %v1993 = vmul.f32 %v1487, %v1991
          %v1994 = vadd.f32 %v1989, %v1992
          %v1995 = vadd.f32 %v1990, %v1993
          %v1996 = vstv %s824
          %v1997 = vmul.f32 %v1539, %v1996
          %v1998 = vmul.f32 %v1540, %v1996
          %v1999 = vadd.f32 %v1994, %v1997
          %v2000 = vadd.f32 %v1995, %v1998
          %v2001 = vstv %s834
          %v2002 = vmul.f32 %v1592, %v2001
          %v2003 = vmul.f32 %v1593, %v2001
          %v2004 = vadd.f32 %v1999, %v2002
          %v2005 = vadd.f32 %v2000, %v2003
          %v2006 = vstv %s844
          %v2007 = vmul.f32 %v1645, %v2006
          %v2008 = vmul.f32 %v1646, %v2006
          %v2009 = vadd.f32 %v2004, %v2007
          %v2010 = vadd.f32 %v2005, %v2008
          %v2011 = vstv %s854
          %v2012 = vmul.f32 %v1698, %v2011
          %v2013 = vmul.f32 %v1699, %v2011
          %v2014 = vadd.f32 %v2009, %v2012
          %v2015 = vadd.f32 %v2010, %v2013
          %v2016 = vtanh.pop %v2014
          %v2017 = vtanh.pop %v2015
          %v2018 = vstv %s765
          %v2019 = vmul.f32 %v1221, %v2018
          %v2020 = vmul.f32 %v1222, %v2018
          %v2021 = vstv %s865
          %v2022 = vadd.f32 %v2019, %v2021
          %v2023 = vadd.f32 %v2020, %v2021
          %v2024 = vstv %s775
          %v2025 = vmul.f32 %v1274, %v2024
          %v2026 = vmul.f32 %v1275, %v2024
          %v2027 = vadd.f32 %v2022, %v2025
          %v2028 = vadd.f32 %v2023, %v2026
          %v2029 = vstv %s785
          %v2030 = vmul.f32 %v1327, %v2029
          %v2031 = vmul.f32 %v1328, %v2029
          %v2032 = vadd.f32 %v2027, %v2030
          %v2033 = vadd.f32 %v2028, %v2031
          %v2034 = vstv %s795
          %v2035 = vmul.f32 %v1380, %v2034
          %v2036 = vmul.f32 %v1381, %v2034
          %v2037 = vadd.f32 %v2032, %v2035
          %v2038 = vadd.f32 %v2033, %v2036
          %v2039 = vstv %s805
          %v2040 = vmul.f32 %v1433, %v2039
          %v2041 = vmul.f32 %v1434, %v2039
          %v2042 = vadd.f32 %v2037, %v2040
          %v2043 = vadd.f32 %v2038, %v2041
          %v2044 = vstv %s815
          %v2045 = vmul.f32 %v1486, %v2044
          %v2046 = vmul.f32 %v1487, %v2044
          %v2047 = vadd.f32 %v2042, %v2045
          %v2048 = vadd.f32 %v2043, %v2046
          %v2049 = vstv %s825
          %v2050 = vmul.f32 %v1539, %v2049
          %v2051 = vmul.f32 %v1540, %v2049
          %v2052 = vadd.f32 %v2047, %v2050
          %v2053 = vadd.f32 %v2048, %v2051
          %v2054 = vstv %s835
          %v2055 = vmul.f32 %v1592, %v2054
          %v2056 = vmul.f32 %v1593, %v2054
          %v2057 = vadd.f32 %v2052, %v2055
          %v2058 = vadd.f32 %v2053, %v2056
          %v2059 = vstv %s845
          %v2060 = vmul.f32 %v1645, %v2059
          %v2061 = vmul.f32 %v1646, %v2059
          %v2062 = vadd.f32 %v2057, %v2060
          %v2063 = vadd.f32 %v2058, %v2061
          %v2064 = vstv %s855
          %v2065 = vmul.f32 %v1698, %v2064
          %v2066 = vmul.f32 %v1699, %v2064
          %v2067 = vadd.f32 %v2062, %v2065
          %v2068 = vadd.f32 %v2063, %v2066
          %v2069 = vtanh.pop %v2067
          %v2070 = vtanh.pop %v2068
          %v2071 = vstv %s766
          %v2072 = vmul.f32 %v1221, %v2071
          %v2073 = vmul.f32 %v1222, %v2071
          %v2074 = vstv %s866
          %v2075 = vadd.f32 %v2072, %v2074
          %v2076 = vadd.f32 %v2073, %v2074
          %v2077 = vstv %s776
          %v2078 = vmul.f32 %v1274, %v2077
          %v2079 = vmul.f32 %v1275, %v2077
          %v2080 = vadd.f32 %v2075, %v2078
          %v2081 = vadd.f32 %v2076, %v2079
          %v2082 = vstv %s786
          %v2083 = vmul.f32 %v1327, %v2082
          %v2084 = vmul.f32 %v1328, %v2082
          %v2085 = vadd.f32 %v2080, %v2083
          %v2086 = vadd.f32 %v2081, %v2084
          %v2087 = vstv %s796
          %v2088 = vmul.f32 %v1380, %v2087
          %v2089 = vmul.f32 %v1381, %v2087
          %v2090 = vadd.f32 %v2085, %v2088
          %v2091 = vadd.f32 %v2086, %v2089
          %v2092 = vstv %s806
          %v2093 = vmul.f32 %v1433, %v2092
          %v2094 = vmul.f32 %v1434, %v2092
          %v2095 = vadd.f32 %v2090, %v2093
          %v2096 = vadd.f32 %v2091, %v2094
          %v2097 = vstv %s816
          %v2098 = vmul.f32 %v1486, %v2097
          %v2099 = vmul.f32 %v1487, %v2097
          %v2100 = vadd.f32 %v2095, %v2098
          %v2101 = vadd.f32 %v2096, %v2099
          %v2102 = vstv %s826
          %v2103 = vmul.f32 %v1539, %v2102
          %v2104 = vmul.f32 %v1540, %v2102
          %v2105 = vadd.f32 %v2100, %v2103
          %v2106 = vadd.f32 %v2101, %v2104
          %v2107 = vstv %s836
          %v2108 = vmul.f32 %v1592, %v2107
          %v2109 = vmul.f32 %v1593, %v2107
          %v2110 = vadd.f32 %v2105, %v2108
          %v2111 = vadd.f32 %v2106, %v2109
          %v2112 = vstv %s846
          %v2113 = vmul.f32 %v1645, %v2112
          %v2114 = vmul.f32 %v1646, %v2112
          %v2115 = vadd.f32 %v2110, %v2113
          %v2116 = vadd.f32 %v2111, %v2114
          %v2117 = vstv %s856
          %v2118 = vmul.f32 %v1698, %v2117
          %v2119 = vmul.f32 %v1699, %v2117
          %v2120 = vadd.f32 %v2115, %v2118
          %v2121 = vadd.f32 %v2116, %v2119
          %v2122 = vtanh.pop %v2120
          %v2123 = vtanh.pop %v2121
          %v2124 = vstv %s767
          %v2125 = vmul.f32 %v1221, %v2124
          %v2126 = vmul.f32 %v1222, %v2124
          %v2127 = vstv %s867
          %v2128 = vadd.f32 %v2125, %v2127
          %v2129 = vadd.f32 %v2126, %v2127
          %v2130 = vstv %s777
          %v2131 = vmul.f32 %v1274, %v2130
          %v2132 = vmul.f32 %v1275, %v2130
          %v2133 = vadd.f32 %v2128, %v2131
          %v2134 = vadd.f32 %v2129, %v2132
          %v2135 = vstv %s787
          %v2136 = vmul.f32 %v1327, %v2135
          %v2137 = vmul.f32 %v1328, %v2135
          %v2138 = vadd.f32 %v2133, %v2136
          %v2139 = vadd.f32 %v2134, %v2137
          %v2140 = vstv %s797
          %v2141 = vmul.f32 %v1380, %v2140
          %v2142 = vmul.f32 %v1381, %v2140
          %v2143 = vadd.f32 %v2138, %v2141
          %v2144 = vadd.f32 %v2139, %v2142
          %v2145 = vstv %s807
          %v2146 = vmul.f32 %v1433, %v2145
          %v2147 = vmul.f32 %v1434, %v2145
          %v2148 = vadd.f32 %v2143, %v2146
          %v2149 = vadd.f32 %v2144, %v2147
          %v2150 = vstv %s817
          %v2151 = vmul.f32 %v1486, %v2150
          %v2152 = vmul.f32 %v1487, %v2150
          %v2153 = vadd.f32 %v2148, %v2151
          %v2154 = vadd.f32 %v2149, %v2152
          %v2155 = vstv %s827
          %v2156 = vmul.f32 %v1539, %v2155
          %v2157 = vmul.f32 %v1540, %v2155
          %v2158 = vadd.f32 %v2153, %v2156
          %v2159 = vadd.f32 %v2154, %v2157
          %v2160 = vstv %s837
          %v2161 = vmul.f32 %v1592, %v2160
          %v2162 = vmul.f32 %v1593, %v2160
          %v2163 = vadd.f32 %v2158, %v2161
          %v2164 = vadd.f32 %v2159, %v2162
          %v2165 = vstv %s847
          %v2166 = vmul.f32 %v1645, %v2165
          %v2167 = vmul.f32 %v1646, %v2165
          %v2168 = vadd.f32 %v2163, %v2166
          %v2169 = vadd.f32 %v2164, %v2167
          %v2170 = vstv %s857
          %v2171 = vmul.f32 %v1698, %v2170
          %v2172 = vmul.f32 %v1699, %v2170
          %v2173 = vadd.f32 %v2168, %v2171
          %v2174 = vadd.f32 %v2169, %v2172
          %v2175 = vtanh.pop %v2173
          %v2176 = vtanh.pop %v2174
          %v2177 = vstv %s768
          %v2178 = vmul.f32 %v1221, %v2177
          %v2179 = vmul.f32 %v1222, %v2177
          %v2180 = vstv %s868
          %v2181 = vadd.f32 %v2178, %v2180
          %v2182 = vadd.f32 %v2179, %v2180
          %v2183 = vstv %s778
          %v2184 = vmul.f32 %v1274, %v2183
          %v2185 = vmul.f32 %v1275, %v2183
          %v2186 = vadd.f32 %v2181, %v2184
          %v2187 = vadd.f32 %v2182, %v2185
          %v2188 = vstv %s788
          %v2189 = vmul.f32 %v1327, %v2188
          %v2190 = vmul.f32 %v1328, %v2188
          %v2191 = vadd.f32 %v2186, %v2189
          %v2192 = vadd.f32 %v2187, %v2190
          %v2193 = vstv %s798
          %v2194 = vmul.f32 %v1380, %v2193
          %v2195 = vmul.f32 %v1381, %v2193
          %v2196 = vadd.f32 %v2191, %v2194
          %v2197 = vadd.f32 %v2192, %v2195
          %v2198 = vstv %s808
          %v2199 = vmul.f32 %v1433, %v2198
          %v2200 = vmul.f32 %v1434, %v2198
          %v2201 = vadd.f32 %v2196, %v2199
          %v2202 = vadd.f32 %v2197, %v2200
          %v2203 = vstv %s818
          %v2204 = vmul.f32 %v1486, %v2203
          %v2205 = vmul.f32 %v1487, %v2203
          %v2206 = vadd.f32 %v2201, %v2204
          %v2207 = vadd.f32 %v2202, %v2205
          %v2208 = vstv %s828
          %v2209 = vmul.f32 %v1539, %v2208
          %v2210 = vmul.f32 %v1540, %v2208
          %v2211 = vadd.f32 %v2206, %v2209
          %v2212 = vadd.f32 %v2207, %v2210
          %v2213 = vstv %s838
          %v2214 = vmul.f32 %v1592, %v2213
          %v2215 = vmul.f32 %v1593, %v2213
          %v2216 = vadd.f32 %v2211, %v2214
          %v2217 = vadd.f32 %v2212, %v2215
          %v2218 = vstv %s848
          %v2219 = vmul.f32 %v1645, %v2218
          %v2220 = vmul.f32 %v1646, %v2218
          %v2221 = vadd.f32 %v2216, %v2219
          %v2222 = vadd.f32 %v2217, %v2220
          %v2223 = vstv %s858
          %v2224 = vmul.f32 %v1698, %v2223
          %v2225 = vmul.f32 %v1699, %v2223
          %v2226 = vadd.f32 %v2221, %v2224
          %v2227 = vadd.f32 %v2222, %v2225
          %v2228 = vtanh.pop %v2226
          %v2229 = vtanh.pop %v2227
          %v2230 = vstv %s869
          %v2231 = vmul.f32 %v1751, %v2230
          %v2232 = vmul.f32 %v1752, %v2230
          %v2233 = vstv %s909
          %v2234 = vadd.f32 %v2231, %v2233
          %v2235 = vadd.f32 %v2232, %v2233
          %v2236 = vstv %s873
          %v2237 = vmul.f32 %v1804, %v2236
          %v2238 = vmul.f32 %v1805, %v2236
          %v2239 = vadd.f32 %v2234, %v2237
          %v2240 = vadd.f32 %v2235, %v2238
          %v2241 = vstv %s877
          %v2242 = vmul.f32 %v1857, %v2241
          %v2243 = vmul.f32 %v1858, %v2241
          %v2244 = vadd.f32 %v2239, %v2242
          %v2245 = vadd.f32 %v2240, %v2243
          %v2246 = vstv %s881
          %v2247 = vmul.f32 %v1910, %v2246
          %v2248 = vmul.f32 %v1911, %v2246
          %v2249 = vadd.f32 %v2244, %v2247
          %v2250 = vadd.f32 %v2245, %v2248
          %v2251 = vstv %s885
          %v2252 = vmul.f32 %v1963, %v2251
          %v2253 = vmul.f32 %v1964, %v2251
          %v2254 = vadd.f32 %v2249, %v2252
          %v2255 = vadd.f32 %v2250, %v2253
          %v2256 = vstv %s889
          %v2257 = vmul.f32 %v2016, %v2256
          %v2258 = vmul.f32 %v2017, %v2256
          %v2259 = vadd.f32 %v2254, %v2257
          %v2260 = vadd.f32 %v2255, %v2258
          %v2261 = vstv %s893
          %v2262 = vmul.f32 %v2069, %v2261
          %v2263 = vmul.f32 %v2070, %v2261
          %v2264 = vadd.f32 %v2259, %v2262
          %v2265 = vadd.f32 %v2260, %v2263
          %v2266 = vstv %s897
          %v2267 = vmul.f32 %v2122, %v2266
          %v2268 = vmul.f32 %v2123, %v2266
          %v2269 = vadd.f32 %v2264, %v2267
          %v2270 = vadd.f32 %v2265, %v2268
          %v2271 = vstv %s901
          %v2272 = vmul.f32 %v2175, %v2271
          %v2273 = vmul.f32 %v2176, %v2271
          %v2274 = vadd.f32 %v2269, %v2272
          %v2275 = vadd.f32 %v2270, %v2273
          %v2276 = vstv %s905
          %v2277 = vmul.f32 %v2228, %v2276
          %v2278 = vmul.f32 %v2229, %v2276
          %v2279 = vadd.f32 %v2274, %v2277
          %v2280 = vadd.f32 %v2275, %v2278
          %v2281 = vtanh.pop %v2279
          %v2282 = vtanh.pop %v2280
          %v2283 = vstv %s870
          %v2284 = vmul.f32 %v1751, %v2283
          %v2285 = vmul.f32 %v1752, %v2283
          %v2286 = vstv %s910
          %v2287 = vadd.f32 %v2284, %v2286
          %v2288 = vadd.f32 %v2285, %v2286
          %v2289 = vstv %s874
          %v2290 = vmul.f32 %v1804, %v2289
          %v2291 = vmul.f32 %v1805, %v2289
          %v2292 = vadd.f32 %v2287, %v2290
          %v2293 = vadd.f32 %v2288, %v2291
          %v2294 = vstv %s878
          %v2295 = vmul.f32 %v1857, %v2294
          %v2296 = vmul.f32 %v1858, %v2294
          %v2297 = vadd.f32 %v2292, %v2295
          %v2298 = vadd.f32 %v2293, %v2296
          %v2299 = vstv %s882
          %v2300 = vmul.f32 %v1910, %v2299
          %v2301 = vmul.f32 %v1911, %v2299
          %v2302 = vadd.f32 %v2297, %v2300
          %v2303 = vadd.f32 %v2298, %v2301
          %v2304 = vstv %s886
          %v2305 = vmul.f32 %v1963, %v2304
          %v2306 = vmul.f32 %v1964, %v2304
          %v2307 = vadd.f32 %v2302, %v2305
          %v2308 = vadd.f32 %v2303, %v2306
          %v2309 = vstv %s890
          %v2310 = vmul.f32 %v2016, %v2309
          %v2311 = vmul.f32 %v2017, %v2309
          %v2312 = vadd.f32 %v2307, %v2310
          %v2313 = vadd.f32 %v2308, %v2311
          %v2314 = vstv %s894
          %v2315 = vmul.f32 %v2069, %v2314
          %v2316 = vmul.f32 %v2070, %v2314
          %v2317 = vadd.f32 %v2312, %v2315
          %v2318 = vadd.f32 %v2313, %v2316
          %v2319 = vstv %s898
          %v2320 = vmul.f32 %v2122, %v2319
          %v2321 = vmul.f32 %v2123, %v2319
          %v2322 = vadd.f32 %v2317, %v2320
          %v2323 = vadd.f32 %v2318, %v2321
          %v2324 = vstv %s902
          %v2325 = vmul.f32 %v2175, %v2324
          %v2326 = vmul.f32 %v2176, %v2324
          %v2327 = vadd.f32 %v2322, %v2325
          %v2328 = vadd.f32 %v2323, %v2326
          %v2329 = vstv %s906
          %v2330 = vmul.f32 %v2228, %v2329
          %v2331 = vmul.f32 %v2229, %v2329
          %v2332 = vadd.f32 %v2327, %v2330
          %v2333 = vadd.f32 %v2328, %v2331
          %v2334 = vtanh.pop %v2332
          %v2335 = vtanh.pop %v2333
          %v2336 = vstv %s871
          %v2337 = vmul.f32 %v1751, %v2336
          %v2338 = vmul.f32 %v1752, %v2336
          %v2339 = vstv %s911
          %v2340 = vadd.f32 %v2337, %v2339
          %v2341 = vadd.f32 %v2338, %v2339
          %v2342 = vstv %s875
          %v2343 = vmul.f32 %v1804, %v2342
          %v2344 = vmul.f32 %v1805, %v2342
          %v2345 = vadd.f32 %v2340, %v2343
          %v2346 = vadd.f32 %v2341, %v2344
          %v2347 = vstv %s879
          %v2348 = vmul.f32 %v1857, %v2347
          %v2349 = vmul.f32 %v1858, %v2347
          %v2350 = vadd.f32 %v2345, %v2348
          %v2351 = vadd.f32 %v2346, %v2349
          %v2352 = vstv %s883
          %v2353 = vmul.f32 %v1910, %v2352
          %v2354 = vmul.f32 %v1911, %v2352
          %v2355 = vadd.f32 %v2350, %v2353
          %v2356 = vadd.f32 %v2351, %v2354
          %v2357 = vstv %s887
          %v2358 = vmul.f32 %v1963, %v2357
          %v2359 = vmul.f32 %v1964, %v2357
          %v2360 = vadd.f32 %v2355, %v2358
          %v2361 = vadd.f32 %v2356, %v2359
          %v2362 = vstv %s891
          %v2363 = vmul.f32 %v2016, %v2362
          %v2364 = vmul.f32 %v2017, %v2362
          %v2365 = vadd.f32 %v2360, %v2363
          %v2366 = vadd.f32 %v2361, %v2364
          %v2367 = vstv %s895
          %v2368 = vmul.f32 %v2069, %v2367
          %v2369 = vmul.f32 %v2070, %v2367
          %v2370 = vadd.f32 %v2365, %v2368
          %v2371 = vadd.f32 %v2366, %v2369
          %v2372 = vstv %s899
          %v2373 = vmul.f32 %v2122, %v2372
          %v2374 = vmul.f32 %v2123, %v2372
          %v2375 = vadd.f32 %v2370, %v2373
          %v2376 = vadd.f32 %v2371, %v2374
          %v2377 = vstv %s903
          %v2378 = vmul.f32 %v2175, %v2377
          %v2379 = vmul.f32 %v2176, %v2377
          %v2380 = vadd.f32 %v2375, %v2378
          %v2381 = vadd.f32 %v2376, %v2379
          %v2382 = vstv %s907
          %v2383 = vmul.f32 %v2228, %v2382
          %v2384 = vmul.f32 %v2229, %v2382
          %v2385 = vadd.f32 %v2380, %v2383
          %v2386 = vadd.f32 %v2381, %v2384
          %v2387 = vtanh.pop %v2385
          %v2388 = vtanh.pop %v2386
          %v2389 = vstv %s872
          %v2390 = vmul.f32 %v1751, %v2389
          %v2391 = vmul.f32 %v1752, %v2389
          %v2392 = vstv %s912
          %v2393 = vadd.f32 %v2390, %v2392
          %v2394 = vadd.f32 %v2391, %v2392
          %v2395 = vstv %s876
          %v2396 = vmul.f32 %v1804, %v2395
          %v2397 = vmul.f32 %v1805, %v2395
          %v2398 = vadd.f32 %v2393, %v2396
          %v2399 = vadd.f32 %v2394, %v2397
          %v2400 = vstv %s880
          %v2401 = vmul.f32 %v1857, %v2400
          %v2402 = vmul.f32 %v1858, %v2400
          %v2403 = vadd.f32 %v2398, %v2401
          %v2404 = vadd.f32 %v2399, %v2402
          %v2405 = vstv %s884
          %v2406 = vmul.f32 %v1910, %v2405
          %v2407 = vmul.f32 %v1911, %v2405
          %v2408 = vadd.f32 %v2403, %v2406
          %v2409 = vadd.f32 %v2404, %v2407
          %v2410 = vstv %s888
          %v2411 = vmul.f32 %v1963, %v2410
          %v2412 = vmul.f32 %v1964, %v2410
          %v2413 = vadd.f32 %v2408, %v2411
          %v2414 = vadd.f32 %v2409, %v2412
          %v2415 = vstv %s892
          %v2416 = vmul.f32 %v2016, %v2415
          %v2417 = vmul.f32 %v2017, %v2415
          %v2418 = vadd.f32 %v2413, %v2416
          %v2419 = vadd.f32 %v2414, %v2417
          %v2420 = vstv %s896
          %v2421 = vmul.f32 %v2069, %v2420
          %v2422 = vmul.f32 %v2070, %v2420
          %v2423 = vadd.f32 %v2418, %v2421
          %v2424 = vadd.f32 %v2419, %v2422
          %v2425 = vstv %s900
          %v2426 = vmul.f32 %v2122, %v2425
          %v2427 = vmul.f32 %v2123, %v2425
          %v2428 = vadd.f32 %v2423, %v2426
          %v2429 = vadd.f32 %v2424, %v2427
          %v2430 = vstv %s904
          %v2431 = vmul.f32 %v2175, %v2430
          %v2432 = vmul.f32 %v2176, %v2430
          %v2433 = vadd.f32 %v2428, %v2431
          %v2434 = vadd.f32 %v2429, %v2432
          %v2435 = vstv %s908
          %v2436 = vmul.f32 %v2228, %v2435
          %v2437 = vmul.f32 %v2229, %v2435
          %v2438 = vadd.f32 %v2433, %v2436
          %v2439 = vadd.f32 %v2434, %v2437
          %v2440 = vtanh.pop %v2438
          %v2441 = vtanh.pop %v2439
          %v2442 = vadd.f32 %v2281, %v2334
          %v2443 = vadd.f32 %v2282, %v2335
          %v2444 = vadd.f32 %v2442, %v2387
          %v2445 = vadd.f32 %v2443, %v2388
          %v2446 = vadd.f32 %v2444, %v2440
          %v2447 = vadd.f32 %v2445, %v2441
          %v2448 = vmul.f32 %v2446, 0.25
          %v2449 = vmul.f32 %v2447, 0.25
          %v2450 = vsub.f32 %v2281, %v2448
          %v2451 = vsub.f32 %v2282, %v2449
          %v2452 = vsub.f32 %v2334, %v2448
          %v2453 = vsub.f32 %v2335, %v2449
          %v2454 = vsub.f32 %v2387, %v2448
          %v2455 = vsub.f32 %v2388, %v2449
          %v2456 = vsub.f32 %v2440, %v2448
          %v2457 = vsub.f32 %v2441, %v2449
          %v2458 = vmul.f32 %v2450, %v2450
          %v2459 = vmul.f32 %v2451, %v2451
          %v2460 = vmul.f32 %v2452, %v2452
          %v2461 = vmul.f32 %v2453, %v2453
          %v2462 = vadd.f32 %v2458, %v2460
          %v2463 = vadd.f32 %v2459, %v2461
          %v2464 = vmul.f32 %v2454, %v2454
          %v2465 = vmul.f32 %v2455, %v2455
          %v2466 = vadd.f32 %v2462, %v2464
          %v2467 = vadd.f32 %v2463, %v2465
          %v2468 = vmul.f32 %v2456, %v2456
          %v2469 = vmul.f32 %v2457, %v2457
          %v2470 = vadd.f32 %v2466, %v2468
          %v2471 = vadd.f32 %v2467, %v2469
          %v2472 = vmul.f32 %v2470, 0.25
          %v2473 = vmul.f32 %v2471, 0.25
          %v2474 = vadd.f32 %v2472, 1e-05
          %v2475 = vadd.f32 %v2473, 1e-05
          %v2476 = vrsqrt.pop %v2474
          %v2477 = vrsqrt.pop %v2475
          %v2478 = vstv %s913
          %v2479 = vmul.f32 %v2450, %v2478
          %v2480 = vmul.f32 %v2451, %v2478
          %v2481 = vstv %s914
          %v2482 = vmul.f32 %v2452, %v2481
          %v2483 = vmul.f32 %v2453, %v2481
          %v2484 = vadd.f32 %v2479, %v2482
          %v2485 = vadd.f32 %v2480, %v2483
          %v2486 = vstv %s915
          %v2487 = vmul.f32 %v2454, %v2486
          %v2488 = vmul.f32 %v2455, %v2486
          %v2489 = vadd.f32 %v2484, %v2487
          %v2490 = vadd.f32 %v2485, %v2488
          %v2491 = vstv %s916
          %v2492 = vmul.f32 %v2456, %v2491
          %v2493 = vmul.f32 %v2457, %v2491
          %v2494 = vadd.f32 %v2489, %v2492
          %v2495 = vadd.f32 %v2490, %v2493
          %v2496 = vmul.f32 %v2494, %v2476
          %v2497 = vmul.f32 %v2495, %v2477
          %v2498 = vstv %s917
          %v2499 = vadd.f32 %v2496, %v2498
          %v2500 = vadd.f32 %v2497, %v2498
          %s2501 = scalar_lea.vmem %s597, %s924
          %2502 = vst [vmem:[%s2501] sm:$0xff] %v2499
          %2503 = vst [vmem:[%s2501 + $0x8] sm:$0xff] %v2500
        $region143: #{_forward_jit.1} parent=97 // loop_footer
          %s923 = sadd.s32 1, %s919
        $region144: #{_forward_jit.1} parent=97 // loop_footer_branch
          %918 = sbr.rel target = $region140
        $region145: #{_forward_jit.1} parent=97 // loop_exit
          _
        %s2504 = smul.u32 4, %s28
        %p2505 = scmp.lt.s32.totalorder %s2504, 11
        %s2506 = scalar_select %p2505, %s2504, 11
        %s2507 = smul.addr %s2506, 8
        %s2508 = scalar_lea.vmem %s11, %s2507
        // Predicated region
        $region146: #{_forward_jit.1} parent=97 // pred_check
          %p2509 = pneg %p282
        $region147: #{_forward_jit.1} parent=97 // pred_check_branch
          %2511 = sbr.rel (%p2509) target = $region149
        $region148: #{_forward_jit.1} parent=97 // pred_region
          %s2512 = smul.u32 4, %s28
        $region149: #{_forward_jit.1} parent=97 // pred_fallthru
          _
      $region98: #{_forward_jit.1} parent=5 // pred_fallthru
        _
      %p2513 = scmp.le.s32.totalorder 2, %s23
      // Predicated region
      $region150: #{_forward_jit.1} parent=5 // pred_check
        %p2514 = pneg %p2513
      $region151: #{_forward_jit.1} parent=5 // pred_check_branch
        %2516 = sbr.rel (%p2514) target = $region153
      $region152: #{_forward_jit.1} parent=5 // pred_region
        %s2517 = ssub.s32 %s23, 2
        // Predicated region
        $region154: #{_forward_jit.1} parent=152 // pred_check
          %p2518 = pneg %p288
        $region155: #{_forward_jit.1} parent=152 // pred_check_branch
          %2520 = sbr.rel (%p2518) target = $region157
        $region156: #{_forward_jit.1} parent=152 // pred_region
          %s2521 = smul.u32 4, %s29
          %p2522 = scmp.lt.s32.totalorder %s2521, 11
          %s2523 = scalar_select %p2522, %s2521, 11
          %s2524 = smul.addr %s2523, 8
          %s2525 = scalar_lea.vmem %s11, %s2524
        $region157: #{_forward_jit.1} parent=152 // pred_fallthru
          _
      $region153: #{_forward_jit.1} parent=5 // pred_fallthru
        _
    $region6: #{_forward_jit.1} parent=1 // loop_footer
      %s27 = sadd.s32 1, %s23
    $region7: #{_forward_jit.1} parent=1 // loop_footer_branch
      %22 = sbr.rel target = $region3
    $region8: #{_forward_jit.1} parent=1 // loop_exit
      _
    %2526 = vsyncpa [#allocation5], 1
    %s2527 = scalar_lea.sflag [#allocation5], 1
    %2528 = vsyncpa %s2527, 1
    %2529 = vsyncpa [#allocation7], 1
    %2530 = vsyncpa [#allocation10], 1
    %2531 = vsyncpa [#allocation13], 1
    %2532 = vsyncpa [#allocation16], 1

</llo_original>
